<compile_context>
chip_gen: v6e
topology: v6e:2x2x1
jax: 0.10.0
libtpu: 0.0.40
codegen_flags: <defaults>
</compile_context>

<pallas_src>
import functools

import jax
import jax.numpy as jnp
from jax.experimental import pallas as pl
from jax.experimental.pallas import tpu as pltpu


def _round_up(x, m):
    return (x + m - 1) // m * m


# ----------------------------------------------------------------------------
# Fused 3x3 conv (stride 1, reflect pad 1) — shifted-matmul formulation.
# ----------------------------------------------------------------------------

def _conv3x3_kernel(x_ref, w_ref, b_ref, o_ref, *, wp, m_out):
    """One grid step = one sample x one output-channel tile, all 9 taps.

    x_ref : (1, Min, C)    bf16  flattened reflect-padded sample (Min = Hp*Wp)
    w_ref : (9, C, tn)     bf16  per-tap weight slabs
    b_ref : (1, tn)        f32   bias
    o_ref : (1, m_out, tn)       conv output rows (flattened padded coords)
    """
    tn = o_ref.shape[-1]
    acc = jnp.zeros((m_out, tn), jnp.float32)
    # 3x3 taps unrolled: tap (ki, kj) is a constant row shift d = ki*Wp + kj
    # in the flattened padded image, so each tap is a plain (M, C) @ (C, tn)
    # MXU matmul on a statically shifted window of the resident block.
    for q in range(9):
        d = (q // 3) * wp + (q % 3)
        a = x_ref[0, d:d + m_out, :]                      # (m_out, C) bf16
        acc += jnp.dot(a, w_ref[q], preferred_element_type=jnp.float32)
    y = acc + b_ref[...]                                  # fused bias
    o_ref[0] = y.astype(o_ref.dtype)


def conv3x3_reflect(x, w, b, *, out_dtype=jnp.bfloat16):
    """x: (N, H, W, C) float; w: PyTorch layout (O, I, 3, 3); b: (O,).

    Conv2d(kernel=3, stride=1, padding=1, padding_mode='reflect').
    Returns (N, H, W, O) in `out_dtype`.
    """
    N, H, W, C = x.shape
    O = w.shape[0]
    Hp, Wp = H + 2, W + 2
    m_in = Hp * Wp                       # rows of the flattened padded sample
    m_out = (H - 1) * Wp + W             # rows covering every valid output

    # Reflect pad (semantically required) and flatten padded spatial dims.
    xp = jnp.pad(x.astype(jnp.bfloat16),
                 ((0, 0), (1, 1), (1, 1), (0, 0)), mode="reflect")
    xf = xp.reshape(N, m_in, C)

    # Weights (O, I, 3, 3) -> (9, C, Op); pad O to a lane multiple (tiny cost).
    Op = _round_up(O, 128)
    wt = jnp.transpose(w, (2, 3, 1, 0)).reshape(9, C, O).astype(jnp.bfloat16)
    wt = jnp.pad(wt, ((0, 0), (0, 0), (0, Op - O)))
    bp = jnp.pad(b.astype(jnp.float32), (0, Op - O)).reshape(1, Op)

    tn = 256 if Op % 256 == 0 else 128   # 256-wide N tile for the v6e/v7x MXU

    out = pl.pallas_call(
        functools.partial(_conv3x3_kernel, wp=Wp, m_out=m_out),
        out_shape=jax.ShapeDtypeStruct((N, m_out, Op), out_dtype),
        grid=(N, Op // tn),
        in_specs=[
            # activation block index ignores j -> DMA'd once per sample,
            # resident across the output-channel tiles
            pl.BlockSpec((1, m_in, C), lambda n, j: (n, 0, 0)),
            pl.BlockSpec((9, C, tn), lambda n, j: (0, 0, j)),
            pl.BlockSpec((1, tn), lambda n, j: (0, j)),
        ],
        out_specs=pl.BlockSpec((1, m_out, tn), lambda n, j: (n, 0, j)),
        compiler_params=pltpu.CompilerParams(
            dimension_semantics=("parallel", "parallel")),
    )(xf, wt, bp)

    # Un-flatten: row r = i*Wp + j holds output pixel (i, j); drop the
    # (structurally garbage) columns j >= W and the channel padding.
    out = jnp.concatenate(
        [out, jnp.zeros((N, H * Wp - m_out, Op), out.dtype)], axis=1)
    return out.reshape(N, H, Wp, Op)[:, :, :W, :O]


# ----------------------------------------------------------------------------
# InstanceNorm2d (affine=False) with fused ReLU / fused residual add.
# ----------------------------------------------------------------------------

def _inorm_kernel(y_ref, o_ref, *, relu, eps):
    x = y_ref[0].astype(jnp.float32)                 # (HW, tc)
    mean = jnp.mean(x, axis=0, keepdims=True)
    d = x - mean
    var = jnp.mean(d * d, axis=0, keepdims=True)
    z = d * jax.lax.rsqrt(var + eps)
    if relu:
        z = jnp.maximum(z, 0.0)
    o_ref[0] = z.astype(o_ref.dtype)


def _inorm_add_kernel(y_ref, skip_ref, o_ref, *, eps):
    x = y_ref[0].astype(jnp.float32)
    mean = jnp.mean(x, axis=0, keepdims=True)
    d = x - mean
    var = jnp.mean(d * d, axis=0, keepdims=True)
    z = d * jax.lax.rsqrt(var + eps)
    o_ref[0] = (skip_ref[0].astype(jnp.float32) + z).astype(o_ref.dtype)


def instance_norm(y, *, relu=False, skip=None, eps=1e-5, out_dtype=None):
    """Per-(n, c) normalization over H*W; optionally fused ReLU or residual
    add (out = skip + IN(y)).  Channel-tiled grid (N, C/tc), both parallel."""
    N, H, W, C = y.shape
    HW = H * W
    tc = 128 if C % 128 == 0 else C
    if out_dtype is None:
        out_dtype = jnp.float32 if skip is not None else jnp.bfloat16

    spec = pl.BlockSpec((1, HW, tc), lambda n, c: (n, 0, c))
    common = dict(
        out_shape=jax.ShapeDtypeStruct((N, HW, C), out_dtype),
        grid=(N, C // tc),
        out_specs=pl.BlockSpec((1, HW, tc), lambda n, c: (n, 0, c)),
        compiler_params=pltpu.CompilerParams(
            dimension_semantics=("parallel", "parallel")),
    )

    y2 = y.reshape(N, HW, C)
    if skip is None:
        out = pl.pallas_call(
            functools.partial(_inorm_kernel, relu=relu, eps=eps),
            in_specs=[spec], **common)(y2)
    else:
        out = pl.pallas_call(
            functools.partial(_inorm_add_kernel, eps=eps),
            in_specs=[spec, spec], **common)(y2, skip.reshape(N, HW, C))
    return out.reshape(N, H, W, C)


# ----------------------------------------------------------------------------
# ResidualBlock forward (NCHW in / NCHW out, like the PyTorch module).
# ----------------------------------------------------------------------------

def residual_block_forward(params, x_nchw):
    w1, b1, w2, b2 = params
    x = jnp.transpose(x_nchw, (0, 2, 3, 1)).astype(jnp.float32)   # NHWC

    y = conv3x3_reflect(x, w1, b1)              # Conv (bf16 intermediates)
    y = instance_norm(y, relu=True)             # IN + fused ReLU
    y = conv3x3_reflect(y, w2, b2)              # Conv
    out = instance_norm(y, skip=x)              # IN + fused residual add (f32)

    return jnp.transpose(out, (0, 3, 1, 2))


# ----------------------------------------------------------------------------
# Pure-JAX reference (f32) for a correctness sanity check.
# ----------------------------------------------------------------------------

def _reference(params, x_nchw):
    w1, b1, w2, b2 = params
    x = jnp.transpose(x_nchw, (0, 2, 3, 1)).astype(jnp.float32)

    def conv(v, w, b):
        vp = jnp.pad(v, ((0, 0), (1, 1), (1, 1), (0, 0)), mode="reflect")
        y = jax.lax.conv_general_dilated(
            vp, jnp.transpose(w, (2, 3, 1, 0)), window_strides=(1, 1),
            padding="VALID", dimension_numbers=("NHWC", "HWIO", "NHWC"),
            precision=jax.lax.Precision.HIGHEST)
        return y + b

    def inorm(v, relu):
        m = jnp.mean(v, axis=(1, 2), keepdims=True)
        var = jnp.mean((v - m) ** 2, axis=(1, 2), keepdims=True)
        z = (v - m) * jax.lax.rsqrt(var + 1e-5)
        return jnp.maximum(z, 0.0) if relu else z

    y = inorm(conv(x, w1, b1), True)
    y = inorm(conv(y, w2, b2), False)
    return jnp.transpose(x + y, (0, 3, 1, 2))


# ----------------------------------------------------------------------------
if __name__ == "__main__":
    BATCH, CH, H, W = 2, 32, 16, 16

    key = jax.random.PRNGKey(0)
    k1, k2, k3, k4, kx = jax.random.split(key, 5)
    scale = 1.0 / (CH * 9) ** 0.5
    w1 = jax.random.normal(k1, (CH, CH, 3, 3), jnp.float32) * scale
    b1 = jax.random.normal(k2, (CH,), jnp.float32) * scale
    w2 = jax.random.normal(k3, (CH, CH, 3, 3), jnp.float32) * scale
    b2 = jax.random.normal(k4, (CH,), jnp.float32) * scale
    params = (w1, b1, w2, b2)

    x = jax.random.normal(kx, (BATCH, CH, H, W), jnp.float32)

    fwd = jax.jit(residual_block_forward)
    out = fwd(params, x)
    jax.block_until_ready(out)

    assert out.shape == (BATCH, CH, H, W), out.shape
    assert bool(jnp.all(jnp.isfinite(out)))

    # bf16 MXU path vs f32 reference: allow generous (but structure-catching)
    # tolerance.
    ref = _reference(params, x)
    max_err = float(jnp.max(jnp.abs(out - ref)))
    mean_err = float(jnp.mean(jnp.abs(out - ref)))
    assert max_err < 0.2, f"max abs err {max_err}"
    assert mean_err < 0.02, f"mean abs err {mean_err}"

    print("KERNEL_OK")
</pallas_src>

<mosaic_0001>
module attributes {stable_mosaic.version = 11 : i64} {
  func.func @_conv3x3_kernel(%arg0: i32, %arg1: i32, %arg2: memref<1x324x32xbf16, #tpu.memory_space<vmem>>, %arg3: memref<9x32x128xbf16, #tpu.memory_space<vmem>>, %arg4: memref<1x128xf32, #tpu.memory_space<vmem>>, %arg5: memref<1x286x128xbf16, #tpu.memory_space<vmem>>) attributes {dimension_semantics = [#tpu.dimension_semantics<parallel>, #tpu.dimension_semantics<parallel>], iteration_bounds = array<i64: 2, 1>, scalar_prefetch = 0 : i64, scratch_operands = 0 : i64, tpu.core_type = #tpu.core_type<tc>, window_params = [{transform_indices = @transform_0, window_bounds = array<i64: 1, 324, 32>}, {transform_indices = @transform_1, window_bounds = array<i64: 9, 32, 128>}, {transform_indices = @transform_2, window_bounds = array<i64: 1, 128>}, {transform_indices = @transform_3, window_bounds = array<i64: 1, 286, 128>}]} {
    %cst = arith.constant 0.000000e+00 : f32
    %0 = vector.broadcast %cst : f32 to vector<286x128xf32>
    %c0 = arith.constant 0 : index
    %c0_0 = arith.constant 0 : index
    %c0_1 = arith.constant 0 : index
    %1 = vector.load %arg2[%c0, %c0_0, %c0_1] : memref<1x324x32xbf16, #tpu.memory_space<vmem>>, vector<1x286x32xbf16>
    %2 = vector.shape_cast %1 : vector<1x286x32xbf16> to vector<286x32xbf16>
    %c0_2 = arith.constant 0 : index
    %c0_3 = arith.constant 0 : index
    %c0_4 = arith.constant 0 : index
    %3 = vector.load %arg3[%c0_2, %c0_3, %c0_4] : memref<9x32x128xbf16, #tpu.memory_space<vmem>>, vector<1x32x128xbf16>
    %4 = vector.shape_cast %3 : vector<1x32x128xbf16> to vector<32x128xbf16>
    %cst_5 = arith.constant dense<0.000000e+00> : vector<286x128xf32>
    %5 = tpu.matmul %2, %4, %cst_5 {dimension_numbers = #tpu.dot_dimension_numbers<[1], [0], [0], [1], [0, 0, 1, 1], [], []>} : vector<286x32xbf16>, vector<32x128xbf16>, vector<286x128xf32> -> vector<286x128xf32>
    %6 = arith.addf %0, %5 : vector<286x128xf32>
    %c0_6 = arith.constant 0 : index
    %c1 = arith.constant 1 : index
    %c0_7 = arith.constant 0 : index
    %7 = vector.load %arg2[%c0_6, %c1, %c0_7] : memref<1x324x32xbf16, #tpu.memory_space<vmem>>, vector<1x286x32xbf16>
    %8 = vector.shape_cast %7 : vector<1x286x32xbf16> to vector<286x32xbf16>
    %c1_8 = arith.constant 1 : index
    %c0_9 = arith.constant 0 : index
    %c0_10 = arith.constant 0 : index
    %9 = vector.load %arg3[%c1_8, %c0_9, %c0_10] : memref<9x32x128xbf16, #tpu.memory_space<vmem>>, vector<1x32x128xbf16>
    %10 = vector.shape_cast %9 : vector<1x32x128xbf16> to vector<32x128xbf16>
    %cst_11 = arith.constant dense<0.000000e+00> : vector<286x128xf32>
    %11 = tpu.matmul %8, %10, %cst_11 {dimension_numbers = #tpu.dot_dimension_numbers<[1], [0], [0], [1], [0, 0, 1, 1], [], []>} : vector<286x32xbf16>, vector<32x128xbf16>, vector<286x128xf32> -> vector<286x128xf32>
    %12 = arith.addf %6, %11 : vector<286x128xf32>
    %c0_12 = arith.constant 0 : index
    %c2 = arith.constant 2 : index
    %c0_13 = arith.constant 0 : index
    %13 = vector.load %arg2[%c0_12, %c2, %c0_13] : memref<1x324x32xbf16, #tpu.memory_space<vmem>>, vector<1x286x32xbf16>
    %14 = vector.shape_cast %13 : vector<1x286x32xbf16> to vector<286x32xbf16>
    %c2_14 = arith.constant 2 : index
    %c0_15 = arith.constant 0 : index
    %c0_16 = arith.constant 0 : index
    %15 = vector.load %arg3[%c2_14, %c0_15, %c0_16] : memref<9x32x128xbf16, #tpu.memory_space<vmem>>, vector<1x32x128xbf16>
    %16 = vector.shape_cast %15 : vector<1x32x128xbf16> to vector<32x128xbf16>
    %cst_17 = arith.constant dense<0.000000e+00> : vector<286x128xf32>
    %17 = tpu.matmul %14, %16, %cst_17 {dimension_numbers = #tpu.dot_dimension_numbers<[1], [0], [0], [1], [0, 0, 1, 1], [], []>} : vector<286x32xbf16>, vector<32x128xbf16>, vector<286x128xf32> -> vector<286x128xf32>
    %18 = arith.addf %12, %17 : vector<286x128xf32>
    %c0_18 = arith.constant 0 : index
    %c18 = arith.constant 18 : index
    %c0_19 = arith.constant 0 : index
    %19 = vector.load %arg2[%c0_18, %c18, %c0_19] : memref<1x324x32xbf16, #tpu.memory_space<vmem>>, vector<1x286x32xbf16>
    %20 = vector.shape_cast %19 : vector<1x286x32xbf16> to vector<286x32xbf16>
    %c3 = arith.constant 3 : index
    %c0_20 = arith.constant 0 : index
    %c0_21 = arith.constant 0 : index
    %21 = vector.load %arg3[%c3, %c0_20, %c0_21] : memref<9x32x128xbf16, #tpu.memory_space<vmem>>, vector<1x32x128xbf16>
    %22 = vector.shape_cast %21 : vector<1x32x128xbf16> to vector<32x128xbf16>
    %cst_22 = arith.constant dense<0.000000e+00> : vector<286x128xf32>
    %23 = tpu.matmul %20, %22, %cst_22 {dimension_numbers = #tpu.dot_dimension_numbers<[1], [0], [0], [1], [0, 0, 1, 1], [], []>} : vector<286x32xbf16>, vector<32x128xbf16>, vector<286x128xf32> -> vector<286x128xf32>
    %24 = arith.addf %18, %23 : vector<286x128xf32>
    %c0_23 = arith.constant 0 : index
    %c19 = arith.constant 19 : index
    %c0_24 = arith.constant 0 : index
    %25 = vector.load %arg2[%c0_23, %c19, %c0_24] : memref<1x324x32xbf16, #tpu.memory_space<vmem>>, vector<1x286x32xbf16>
    %26 = vector.shape_cast %25 : vector<1x286x32xbf16> to vector<286x32xbf16>
    %c4 = arith.constant 4 : index
    %c0_25 = arith.constant 0 : index
    %c0_26 = arith.constant 0 : index
    %27 = vector.load %arg3[%c4, %c0_25, %c0_26] : memref<9x32x128xbf16, #tpu.memory_space<vmem>>, vector<1x32x128xbf16>
    %28 = vector.shape_cast %27 : vector<1x32x128xbf16> to vector<32x128xbf16>
    %cst_27 = arith.constant dense<0.000000e+00> : vector<286x128xf32>
    %29 = tpu.matmul %26, %28, %cst_27 {dimension_numbers = #tpu.dot_dimension_numbers<[1], [0], [0], [1], [0, 0, 1, 1], [], []>} : vector<286x32xbf16>, vector<32x128xbf16>, vector<286x128xf32> -> vector<286x128xf32>
    %30 = arith.addf %24, %29 : vector<286x128xf32>
    %c0_28 = arith.constant 0 : index
    %c20 = arith.constant 20 : index
    %c0_29 = arith.constant 0 : index
    %31 = vector.load %arg2[%c0_28, %c20, %c0_29] : memref<1x324x32xbf16, #tpu.memory_space<vmem>>, vector<1x286x32xbf16>
    %32 = vector.shape_cast %31 : vector<1x286x32xbf16> to vector<286x32xbf16>
    %c5 = arith.constant 5 : index
    %c0_30 = arith.constant 0 : index
    %c0_31 = arith.constant 0 : index
    %33 = vector.load %arg3[%c5, %c0_30, %c0_31] : memref<9x32x128xbf16, #tpu.memory_space<vmem>>, vector<1x32x128xbf16>
    %34 = vector.shape_cast %33 : vector<1x32x128xbf16> to vector<32x128xbf16>
    %cst_32 = arith.constant dense<0.000000e+00> : vector<286x128xf32>
    %35 = tpu.matmul %32, %34, %cst_32 {dimension_numbers = #tpu.dot_dimension_numbers<[1], [0], [0], [1], [0, 0, 1, 1], [], []>} : vector<286x32xbf16>, vector<32x128xbf16>, vector<286x128xf32> -> vector<286x128xf32>
    %36 = arith.addf %30, %35 : vector<286x128xf32>
    %c0_33 = arith.constant 0 : index
    %c36 = arith.constant 36 : index
    %c0_34 = arith.constant 0 : index
    %37 = vector.load %arg2[%c0_33, %c36, %c0_34] : memref<1x324x32xbf16, #tpu.memory_space<vmem>>, vector<1x286x32xbf16>
    %38 = vector.shape_cast %37 : vector<1x286x32xbf16> to vector<286x32xbf16>
    %c6 = arith.constant 6 : index
    %c0_35 = arith.constant 0 : index
    %c0_36 = arith.constant 0 : index
    %39 = vector.load %arg3[%c6, %c0_35, %c0_36] : memref<9x32x128xbf16, #tpu.memory_space<vmem>>, vector<1x32x128xbf16>
    %40 = vector.shape_cast %39 : vector<1x32x128xbf16> to vector<32x128xbf16>
    %cst_37 = arith.constant dense<0.000000e+00> : vector<286x128xf32>
    %41 = tpu.matmul %38, %40, %cst_37 {dimension_numbers = #tpu.dot_dimension_numbers<[1], [0], [0], [1], [0, 0, 1, 1], [], []>} : vector<286x32xbf16>, vector<32x128xbf16>, vector<286x128xf32> -> vector<286x128xf32>
    %42 = arith.addf %36, %41 : vector<286x128xf32>
    %c0_38 = arith.constant 0 : index
    %c37 = arith.constant 37 : index
    %c0_39 = arith.constant 0 : index
    %43 = vector.load %arg2[%c0_38, %c37, %c0_39] : memref<1x324x32xbf16, #tpu.memory_space<vmem>>, vector<1x286x32xbf16>
    %44 = vector.shape_cast %43 : vector<1x286x32xbf16> to vector<286x32xbf16>
    %c7 = arith.constant 7 : index
    %c0_40 = arith.constant 0 : index
    %c0_41 = arith.constant 0 : index
    %45 = vector.load %arg3[%c7, %c0_40, %c0_41] : memref<9x32x128xbf16, #tpu.memory_space<vmem>>, vector<1x32x128xbf16>
    %46 = vector.shape_cast %45 : vector<1x32x128xbf16> to vector<32x128xbf16>
    %cst_42 = arith.constant dense<0.000000e+00> : vector<286x128xf32>
    %47 = tpu.matmul %44, %46, %cst_42 {dimension_numbers = #tpu.dot_dimension_numbers<[1], [0], [0], [1], [0, 0, 1, 1], [], []>} : vector<286x32xbf16>, vector<32x128xbf16>, vector<286x128xf32> -> vector<286x128xf32>
    %48 = arith.addf %42, %47 : vector<286x128xf32>
    %c0_43 = arith.constant 0 : index
    %c38 = arith.constant 38 : index
    %c0_44 = arith.constant 0 : index
    %49 = vector.load %arg2[%c0_43, %c38, %c0_44] : memref<1x324x32xbf16, #tpu.memory_space<vmem>>, vector<1x286x32xbf16>
    %50 = vector.shape_cast %49 : vector<1x286x32xbf16> to vector<286x32xbf16>
    %c8 = arith.constant 8 : index
    %c0_45 = arith.constant 0 : index
    %c0_46 = arith.constant 0 : index
    %51 = vector.load %arg3[%c8, %c0_45, %c0_46] : memref<9x32x128xbf16, #tpu.memory_space<vmem>>, vector<1x32x128xbf16>
    %52 = vector.shape_cast %51 : vector<1x32x128xbf16> to vector<32x128xbf16>
    %cst_47 = arith.constant dense<0.000000e+00> : vector<286x128xf32>
    %53 = tpu.matmul %50, %52, %cst_47 {dimension_numbers = #tpu.dot_dimension_numbers<[1], [0], [0], [1], [0, 0, 1, 1], [], []>} : vector<286x32xbf16>, vector<32x128xbf16>, vector<286x128xf32> -> vector<286x128xf32>
    %54 = arith.addf %48, %53 : vector<286x128xf32>
    %c0_48 = arith.constant 0 : index
    %c0_49 = arith.constant 0 : index
    %55 = vector.load %arg4[%c0_48, %c0_49] : memref<1x128xf32, #tpu.memory_space<vmem>>, vector<1x128xf32>
    %56 = vector.broadcast %55 : vector<1x128xf32> to vector<286x128xf32>
    %57 = arith.addf %54, %56 : vector<286x128xf32>
    %58 = arith.truncf %57 : vector<286x128xf32> to vector<286x128xbf16>
    %c0_50 = arith.constant 0 : index
    %c0_51 = arith.constant 0 : index
    %c0_52 = arith.constant 0 : index
    %59 = vector.load %arg5[%c0_50, %c0_51, %c0_52] : memref<1x286x128xbf16, #tpu.memory_space<vmem>>, vector<1x286x128xbf16>
    %60 = vector.shape_cast %59 : vector<1x286x128xbf16> to vector<286x128xbf16>
    %61 = vector.shape_cast %58 : vector<286x128xbf16> to vector<1x286x128xbf16>
    tpu.vector_store %arg5[%c0_50, %c0_51, %c0_52], %61 {strides = array<i32>} : memref<1x286x128xbf16, #tpu.memory_space<vmem>>, vector<1x286x128xbf16>,
    return
  }
  func.func @transform_0(%arg0: i32, %arg1: i32) -> (i32, i32, i32) {
    %c0_i32 = arith.constant 0 : i32
    %c0_i32_0 = arith.constant 0 : i32
    %c0_i32_1 = arith.constant 0 : i32
    return %arg0, %c0_i32, %c0_i32_0 : i32, i32, i32
  }
  func.func @transform_1(%arg0: i32, %arg1: i32) -> (i32, i32, i32) {
    %c0_i32 = arith.constant 0 : i32
    %c0_i32_0 = arith.constant 0 : i32
    %c0_i32_1 = arith.constant 0 : i32
    return %c0_i32, %c0_i32_0, %arg1 : i32, i32, i32
  }
  func.func @transform_2(%arg0: i32, %arg1: i32) -> (i32, i32) {
    %c0_i32 = arith.constant 0 : i32
    %c0_i32_0 = arith.constant 0 : i32
    return %c0_i32, %arg1 : i32, i32
  }
  func.func @transform_3(%arg0: i32, %arg1: i32) -> (i32, i32, i32) {
    %c0_i32 = arith.constant 0 : i32
    %c0_i32_0 = arith.constant 0 : i32
    return %arg0, %c0_i32, %arg1 : i32, i32, i32
  }
}

module attributes {stable_mosaic.version = 11 : i64} {
  func.func @_inorm_kernel(%arg0: i32, %arg1: i32, %arg2: memref<1x256x32xbf16, #tpu.memory_space<vmem>>, %arg3: memref<1x256x32xbf16, #tpu.memory_space<vmem>>) attributes {dimension_semantics = [#tpu.dimension_semantics<parallel>, #tpu.dimension_semantics<parallel>], iteration_bounds = array<i64: 2, 1>, scalar_prefetch = 0 : i64, scratch_operands = 0 : i64, tpu.core_type = #tpu.core_type<tc>, window_params = [{transform_indices = @transform_0, window_bounds = array<i64: 1, 256, 32>}, {transform_indices = @transform_1, window_bounds = array<i64: 1, 256, 32>}]} {
    %c0 = arith.constant 0 : index
    %c0_0 = arith.constant 0 : index
    %c0_1 = arith.constant 0 : index
    %0 = vector.load %arg2[%c0, %c0_0, %c0_1] : memref<1x256x32xbf16, #tpu.memory_space<vmem>>, vector<1x256x32xbf16>
    %1 = vector.shape_cast %0 : vector<1x256x32xbf16> to vector<256x32xbf16>
    %2 = arith.extf %1 : vector<256x32xbf16> to vector<256x32xf32>
    %cst = arith.constant dense<0.000000e+00> : vector<32xf32>
    %3 = vector.multi_reduction <add>, %2, %cst [0] : vector<256x32xf32> to vector<32xf32>
    %4 = vector.shape_cast %3 : vector<32xf32> to vector<1x32xf32>
    %cst_2 = arith.constant 2.560000e+02 : f32
    %5 = vector.broadcast %cst_2 : f32 to vector<1x32xf32>
    %6 = arith.divf %4, %5 : vector<1x32xf32>
    %7 = vector.broadcast %6 : vector<1x32xf32> to vector<256x32xf32>
    %8 = arith.subf %2, %7 : vector<256x32xf32>
    %9 = arith.mulf %8, %8 : vector<256x32xf32>
    %cst_3 = arith.constant dense<0.000000e+00> : vector<32xf32>
    %10 = vector.multi_reduction <add>, %9, %cst_3 [0] : vector<256x32xf32> to vector<32xf32>
    %11 = vector.shape_cast %10 : vector<32xf32> to vector<1x32xf32>
    %cst_4 = arith.constant 2.560000e+02 : f32
    %12 = vector.broadcast %cst_4 : f32 to vector<1x32xf32>
    %13 = arith.divf %11, %12 : vector<1x32xf32>
    %cst_5 = arith.constant 9.99999974E-6 : f32
    %14 = vector.broadcast %cst_5 : f32 to vector<1x32xf32>
    %15 = arith.addf %13, %14 : vector<1x32xf32>
    %16 = math.rsqrt %15 : vector<1x32xf32>
    %17 = vector.broadcast %16 : vector<1x32xf32> to vector<256x32xf32>
    %18 = arith.mulf %8, %17 : vector<256x32xf32>
    %cst_6 = arith.constant 0.000000e+00 : f32
    %19 = vector.broadcast %cst_6 : f32 to vector<256x32xf32>
    %20 = arith.maximumf %18, %19 : vector<256x32xf32>
    %21 = arith.truncf %20 : vector<256x32xf32> to vector<256x32xbf16>
    %c0_7 = arith.constant 0 : index
    %c0_8 = arith.constant 0 : index
    %c0_9 = arith.constant 0 : index
    %22 = vector.load %arg3[%c0_7, %c0_8, %c0_9] : memref<1x256x32xbf16, #tpu.memory_space<vmem>>, vector<1x256x32xbf16>
    %23 = vector.shape_cast %22 : vector<1x256x32xbf16> to vector<256x32xbf16>
    %24 = vector.shape_cast %21 : vector<256x32xbf16> to vector<1x256x32xbf16>
    tpu.vector_store %arg3[%c0_7, %c0_8, %c0_9], %24 {strides = array<i32>} : memref<1x256x32xbf16, #tpu.memory_space<vmem>>, vector<1x256x32xbf16>,
    return
  }
  func.func @transform_0(%arg0: i32, %arg1: i32) -> (i32, i32, i32) {
    %c0_i32 = arith.constant 0 : i32
    %c0_i32_0 = arith.constant 0 : i32
    return %arg0, %c0_i32, %arg1 : i32, i32, i32
  }
  func.func @transform_1(%arg0: i32, %arg1: i32) -> (i32, i32, i32) {
    %c0_i32 = arith.constant 0 : i32
    %c0_i32_0 = arith.constant 0 : i32
    return %arg0, %c0_i32, %arg1 : i32, i32, i32
  }
}

module attributes {stable_mosaic.version = 11 : i64} {
  func.func @_inorm_add_kernel(%arg0: i32, %arg1: i32, %arg2: memref<1x256x32xbf16, #tpu.memory_space<vmem>>, %arg3: memref<1x256x32xf32, #tpu.memory_space<vmem>>, %arg4: memref<1x256x32xf32, #tpu.memory_space<vmem>>) attributes {dimension_semantics = [#tpu.dimension_semantics<parallel>, #tpu.dimension_semantics<parallel>], iteration_bounds = array<i64: 2, 1>, scalar_prefetch = 0 : i64, scratch_operands = 0 : i64, tpu.core_type = #tpu.core_type<tc>, window_params = [{transform_indices = @transform_0, window_bounds = array<i64: 1, 256, 32>}, {transform_indices = @transform_1, window_bounds = array<i64: 1, 256, 32>}, {transform_indices = @transform_2, window_bounds = array<i64: 1, 256, 32>}]} {
    %c0 = arith.constant 0 : index
    %c0_0 = arith.constant 0 : index
    %c0_1 = arith.constant 0 : index
    %0 = vector.load %arg2[%c0, %c0_0, %c0_1] : memref<1x256x32xbf16, #tpu.memory_space<vmem>>, vector<1x256x32xbf16>
    %1 = vector.shape_cast %0 : vector<1x256x32xbf16> to vector<256x32xbf16>
    %2 = arith.extf %1 : vector<256x32xbf16> to vector<256x32xf32>
    %cst = arith.constant dense<0.000000e+00> : vector<32xf32>
    %3 = vector.multi_reduction <add>, %2, %cst [0] : vector<256x32xf32> to vector<32xf32>
    %4 = vector.shape_cast %3 : vector<32xf32> to vector<1x32xf32>
    %cst_2 = arith.constant 2.560000e+02 : f32
    %5 = vector.broadcast %cst_2 : f32 to vector<1x32xf32>
    %6 = arith.divf %4, %5 : vector<1x32xf32>
    %7 = vector.broadcast %6 : vector<1x32xf32> to vector<256x32xf32>
    %8 = arith.subf %2, %7 : vector<256x32xf32>
    %9 = arith.mulf %8, %8 : vector<256x32xf32>
    %cst_3 = arith.constant dense<0.000000e+00> : vector<32xf32>
    %10 = vector.multi_reduction <add>, %9, %cst_3 [0] : vector<256x32xf32> to vector<32xf32>
    %11 = vector.shape_cast %10 : vector<32xf32> to vector<1x32xf32>
    %cst_4 = arith.constant 2.560000e+02 : f32
    %12 = vector.broadcast %cst_4 : f32 to vector<1x32xf32>
    %13 = arith.divf %11, %12 : vector<1x32xf32>
    %cst_5 = arith.constant 9.99999974E-6 : f32
    %14 = vector.broadcast %cst_5 : f32 to vector<1x32xf32>
    %15 = arith.addf %13, %14 : vector<1x32xf32>
    %16 = math.rsqrt %15 : vector<1x32xf32>
    %17 = vector.broadcast %16 : vector<1x32xf32> to vector<256x32xf32>
    %18 = arith.mulf %8, %17 : vector<256x32xf32>
    %c0_6 = arith.constant 0 : index
    %c0_7 = arith.constant 0 : index
    %c0_8 = arith.constant 0 : index
    %19 = vector.load %arg3[%c0_6, %c0_7, %c0_8] : memref<1x256x32xf32, #tpu.memory_space<vmem>>, vector<1x256x32xf32>
    %20 = vector.shape_cast %19 : vector<1x256x32xf32> to vector<256x32xf32>
    %21 = arith.addf %20, %18 : vector<256x32xf32>
    %c0_9 = arith.constant 0 : index
    %c0_10 = arith.constant 0 : index
    %c0_11 = arith.constant 0 : index
    %22 = vector.load %arg4[%c0_9, %c0_10, %c0_11] : memref<1x256x32xf32, #tpu.memory_space<vmem>>, vector<1x256x32xf32>
    %23 = vector.shape_cast %22 : vector<1x256x32xf32> to vector<256x32xf32>
    %24 = vector.shape_cast %21 : vector<256x32xf32> to vector<1x256x32xf32>
    tpu.vector_store %arg4[%c0_9, %c0_10, %c0_11], %24 {strides = array<i32>} : memref<1x256x32xf32, #tpu.memory_space<vmem>>, vector<1x256x32xf32>,
    return
  }
  func.func @transform_0(%arg0: i32, %arg1: i32) -> (i32, i32, i32) {
    %c0_i32 = arith.constant 0 : i32
    %c0_i32_0 = arith.constant 0 : i32
    return %arg0, %c0_i32, %arg1 : i32, i32, i32
  }
  func.func @transform_1(%arg0: i32, %arg1: i32) -> (i32, i32, i32) {
    %c0_i32 = arith.constant 0 : i32
    %c0_i32_0 = arith.constant 0 : i32
    return %arg0, %c0_i32, %arg1 : i32, i32, i32
  }
  func.func @transform_2(%arg0: i32, %arg1: i32) -> (i32, i32, i32) {
    %c0_i32 = arith.constant 0 : i32
    %c0_i32_0 = arith.constant 0 : i32
    return %arg0, %c0_i32, %arg1 : i32, i32, i32
  }
}

</mosaic_0001>

<llo_original>
// kernel: residual_block_forward.5
$region0: #{residual_block_forward.5}
  #allocation0 [shape = 'u32[]', space=smem, size = 0x4, offset = 0x4, fixed_abs, tag = 'smem constant byte address 0x4 - core index']
  #allocation1 [shape = 'u32[144,128]{1,0:T(1,128)}', space=vmem, size = 0x12000, scoped, tag = 'internal scratch']
  %s0 = inlined_call_operand.vmem [shape: bf16[2,256,32], index: 0, kind: input, shape index: {}]
  %s1 = inlined_call_operand.vmem [shape: bf16[2,256,32], index: 1, kind: output, shape index: {}]
  %s2 = sld [smem:[#allocation0]]
  $region37: #{residual_block_forward.5} parent=0
    _
  %s4 = ssub.s32 1, %s2
  %s5 = scalar_select 0, %s4, %s2
  loop: start=0, step=1, limit=4
  $region2: #{residual_block_forward.5} parent=0 // loop_pre_header
    _
  $region3: #{residual_block_forward.5} parent=0 // loop_header
    %s7 = sphi 0, %s11
    %p8 = scmp.ge.s32.totalorder %s7, 4
    %s14 = sphi 0, %s26
    %s15 = sphi 0, %s22
    %s16 = sphi 0, %s14
    %s17 = sphi 0, %s15
    %s18 = sphi 0, %s16
    %s19 = sphi 0, %s17
    %s31 = sphi 0, %s33
    %s34 = sphi 0, %s31
    %s35 = sphi 0, %s34
    %s51 = sphi 0, %s35
    %s59 = sphi 0, %s61
    %s62 = sphi 0, %s59
    %s63 = sphi 0, %s62
    %s79 = sphi 0, %s63
  $region4: #{residual_block_forward.5} parent=0 // loop_header_branch
    %10 = sbr.rel (%p8) target = $region8
  $region5: #{residual_block_forward.5} parent=0 // loop_body
    %s12 = ssub.s32 %s7, 1
    %s13 = ssub.s32 %s7, 2
    %s20 = sadd.s32 1, %s15
    %p21 = scmp.ge.s32.totalorder %s20, 1
    %s22 = scalar_select %p21, 0, %s20
    %s23 = sadd.s32 1, %s14
    %s24 = scalar_select %p21, %s23, %s14
    %p25 = scmp.ge.s32.totalorder %s24, 2
    %s26 = scalar_select %p25, 0, %s24
    %s27 = ssub.s32 %s14, %s26
    %s28 = ssub.s32 %s15, %s22
    %s29 = sor.u32 %s27, %s28
    %p30 = scmp.eq.s32.totalorder %s29, 0
    %s32 = sadd.s32 %s31, 1
    %s33 = scalar_select %p30, %s31, %s32
    %p36 = pneg %p30
    %p37 = scmp.eq.s32.totalorder %s7, 1
    %p38 = por %p36, %p37
    %p39 = scmp.ne.s32.totalorder %s31, %s34
    %p40 = scmp.eq.s32.totalorder %s7, 0
    %p41 = por %p39, %p40
    %p42 = scmp.ne.s32.totalorder %s31, %s34
    %p43 = scmp.eq.s32.totalorder %s12, 1
    %p44 = por %p42, %p43
    %p45 = scmp.ne.s32.totalorder %s34, %s35
    %p46 = scmp.eq.s32.totalorder %s12, 0
    %p47 = por %p45, %p46
    %p48 = scmp.ne.s32.totalorder %s34, %s35
    %p49 = scmp.eq.s32.totalorder %s13, 1
    %p50 = por %p48, %p49
    %p52 = scmp.ne.s32.totalorder %s35, %s51
    %p53 = scmp.eq.s32.totalorder %s13, 0
    %p54 = por %p52, %p53
    %s55 = ssub.s32 %s14, %s26
    %s56 = ssub.s32 %s15, %s22
    %s57 = sor.u32 %s55, %s56
    %p58 = scmp.eq.s32.totalorder %s57, 0
    %s60 = sadd.s32 %s59, 1
    %s61 = scalar_select %p58, %s59, %s60
    %p64 = pneg %p58
    %p65 = scmp.eq.s32.totalorder %s7, 1
    %p66 = por %p64, %p65
    %p67 = scmp.ne.s32.totalorder %s59, %s62
    %p68 = scmp.eq.s32.totalorder %s7, 0
    %p69 = por %p67, %p68
    %p70 = scmp.ne.s32.totalorder %s59, %s62
    %p71 = scmp.eq.s32.totalorder %s12, 1
    %p72 = por %p70, %p71
    %p73 = scmp.ne.s32.totalorder %s62, %s63
    %p74 = scmp.eq.s32.totalorder %s12, 0
    %p75 = por %p73, %p74
    %p76 = scmp.ne.s32.totalorder %s62, %s63
    %p77 = scmp.eq.s32.totalorder %s13, 1
    %p78 = por %p76, %p77
    %p80 = scmp.ne.s32.totalorder %s63, %s79
    %p81 = scmp.eq.s32.totalorder %s13, 0
    %p82 = por %p80, %p81
    %p83 = scmp.le.s32.totalorder 1, %s7
    %p84 = scmp.lt.s32.totalorder %s7, 3
    %p85 = pnand %p83, %p84
    %p86 = pneg %p85
    // Predicated region
    $region9: #{residual_block_forward.5} parent=5 // pred_check
      _
    $region10: #{residual_block_forward.5} parent=5 // pred_check_branch
      %88 = sbr.rel (%p85) target = $region12
    $region11: #{residual_block_forward.5} parent=5 // pred_region
      %s89 = ssub.s32 %s7, 1
    $region12: #{residual_block_forward.5} parent=5 // pred_fallthru
      _
    %p90 = scmp.lt.s32.totalorder %s7, 2
    // Predicated region
    $region13: #{residual_block_forward.5} parent=5 // pred_check
      %p91 = pneg %p90
    $region14: #{residual_block_forward.5} parent=5 // pred_check_branch
      %93 = sbr.rel (%p91) target = $region16
    $region15: #{residual_block_forward.5} parent=5 // pred_region
      // Predicated region
      $region17: #{residual_block_forward.5} parent=15 // pred_check
        %p94 = pneg %p41
      $region18: #{residual_block_forward.5} parent=15 // pred_check_branch
        %96 = sbr.rel (%p94) target = $region20
      $region19: #{residual_block_forward.5} parent=15 // pred_region
        %p97 = scmp.lt.s32.totalorder %s14, 1
        %s98 = scalar_select %p97, %s14, 1
        %p99 = scmp.lt.s32.totalorder %s15, 0
        %s100 = scalar_select %p99, %s15, 0
        %s101 = smul.addr %s98, 32
        %s102 = sadd.s32 %s100, %s101
        %s103 = smul.addr %s102, 4
        %s104 = scalar_lea.vmem %s0, %s103
      $region20: #{residual_block_forward.5} parent=15 // pred_fallthru
        _
    $region16: #{residual_block_forward.5} parent=5 // pred_fallthru
      _
    %p105 = scmp.le.s32.totalorder 1, %s7
    %p106 = scmp.lt.s32.totalorder %s7, 3
    %p107 = pnand %p105, %p106
    %p108 = pneg %p107
    // Predicated region
    $region21: #{residual_block_forward.5} parent=5 // pred_check
      _
    $region22: #{residual_block_forward.5} parent=5 // pred_check_branch
      %110 = sbr.rel (%p107) target = $region24
    $region23: #{residual_block_forward.5} parent=5 // pred_region
      %s111 = ssub.s32 %s7, 1
      %p112 = scmp.lt.s32.totalorder %s16, 1
      %s113 = scalar_select %p112, %s16, 1
      %p114 = scmp.lt.s32.totalorder %s17, 0
      %s115 = scalar_select %p114, %s17, 0
      %s116 = smul.addr %s113, 32
      %s117 = sadd.s32 %s115, %s116
      %s118 = smul.addr %s117, 4
      %s119 = scalar_lea.vmem %s0, %s118
      %p120 = pneg %p47
      %p121 = pneg %p44
      %p122 = pneg %p75
      %p123 = pneg %p72
      %p124 = scmp.lt.s32.totalorder %s16, 1
      %s125 = scalar_select %p124, %s16, 1
      %p126 = scmp.lt.s32.totalorder %s17, 0
      %s127 = scalar_select %p126, %s17, 0
      %s128 = smul.addr %s125, 32
      %s129 = sadd.s32 %s127, %s128
      %s130 = smul.addr %s129, 4
      %s131 = scalar_lea.vmem %s1, %s130
      %p132 = scmp.lt.s32.totalorder %s16, 1
      %s133 = scalar_select %p132, %s16, 1
      %p134 = scmp.lt.s32.totalorder %s17, 0
      %s135 = scalar_select %p134, %s17, 0
      %s136 = smul.addr %s133, 32
      %s137 = sadd.s32 %s135, %s136
      %s138 = smul.addr %s137, 4
      %s139 = scalar_lea.vmem %s0, %s138
      %p140 = scmp.lt.s32.totalorder %s16, 1
      %s141 = scalar_select %p140, %s16, 1
      %p142 = scmp.lt.s32.totalorder %s17, 0
      %s143 = scalar_select %p142, %s17, 0
      %s144 = smul.addr %s141, 32
      %s145 = sadd.s32 %s143, %s144
      %s146 = smul.addr %s145, 4
      %s147 = scalar_lea.vmem %s1, %s146
      %v148 = vld [vmem:[%s139] sm:$0xf]
      %v149 = vld [vmem:[%s139 + $0x4] sm:$0xf]
      %v150 = vld [vmem:[%s139 + $0x8] sm:$0xf]
      %v151 = vld [vmem:[%s139 + $0xc] sm:$0xf]
      %v152 = vld [vmem:[%s139 + $0x10] sm:$0xf]
      %v153 = vld [vmem:[%s139 + $0x14] sm:$0xf]
      %v154 = vld [vmem:[%s139 + $0x18] sm:$0xf]
      %v155 = vld [vmem:[%s139 + $0x1c] sm:$0xf]
      %v156 = vld [vmem:[%s139 + $0x20] sm:$0xf]
      %v157 = vld [vmem:[%s139 + $0x24] sm:$0xf]
      %v158 = vld [vmem:[%s139 + $0x28] sm:$0xf]
      %v159 = vld [vmem:[%s139 + $0x2c] sm:$0xf]
      %v160 = vld [vmem:[%s139 + $0x30] sm:$0xf]
      %v161 = vld [vmem:[%s139 + $0x34] sm:$0xf]
      %v162 = vld [vmem:[%s139 + $0x38] sm:$0xf]
      %v163 = vld [vmem:[%s139 + $0x3c] sm:$0xf]
      %v164 = vld [vmem:[%s139 + $0x40] sm:$0xf]
      %v165 = vld [vmem:[%s139 + $0x44] sm:$0xf]
      %v166 = vld [vmem:[%s139 + $0x48] sm:$0xf]
      %v167 = vld [vmem:[%s139 + $0x4c] sm:$0xf]
      %v168 = vld [vmem:[%s139 + $0x50] sm:$0xf]
      %v169 = vld [vmem:[%s139 + $0x54] sm:$0xf]
      %v170 = vld [vmem:[%s139 + $0x58] sm:$0xf]
      %v171 = vld [vmem:[%s139 + $0x5c] sm:$0xf]
      %v172 = vld [vmem:[%s139 + $0x60] sm:$0xf]
      %v173 = vld [vmem:[%s139 + $0x64] sm:$0xf]
      %v174 = vld [vmem:[%s139 + $0x68] sm:$0xf]
      %v175 = vld [vmem:[%s139 + $0x6c] sm:$0xf]
      %v176 = vld [vmem:[%s139 + $0x70] sm:$0xf]
      %v177 = vld [vmem:[%s139 + $0x74] sm:$0xf]
      %v178 = vld [vmem:[%s139 + $0x78] sm:$0xf]
      %v179 = vld [vmem:[%s139 + $0x7c] sm:$0xf]
      %v180 = vunpack.c.l.bf16 %v148
      %v181 = vunpack.c.l.bf16 %v149
      %v182 = vunpack.c.l.bf16 %v150
      %v183 = vunpack.c.l.bf16 %v151
      %v184 = vunpack.c.l.bf16 %v152
      %v185 = vunpack.c.l.bf16 %v153
      %v186 = vunpack.c.l.bf16 %v154
      %v187 = vunpack.c.l.bf16 %v155
      %v188 = vunpack.c.l.bf16 %v156
      %v189 = vunpack.c.l.bf16 %v157
      %v190 = vunpack.c.l.bf16 %v158
      %v191 = vunpack.c.l.bf16 %v159
      %v192 = vunpack.c.l.bf16 %v160
      %v193 = vunpack.c.l.bf16 %v161
      %v194 = vunpack.c.l.bf16 %v162
      %v195 = vunpack.c.l.bf16 %v163
      %v196 = vunpack.c.l.bf16 %v164
      %v197 = vunpack.c.l.bf16 %v165
      %v198 = vunpack.c.l.bf16 %v166
      %v199 = vunpack.c.l.bf16 %v167
      %v200 = vunpack.c.l.bf16 %v168
      %v201 = vunpack.c.l.bf16 %v169
      %v202 = vunpack.c.l.bf16 %v170
      %v203 = vunpack.c.l.bf16 %v171
      %v204 = vunpack.c.l.bf16 %v172
      %v205 = vunpack.c.l.bf16 %v173
      %v206 = vunpack.c.l.bf16 %v174
      %v207 = vunpack.c.l.bf16 %v175
      %v208 = vunpack.c.l.bf16 %v176
      %v209 = vunpack.c.l.bf16 %v177
      %v210 = vunpack.c.l.bf16 %v178
      %v211 = vunpack.c.l.bf16 %v179
      %vm212 = vcmask 261120
      %v213 = vsel %vm212, %v180, 0.0
      %v214 = vsel %vm212, %v181, 0.0
      %v215 = vadd.f32 %v213, %v214
      %v216 = vsel %vm212, %v182, 0.0
      %v217 = vadd.f32 %v215, %v216
      %v218 = vsel %vm212, %v183, 0.0
      %v219 = vadd.f32 %v217, %v218
      %v220 = vsel %vm212, %v184, 0.0
      %v221 = vadd.f32 %v219, %v220
      %v222 = vsel %vm212, %v185, 0.0
      %v223 = vadd.f32 %v221, %v222
      %v224 = vsel %vm212, %v186, 0.0
      %v225 = vadd.f32 %v223, %v224
      %v226 = vsel %vm212, %v187, 0.0
      %v227 = vadd.f32 %v225, %v226
      %v228 = vsel %vm212, %v188, 0.0
      %v229 = vadd.f32 %v227, %v228
      %v230 = vsel %vm212, %v189, 0.0
      %v231 = vadd.f32 %v229, %v230
      %v232 = vsel %vm212, %v190, 0.0
      %v233 = vadd.f32 %v231, %v232
      %v234 = vsel %vm212, %v191, 0.0
      %v235 = vadd.f32 %v233, %v234
      %v236 = vsel %vm212, %v192, 0.0
      %v237 = vadd.f32 %v235, %v236
      %v238 = vsel %vm212, %v193, 0.0
      %v239 = vadd.f32 %v237, %v238
      %v240 = vsel %vm212, %v194, 0.0
      %v241 = vadd.f32 %v239, %v240
      %v242 = vsel %vm212, %v195, 0.0
      %v243 = vadd.f32 %v241, %v242
      %v244 = vsel %vm212, %v196, 0.0
      %v245 = vadd.f32 %v243, %v244
      %v246 = vsel %vm212, %v197, 0.0
      %v247 = vadd.f32 %v245, %v246
      %v248 = vsel %vm212, %v198, 0.0
      %v249 = vadd.f32 %v247, %v248
      %v250 = vsel %vm212, %v199, 0.0
      %v251 = vadd.f32 %v249, %v250
      %v252 = vsel %vm212, %v200, 0.0
      %v253 = vadd.f32 %v251, %v252
      %v254 = vsel %vm212, %v201, 0.0
      %v255 = vadd.f32 %v253, %v254
      %v256 = vsel %vm212, %v202, 0.0
      %v257 = vadd.f32 %v255, %v256
      %v258 = vsel %vm212, %v203, 0.0
      %v259 = vadd.f32 %v257, %v258
      %v260 = vsel %vm212, %v204, 0.0
      %v261 = vadd.f32 %v259, %v260
      %v262 = vsel %vm212, %v205, 0.0
      %v263 = vadd.f32 %v261, %v262
      %v264 = vsel %vm212, %v206, 0.0
      %v265 = vadd.f32 %v263, %v264
      %v266 = vsel %vm212, %v207, 0.0
      %v267 = vadd.f32 %v265, %v266
      %v268 = vsel %vm212, %v208, 0.0
      %v269 = vadd.f32 %v267, %v268
      %v270 = vsel %vm212, %v209, 0.0
      %v271 = vadd.f32 %v269, %v270
      %v272 = vsel %vm212, %v210, 0.0
      %v273 = vadd.f32 %v271, %v272
      %v274 = vsel %vm212, %v211, 0.0
      %v275 = vadd.f32 %v273, %v274
      %v276 = vrot.slane %v275, 4
      %v277 = vadd.f32 %v275, %v276
      %v278 = vrot.slane %v277, 2
      %v279 = vadd.f32 %v277, %v278
      %v280 = vrot.slane %v279, 1
      %v281 = vadd.f32 %v279, %v280
      %v282 = vrcp.pop 256.0
      %v283 = vmul.f32 %v281, %v282
      %v284 = vsub.f32 %v180, %v283
      %v285 = vsub.f32 %v181, %v283
      %v286 = vsub.f32 %v182, %v283
      %v287 = vsub.f32 %v183, %v283
      %v288 = vsub.f32 %v184, %v283
      %v289 = vsub.f32 %v185, %v283
      %v290 = vsub.f32 %v186, %v283
      %v291 = vsub.f32 %v187, %v283
      %v292 = vsub.f32 %v188, %v283
      %v293 = vsub.f32 %v189, %v283
      %v294 = vsub.f32 %v190, %v283
      %v295 = vsub.f32 %v191, %v283
      %v296 = vsub.f32 %v192, %v283
      %v297 = vsub.f32 %v193, %v283
      %v298 = vsub.f32 %v194, %v283
      %v299 = vsub.f32 %v195, %v283
      %v300 = vsub.f32 %v196, %v283
      %v301 = vsub.f32 %v197, %v283
      %v302 = vsub.f32 %v198, %v283
      %v303 = vsub.f32 %v199, %v283
      %v304 = vsub.f32 %v200, %v283
      %v305 = vsub.f32 %v201, %v283
      %v306 = vsub.f32 %v202, %v283
      %v307 = vsub.f32 %v203, %v283
      %v308 = vsub.f32 %v204, %v283
      %v309 = vsub.f32 %v205, %v283
      %v310 = vsub.f32 %v206, %v283
      %v311 = vsub.f32 %v207, %v283
      %v312 = vsub.f32 %v208, %v283
      %v313 = vsub.f32 %v209, %v283
      %v314 = vsub.f32 %v210, %v283
      %v315 = vsub.f32 %v211, %v283
      %v316 = vmul.f32 %v284, %v284
      %v317 = vmul.f32 %v285, %v285
      %v318 = vmul.f32 %v286, %v286
      %v319 = vmul.f32 %v287, %v287
      %v320 = vmul.f32 %v288, %v288
      %v321 = vmul.f32 %v289, %v289
      %v322 = vmul.f32 %v290, %v290
      %v323 = vmul.f32 %v291, %v291
      %v324 = vmul.f32 %v292, %v292
      %v325 = vmul.f32 %v293, %v293
      %v326 = vmul.f32 %v294, %v294
      %v327 = vmul.f32 %v295, %v295
      %v328 = vmul.f32 %v296, %v296
      %v329 = vmul.f32 %v297, %v297
      %v330 = vmul.f32 %v298, %v298
      %v331 = vmul.f32 %v299, %v299
      %v332 = vmul.f32 %v300, %v300
      %v333 = vmul.f32 %v301, %v301
      %v334 = vmul.f32 %v302, %v302
      %v335 = vmul.f32 %v303, %v303
      %v336 = vmul.f32 %v304, %v304
      %v337 = vmul.f32 %v305, %v305
      %v338 = vmul.f32 %v306, %v306
      %v339 = vmul.f32 %v307, %v307
      %v340 = vmul.f32 %v308, %v308
      %v341 = vmul.f32 %v309, %v309
      %v342 = vmul.f32 %v310, %v310
      %v343 = vmul.f32 %v311, %v311
      %v344 = vmul.f32 %v312, %v312
      %v345 = vmul.f32 %v313, %v313
      %v346 = vmul.f32 %v314, %v314
      %v347 = vmul.f32 %v315, %v315
      %v348 = vsel %vm212, %v316, 0.0
      %v349 = vsel %vm212, %v317, 0.0
      %v350 = vadd.f32 %v348, %v349
      %v351 = vsel %vm212, %v318, 0.0
      %v352 = vadd.f32 %v350, %v351
      %v353 = vsel %vm212, %v319, 0.0
      %v354 = vadd.f32 %v352, %v353
      %v355 = vsel %vm212, %v320, 0.0
      %v356 = vadd.f32 %v354, %v355
      %v357 = vsel %vm212, %v321, 0.0
      %v358 = vadd.f32 %v356, %v357
      %v359 = vsel %vm212, %v322, 0.0
      %v360 = vadd.f32 %v358, %v359
      %v361 = vsel %vm212, %v323, 0.0
      %v362 = vadd.f32 %v360, %v361
      %v363 = vsel %vm212, %v324, 0.0
      %v364 = vadd.f32 %v362, %v363
      %v365 = vsel %vm212, %v325, 0.0
      %v366 = vadd.f32 %v364, %v365
      %v367 = vsel %vm212, %v326, 0.0
      %v368 = vadd.f32 %v366, %v367
      %v369 = vsel %vm212, %v327, 0.0
      %v370 = vadd.f32 %v368, %v369
      %v371 = vsel %vm212, %v328, 0.0
      %v372 = vadd.f32 %v370, %v371
      %v373 = vsel %vm212, %v329, 0.0
      %v374 = vadd.f32 %v372, %v373
      %v375 = vsel %vm212, %v330, 0.0
      %v376 = vadd.f32 %v374, %v375
      %v377 = vsel %vm212, %v331, 0.0
      %v378 = vadd.f32 %v376, %v377
      %v379 = vsel %vm212, %v332, 0.0
      %v380 = vadd.f32 %v378, %v379
      %v381 = vsel %vm212, %v333, 0.0
      %v382 = vadd.f32 %v380, %v381
      %v383 = vsel %vm212, %v334, 0.0
      %v384 = vadd.f32 %v382, %v383
      %v385 = vsel %vm212, %v335, 0.0
      %v386 = vadd.f32 %v384, %v385
      %v387 = vsel %vm212, %v336, 0.0
      %v388 = vadd.f32 %v386, %v387
      %v389 = vsel %vm212, %v337, 0.0
      %v390 = vadd.f32 %v388, %v389
      %v391 = vsel %vm212, %v338, 0.0
      %v392 = vadd.f32 %v390, %v391
      %v393 = vsel %vm212, %v339, 0.0
      %v394 = vadd.f32 %v392, %v393
      %v395 = vsel %vm212, %v340, 0.0
      %v396 = vadd.f32 %v394, %v395
      %v397 = vsel %vm212, %v341, 0.0
      %v398 = vadd.f32 %v396, %v397
      %v399 = vsel %vm212, %v342, 0.0
      %v400 = vadd.f32 %v398, %v399
      %v401 = vsel %vm212, %v343, 0.0
      %v402 = vadd.f32 %v400, %v401
      %v403 = vsel %vm212, %v344, 0.0
      %v404 = vadd.f32 %v402, %v403
      %v405 = vsel %vm212, %v345, 0.0
      %v406 = vadd.f32 %v404, %v405
      %v407 = vsel %vm212, %v346, 0.0
      %v408 = vadd.f32 %v406, %v407
      %v409 = vsel %vm212, %v347, 0.0
      %v410 = vadd.f32 %v408, %v409
      %v411 = vrot.slane %v410, 4
      %v412 = vadd.f32 %v410, %v411
      %v413 = vrot.slane %v412, 2
      %v414 = vadd.f32 %v412, %v413
      %v415 = vrot.slane %v414, 1
      %v416 = vadd.f32 %v414, %v415
      %v417 = vmul.f32 %v416, %v282
      %v418 = vadd.f32 %v417, 1e-05
      %v419 = vrsqrt.pop %v418
      %v420 = vmul.f32 %v284, %v419
      %v421 = vmul.f32 %v285, %v419
      %v422 = vmul.f32 %v286, %v419
      %v423 = vmul.f32 %v287, %v419
      %v424 = vmul.f32 %v288, %v419
      %v425 = vmul.f32 %v289, %v419
      %v426 = vmul.f32 %v290, %v419
      %v427 = vmul.f32 %v291, %v419
      %v428 = vmul.f32 %v292, %v419
      %v429 = vmul.f32 %v293, %v419
      %v430 = vmul.f32 %v294, %v419
      %v431 = vmul.f32 %v295, %v419
      %v432 = vmul.f32 %v296, %v419
      %v433 = vmul.f32 %v297, %v419
      %v434 = vmul.f32 %v298, %v419
      %v435 = vmul.f32 %v299, %v419
      %v436 = vmul.f32 %v300, %v419
      %v437 = vmul.f32 %v301, %v419
      %v438 = vmul.f32 %v302, %v419
      %v439 = vmul.f32 %v303, %v419
      %v440 = vmul.f32 %v304, %v419
      %v441 = vmul.f32 %v305, %v419
      %v442 = vmul.f32 %v306, %v419
      %v443 = vmul.f32 %v307, %v419
      %v444 = vmul.f32 %v308, %v419
      %v445 = vmul.f32 %v309, %v419
      %v446 = vmul.f32 %v310, %v419
      %v447 = vmul.f32 %v311, %v419
      %v448 = vmul.f32 %v312, %v419
      %v449 = vmul.f32 %v313, %v419
      %v450 = vmul.f32 %v314, %v419
      %v451 = vmul.f32 %v315, %v419
      %v452 = vmax.f32 %v420, 0.0
      %v453 = vmax.f32 %v421, 0.0
      %v454 = vmax.f32 %v422, 0.0
      %v455 = vmax.f32 %v423, 0.0
      %v456 = vmax.f32 %v424, 0.0
      %v457 = vmax.f32 %v425, 0.0
      %v458 = vmax.f32 %v426, 0.0
      %v459 = vmax.f32 %v427, 0.0
      %v460 = vmax.f32 %v428, 0.0
      %v461 = vmax.f32 %v429, 0.0
      %v462 = vmax.f32 %v430, 0.0
      %v463 = vmax.f32 %v431, 0.0
      %v464 = vmax.f32 %v432, 0.0
      %v465 = vmax.f32 %v433, 0.0
      %v466 = vmax.f32 %v434, 0.0
      %v467 = vmax.f32 %v435, 0.0
      %v468 = vmax.f32 %v436, 0.0
      %v469 = vmax.f32 %v437, 0.0
      %v470 = vmax.f32 %v438, 0.0
      %v471 = vmax.f32 %v439, 0.0
      %v472 = vmax.f32 %v440, 0.0
      %v473 = vmax.f32 %v441, 0.0
      %v474 = vmax.f32 %v442, 0.0
      %v475 = vmax.f32 %v443, 0.0
      %v476 = vmax.f32 %v444, 0.0
      %v477 = vmax.f32 %v445, 0.0
      %v478 = vmax.f32 %v446, 0.0
      %v479 = vmax.f32 %v447, 0.0
      %v480 = vmax.f32 %v448, 0.0
      %v481 = vmax.f32 %v449, 0.0
      %v482 = vmax.f32 %v450, 0.0
      %v483 = vmax.f32 %v451, 0.0
      %v484 = vpack.c.bf16 %v453, %v452
      %v485 = vpack.c.bf16 %v455, %v454
      %v486 = vpack.c.bf16 %v457, %v456
      %v487 = vpack.c.bf16 %v459, %v458
      %v488 = vpack.c.bf16 %v461, %v460
      %v489 = vpack.c.bf16 %v463, %v462
      %v490 = vpack.c.bf16 %v465, %v464
      %v491 = vpack.c.bf16 %v467, %v466
      %v492 = vpack.c.bf16 %v469, %v468
      %v493 = vpack.c.bf16 %v471, %v470
      %v494 = vpack.c.bf16 %v473, %v472
      %v495 = vpack.c.bf16 %v475, %v474
      %v496 = vpack.c.bf16 %v477, %v476
      %v497 = vpack.c.bf16 %v479, %v478
      %v498 = vpack.c.bf16 %v481, %v480
      %v499 = vpack.c.bf16 %v483, %v482
      %v516 = vunpack.c.l.b16 %v484
      %v517 = vunpack.c.h.b16 %v484
      %v518 = vunpack.c.l.b16 %v485
      %v519 = vunpack.c.h.b16 %v485
      %v520 = vunpack.c.l.b16 %v486
      %v521 = vunpack.c.h.b16 %v486
      %v522 = vunpack.c.l.b16 %v487
      %v523 = vunpack.c.h.b16 %v487
      %v524 = vunpack.c.l.b16 %v488
      %v525 = vunpack.c.h.b16 %v488
      %v526 = vunpack.c.l.b16 %v489
      %v527 = vunpack.c.h.b16 %v489
      %v528 = vunpack.c.l.b16 %v490
      %v529 = vunpack.c.h.b16 %v490
      %v530 = vunpack.c.l.b16 %v491
      %v531 = vunpack.c.h.b16 %v491
      %v532 = vunpack.c.l.b16 %v492
      %v533 = vunpack.c.h.b16 %v492
      %v534 = vunpack.c.l.b16 %v493
      %v535 = vunpack.c.h.b16 %v493
      %v536 = vunpack.c.l.b16 %v494
      %v537 = vunpack.c.h.b16 %v494
      %v538 = vunpack.c.l.b16 %v495
      %v539 = vunpack.c.h.b16 %v495
      %v540 = vunpack.c.l.b16 %v496
      %v541 = vunpack.c.h.b16 %v496
      %v542 = vunpack.c.l.b16 %v497
      %v543 = vunpack.c.h.b16 %v497
      %v544 = vunpack.c.l.b16 %v498
      %v545 = vunpack.c.h.b16 %v498
      %v546 = vunpack.c.l.b16 %v499
      %v547 = vunpack.c.h.b16 %v499
      %v548 = vpack.c.b16 %v516, %v516
      %v549 = vpack.c.b16 %v517, %v517
      %v550 = vpack.c.b16 %v518, %v518
      %v551 = vpack.c.b16 %v519, %v519
      %v552 = vpack.c.b16 %v520, %v520
      %v553 = vpack.c.b16 %v521, %v521
      %v554 = vpack.c.b16 %v522, %v522
      %v555 = vpack.c.b16 %v523, %v523
      %v556 = vpack.c.b16 %v524, %v524
      %v557 = vpack.c.b16 %v525, %v525
      %v558 = vpack.c.b16 %v526, %v526
      %v559 = vpack.c.b16 %v527, %v527
      %v560 = vpack.c.b16 %v528, %v528
      %v561 = vpack.c.b16 %v529, %v529
      %v562 = vpack.c.b16 %v530, %v530
      %v563 = vpack.c.b16 %v531, %v531
      %v564 = vpack.c.b16 %v532, %v532
      %v565 = vpack.c.b16 %v533, %v533
      %v566 = vpack.c.b16 %v534, %v534
      %v567 = vpack.c.b16 %v535, %v535
      %v568 = vpack.c.b16 %v536, %v536
      %v569 = vpack.c.b16 %v537, %v537
      %v570 = vpack.c.b16 %v538, %v538
      %v571 = vpack.c.b16 %v539, %v539
      %v572 = vpack.c.b16 %v540, %v540
      %v573 = vpack.c.b16 %v541, %v541
      %v574 = vpack.c.b16 %v542, %v542
      %v575 = vpack.c.b16 %v543, %v543
      %v576 = vpack.c.b16 %v544, %v544
      %v577 = vpack.c.b16 %v545, %v545
      %v578 = vpack.c.b16 %v546, %v546
      %v579 = vpack.c.b16 %v547, %v547
      %vm612 = vcmask 257024
      %613 = vst.msk [vmem:[%s147] sm:$0xf] %vm612, %v548
      %614 = vst.msk [vmem:[%s147 + $0x4] sm:$0xf] %vm612, %v549
      %615 = vst.msk [vmem:[%s147 + $0x8] sm:$0xf] %vm612, %v550
      %616 = vst.msk [vmem:[%s147 + $0xc] sm:$0xf] %vm612, %v551
      %617 = vst.msk [vmem:[%s147 + $0x10] sm:$0xf] %vm612, %v552
      %618 = vst.msk [vmem:[%s147 + $0x14] sm:$0xf] %vm612, %v553
      %619 = vst.msk [vmem:[%s147 + $0x18] sm:$0xf] %vm612, %v554
      %620 = vst.msk [vmem:[%s147 + $0x1c] sm:$0xf] %vm612, %v555
      %621 = vst.msk [vmem:[%s147 + $0x20] sm:$0xf] %vm612, %v556
      %622 = vst.msk [vmem:[%s147 + $0x24] sm:$0xf] %vm612, %v557
      %623 = vst.msk [vmem:[%s147 + $0x28] sm:$0xf] %vm612, %v558
      %624 = vst.msk [vmem:[%s147 + $0x2c] sm:$0xf] %vm612, %v559
      %625 = vst.msk [vmem:[%s147 + $0x30] sm:$0xf] %vm612, %v560
      %626 = vst.msk [vmem:[%s147 + $0x34] sm:$0xf] %vm612, %v561
      %627 = vst.msk [vmem:[%s147 + $0x38] sm:$0xf] %vm612, %v562
      %628 = vst.msk [vmem:[%s147 + $0x3c] sm:$0xf] %vm612, %v563
      %629 = vst.msk [vmem:[%s147 + $0x40] sm:$0xf] %vm612, %v564
      %630 = vst.msk [vmem:[%s147 + $0x44] sm:$0xf] %vm612, %v565
      %631 = vst.msk [vmem:[%s147 + $0x48] sm:$0xf] %vm612, %v566
      %632 = vst.msk [vmem:[%s147 + $0x4c] sm:$0xf] %vm612, %v567
      %633 = vst.msk [vmem:[%s147 + $0x50] sm:$0xf] %vm612, %v568
      %634 = vst.msk [vmem:[%s147 + $0x54] sm:$0xf] %vm612, %v569
      %635 = vst.msk [vmem:[%s147 + $0x58] sm:$0xf] %vm612, %v570
      %636 = vst.msk [vmem:[%s147 + $0x5c] sm:$0xf] %vm612, %v571
      %637 = vst.msk [vmem:[%s147 + $0x60] sm:$0xf] %vm612, %v572
      %638 = vst.msk [vmem:[%s147 + $0x64] sm:$0xf] %vm612, %v573
      %639 = vst.msk [vmem:[%s147 + $0x68] sm:$0xf] %vm612, %v574
      %640 = vst.msk [vmem:[%s147 + $0x6c] sm:$0xf] %vm612, %v575
      %641 = vst.msk [vmem:[%s147 + $0x70] sm:$0xf] %vm612, %v576
      %642 = vst.msk [vmem:[%s147 + $0x74] sm:$0xf] %vm612, %v577
      %643 = vst.msk [vmem:[%s147 + $0x78] sm:$0xf] %vm612, %v578
      %644 = vst.msk [vmem:[%s147 + $0x7c] sm:$0xf] %vm612, %v579
      %p645 = scmp.lt.s32.totalorder %s16, 1
      %s646 = scalar_select %p645, %s16, 1
      %p647 = scmp.lt.s32.totalorder %s17, 0
      %s648 = scalar_select %p647, %s17, 0
      %s649 = smul.addr %s646, 32
      %s650 = sadd.s32 %s648, %s649
      %s651 = smul.addr %s650, 4
      %s652 = scalar_lea.vmem %s1, %s651
      // Predicated region
      $region25: #{residual_block_forward.5} parent=23 // pred_check
        %p653 = pneg %p72
      $region26: #{residual_block_forward.5} parent=23 // pred_check_branch
        %655 = sbr.rel (%p653) target = $region28
      $region27: #{residual_block_forward.5} parent=23 // pred_region
        _
      $region28: #{residual_block_forward.5} parent=23 // pred_fallthru
        _
    $region24: #{residual_block_forward.5} parent=5 // pred_fallthru
      _
    %p656 = scmp.le.s32.totalorder 2, %s7
    // Predicated region
    $region29: #{residual_block_forward.5} parent=5 // pred_check
      %p657 = pneg %p656
    $region30: #{residual_block_forward.5} parent=5 // pred_check_branch
      %659 = sbr.rel (%p657) target = $region32
    $region31: #{residual_block_forward.5} parent=5 // pred_region
      %s660 = ssub.s32 %s7, 2
      // Predicated region
      $region33: #{residual_block_forward.5} parent=31 // pred_check
        %p661 = pneg %p78
      $region34: #{residual_block_forward.5} parent=31 // pred_check_branch
        %663 = sbr.rel (%p661) target = $region36
      $region35: #{residual_block_forward.5} parent=31 // pred_region
        %p664 = scmp.lt.s32.totalorder %s18, 1
        %s665 = scalar_select %p664, %s18, 1
        %p666 = scmp.lt.s32.totalorder %s19, 0
        %s667 = scalar_select %p666, %s19, 0
        %s668 = smul.addr %s665, 32
        %s669 = sadd.s32 %s667, %s668
        %s670 = smul.addr %s669, 4
        %s671 = scalar_lea.vmem %s1, %s670
      $region36: #{residual_block_forward.5} parent=31 // pred_fallthru
        _
    $region32: #{residual_block_forward.5} parent=5 // pred_fallthru
      _
  $region6: #{residual_block_forward.5} parent=0 // loop_footer
    %s11 = sadd.s32 1, %s7
  $region7: #{residual_block_forward.5} parent=0 // loop_footer_branch
    %6 = sbr.rel target = $region3
  $region8: #{residual_block_forward.5} parent=0 // loop_exit
    _

// kernel: residual_block_forward.7
$region0: #{residual_block_forward.7}
  #allocation0 [shape = 'u32[]', space=smem, size = 0x4, offset = 0x4, fixed_abs, tag = 'smem constant byte address 0x4 - core index']
  #allocation1 [shape = 'u32[144,128]{1,0:T(1,128)}', space=vmem, size = 0x12000, scoped, tag = 'internal scratch']
  %s0 = inlined_call_operand.vmem [shape: bf16[2,256,32], index: 0, kind: input, shape index: {}]
  %s1 = inlined_call_operand.vmem [shape: f32[2,256,32], index: 1, kind: input, shape index: {}]
  %s2 = inlined_call_operand.hbm [shape: f32[2,256,32], index: 2, kind: output, shape index: {}]
  %s3 = sld [smem:[#allocation0]]
  $region41: #{residual_block_forward.7} parent=0
    _
  %s5 = ssub.s32 1, %s3
  %s6 = scalar_select 0, %s5, %s3
  $region1: #{residual_block_forward.7} parent=0
    #allocation2 [shape = 'u8[262144]{0}', space=vmem, size = 0x40000, scoped, tag = 'output window, operand 0']
    #allocation3 [shape = 's32[2]{0}', space=sflag, size = 0x8, scoped, tag = 'scoped memory for residual_block_forward.7']
    %7 = vsyncpa [#allocation3], 0
    %s8 = scalar_lea.sflag [#allocation3], 1
    %9 = vsyncpa %s8, 0
    loop: start=0, step=1, limit=4
    $region2: #{residual_block_forward.7} parent=1 // loop_pre_header
      _
    $region3: #{residual_block_forward.7} parent=1 // loop_header
      %s11 = sphi 0, %s15
      %p12 = scmp.ge.s32.totalorder %s11, 4
      %s18 = sphi 0, %s30
      %s19 = sphi 0, %s26
      %s20 = sphi 0, %s18
      %s21 = sphi 0, %s19
      %s22 = sphi 0, %s20
      %s23 = sphi 0, %s21
      %s35 = sphi 0, %s37
      %s38 = sphi 0, %s35
      %s39 = sphi 0, %s38
      %s55 = sphi 0, %s39
      %s63 = sphi 0, %s65
      %s66 = sphi 0, %s63
      %s67 = sphi 0, %s66
      %s83 = sphi 0, %s67
      %s91 = sphi 0, %s93
      %s94 = sphi 0, %s91
      %s95 = sphi 0, %s94
      %s111 = sphi 0, %s95
    $region4: #{residual_block_forward.7} parent=1 // loop_header_branch
      %14 = sbr.rel (%p12) target = $region8
    $region5: #{residual_block_forward.7} parent=1 // loop_body
      %s16 = ssub.s32 %s11, 1
      %s17 = ssub.s32 %s11, 2
      %s24 = sadd.s32 1, %s19
      %p25 = scmp.ge.s32.totalorder %s24, 1
      %s26 = scalar_select %p25, 0, %s24
      %s27 = sadd.s32 1, %s18
      %s28 = scalar_select %p25, %s27, %s18
      %p29 = scmp.ge.s32.totalorder %s28, 2
      %s30 = scalar_select %p29, 0, %s28
      %s31 = ssub.s32 %s18, %s30
      %s32 = ssub.s32 %s19, %s26
      %s33 = sor.u32 %s31, %s32
      %p34 = scmp.eq.s32.totalorder %s33, 0
      %s36 = sadd.s32 %s35, 1
      %s37 = scalar_select %p34, %s35, %s36
      %p40 = pneg %p34
      %p41 = scmp.eq.s32.totalorder %s11, 1
      %p42 = por %p40, %p41
      %p43 = scmp.ne.s32.totalorder %s35, %s38
      %p44 = scmp.eq.s32.totalorder %s11, 0
      %p45 = por %p43, %p44
      %p46 = scmp.ne.s32.totalorder %s35, %s38
      %p47 = scmp.eq.s32.totalorder %s16, 1
      %p48 = por %p46, %p47
      %p49 = scmp.ne.s32.totalorder %s38, %s39
      %p50 = scmp.eq.s32.totalorder %s16, 0
      %p51 = por %p49, %p50
      %p52 = scmp.ne.s32.totalorder %s38, %s39
      %p53 = scmp.eq.s32.totalorder %s17, 1
      %p54 = por %p52, %p53
      %p56 = scmp.ne.s32.totalorder %s39, %s55
      %p57 = scmp.eq.s32.totalorder %s17, 0
      %p58 = por %p56, %p57
      %s59 = ssub.s32 %s18, %s30
      %s60 = ssub.s32 %s19, %s26
      %s61 = sor.u32 %s59, %s60
      %p62 = scmp.eq.s32.totalorder %s61, 0
      %s64 = sadd.s32 %s63, 1
      %s65 = scalar_select %p62, %s63, %s64
      %p68 = pneg %p62
      %p69 = scmp.eq.s32.totalorder %s11, 1
      %p70 = por %p68, %p69
      %p71 = scmp.ne.s32.totalorder %s63, %s66
      %p72 = scmp.eq.s32.totalorder %s11, 0
      %p73 = por %p71, %p72
      %p74 = scmp.ne.s32.totalorder %s63, %s66
      %p75 = scmp.eq.s32.totalorder %s16, 1
      %p76 = por %p74, %p75
      %p77 = scmp.ne.s32.totalorder %s66, %s67
      %p78 = scmp.eq.s32.totalorder %s16, 0
      %p79 = por %p77, %p78
      %p80 = scmp.ne.s32.totalorder %s66, %s67
      %p81 = scmp.eq.s32.totalorder %s17, 1
      %p82 = por %p80, %p81
      %p84 = scmp.ne.s32.totalorder %s67, %s83
      %p85 = scmp.eq.s32.totalorder %s17, 0
      %p86 = por %p84, %p85
      %s87 = ssub.s32 %s18, %s30
      %s88 = ssub.s32 %s19, %s26
      %s89 = sor.u32 %s87, %s88
      %p90 = scmp.eq.s32.totalorder %s89, 0
      %s92 = sadd.s32 %s91, 1
      %s93 = scalar_select %p90, %s91, %s92
      %p96 = pneg %p90
      %p97 = scmp.eq.s32.totalorder %s11, 1
      %p98 = por %p96, %p97
      %p99 = scmp.ne.s32.totalorder %s91, %s94
      %p100 = scmp.eq.s32.totalorder %s11, 0
      %p101 = por %p99, %p100
      %p102 = scmp.ne.s32.totalorder %s91, %s94
      %p103 = scmp.eq.s32.totalorder %s16, 1
      %p104 = por %p102, %p103
      %p105 = scmp.ne.s32.totalorder %s94, %s95
      %p106 = scmp.eq.s32.totalorder %s16, 0
      %p107 = por %p105, %p106
      %p108 = scmp.ne.s32.totalorder %s94, %s95
      %p109 = scmp.eq.s32.totalorder %s17, 1
      %p110 = por %p108, %p109
      %p112 = scmp.ne.s32.totalorder %s95, %s111
      %p113 = scmp.eq.s32.totalorder %s17, 0
      %p114 = por %p112, %p113
      %p115 = scmp.le.s32.totalorder 1, %s11
      %p116 = scmp.lt.s32.totalorder %s11, 3
      %p117 = pnand %p115, %p116
      %p118 = pneg %p117
      // Predicated region
      $region9: #{residual_block_forward.7} parent=5 // pred_check
        _
      $region10: #{residual_block_forward.7} parent=5 // pred_check_branch
        %120 = sbr.rel (%p117) target = $region12
      $region11: #{residual_block_forward.7} parent=5 // pred_region
        %s121 = ssub.s32 %s11, 1
      $region12: #{residual_block_forward.7} parent=5 // pred_fallthru
        _
      %p122 = scmp.lt.s32.totalorder %s11, 2
      // Predicated region
      $region13: #{residual_block_forward.7} parent=5 // pred_check
        %p123 = pneg %p122
      $region14: #{residual_block_forward.7} parent=5 // pred_check_branch
        %125 = sbr.rel (%p123) target = $region16
      $region15: #{residual_block_forward.7} parent=5 // pred_region
        // Predicated region
        $region17: #{residual_block_forward.7} parent=15 // pred_check
          %p126 = pneg %p45
        $region18: #{residual_block_forward.7} parent=15 // pred_check_branch
          %128 = sbr.rel (%p126) target = $region20
        $region19: #{residual_block_forward.7} parent=15 // pred_region
          %p129 = scmp.lt.s32.totalorder %s18, 1
          %s130 = scalar_select %p129, %s18, 1
          %p131 = scmp.lt.s32.totalorder %s19, 0
          %s132 = scalar_select %p131, %s19, 0
          %s133 = smul.addr %s130, 32
          %s134 = sadd.s32 %s132, %s133
          %s135 = smul.addr %s134, 4
          %s136 = scalar_lea.vmem %s0, %s135
        $region20: #{residual_block_forward.7} parent=15 // pred_fallthru
          _
        // Predicated region
        $region21: #{residual_block_forward.7} parent=15 // pred_check
          %p137 = pneg %p73
        $region22: #{residual_block_forward.7} parent=15 // pred_check_branch
          %139 = sbr.rel (%p137) target = $region24
        $region23: #{residual_block_forward.7} parent=15 // pred_region
          %p140 = scmp.lt.s32.totalorder %s18, 1
          %s141 = scalar_select %p140, %s18, 1
          %p142 = scmp.lt.s32.totalorder %s19, 0
          %s143 = scalar_select %p142, %s19, 0
          %s144 = smul.addr %s141, 32
          %s145 = sadd.s32 %s143, %s144
          %s146 = smul.addr %s145, 8
          %s147 = scalar_lea.vmem %s1, %s146
        $region24: #{residual_block_forward.7} parent=15 // pred_fallthru
          _
      $region16: #{residual_block_forward.7} parent=5 // pred_fallthru
        _
      %p148 = scmp.le.s32.totalorder 1, %s11
      %p149 = scmp.lt.s32.totalorder %s11, 3
      %p150 = pnand %p148, %p149
      %p151 = pneg %p150
      // Predicated region
      $region25: #{residual_block_forward.7} parent=5 // pred_check
        _
      $region26: #{residual_block_forward.7} parent=5 // pred_check_branch
        %153 = sbr.rel (%p150) target = $region28
      $region27: #{residual_block_forward.7} parent=5 // pred_region
        %s154 = ssub.s32 %s11, 1
        %p155 = scmp.lt.s32.totalorder %s20, 1
        %s156 = scalar_select %p155, %s20, 1
        %p157 = scmp.lt.s32.totalorder %s21, 0
        %s158 = scalar_select %p157, %s21, 0
        %s159 = smul.addr %s156, 32
        %s160 = sadd.s32 %s158, %s159
        %s161 = smul.addr %s160, 4
        %s162 = scalar_lea.vmem %s0, %s161
        %p163 = pneg %p51
        %p164 = pneg %p48
        %p165 = scmp.lt.s32.totalorder %s20, 1
        %s166 = scalar_select %p165, %s20, 1
        %p167 = scmp.lt.s32.totalorder %s21, 0
        %s168 = scalar_select %p167, %s21, 0
        %s169 = smul.addr %s166, 32
        %s170 = sadd.s32 %s168, %s169
        %s171 = smul.addr %s170, 8
        %s172 = scalar_lea.vmem %s1, %s171
        %p173 = pneg %p79
        %p174 = pneg %p76
        %p175 = pneg %p107
        %p176 = pneg %p104
        %s177 = sand.u32 %s94, 1
        %s178 = scalar_lea.sflag [#allocation3], %s177
        %s179 = sand.u32 %s94, 1
        %s180 = smul.addr %s179, 256
        %s181 = scalar_lea.vmem [#allocation2], %s180
        %p182 = scmp.lt.s32.totalorder %s20, 1
        %s183 = scalar_select %p182, %s20, 1
        %p184 = scmp.lt.s32.totalorder %s21, 0
        %s185 = scalar_select %p184, %s21, 0
        %s186 = smul.addr %s183, 32
        %s187 = sadd.s32 %s185, %s186
        %s188 = smul.addr %s187, 4
        %s189 = scalar_lea.vmem %s0, %s188
        %p190 = scmp.lt.s32.totalorder %s20, 1
        %s191 = scalar_select %p190, %s20, 1
        %p192 = scmp.lt.s32.totalorder %s21, 0
        %s193 = scalar_select %p192, %s21, 0
        %s194 = smul.addr %s191, 32
        %s195 = sadd.s32 %s193, %s194
        %s196 = smul.addr %s195, 8
        %s197 = scalar_lea.vmem %s1, %s196
        %v198 = vld [vmem:[%s189] sm:$0xf]
        %v199 = vld [vmem:[%s189 + $0x4] sm:$0xf]
        %v200 = vld [vmem:[%s189 + $0x8] sm:$0xf]
        %v201 = vld [vmem:[%s189 + $0xc] sm:$0xf]
        %v202 = vld [vmem:[%s189 + $0x10] sm:$0xf]
        %v203 = vld [vmem:[%s189 + $0x14] sm:$0xf]
        %v204 = vld [vmem:[%s189 + $0x18] sm:$0xf]
        %v205 = vld [vmem:[%s189 + $0x1c] sm:$0xf]
        %v206 = vld [vmem:[%s189 + $0x20] sm:$0xf]
        %v207 = vld [vmem:[%s189 + $0x24] sm:$0xf]
        %v208 = vld [vmem:[%s189 + $0x28] sm:$0xf]
        %v209 = vld [vmem:[%s189 + $0x2c] sm:$0xf]
        %v210 = vld [vmem:[%s189 + $0x30] sm:$0xf]
        %v211 = vld [vmem:[%s189 + $0x34] sm:$0xf]
        %v212 = vld [vmem:[%s189 + $0x38] sm:$0xf]
        %v213 = vld [vmem:[%s189 + $0x3c] sm:$0xf]
        %v214 = vld [vmem:[%s189 + $0x40] sm:$0xf]
        %v215 = vld [vmem:[%s189 + $0x44] sm:$0xf]
        %v216 = vld [vmem:[%s189 + $0x48] sm:$0xf]
        %v217 = vld [vmem:[%s189 + $0x4c] sm:$0xf]
        %v218 = vld [vmem:[%s189 + $0x50] sm:$0xf]
        %v219 = vld [vmem:[%s189 + $0x54] sm:$0xf]
        %v220 = vld [vmem:[%s189 + $0x58] sm:$0xf]
        %v221 = vld [vmem:[%s189 + $0x5c] sm:$0xf]
        %v222 = vld [vmem:[%s189 + $0x60] sm:$0xf]
        %v223 = vld [vmem:[%s189 + $0x64] sm:$0xf]
        %v224 = vld [vmem:[%s189 + $0x68] sm:$0xf]
        %v225 = vld [vmem:[%s189 + $0x6c] sm:$0xf]
        %v226 = vld [vmem:[%s189 + $0x70] sm:$0xf]
        %v227 = vld [vmem:[%s189 + $0x74] sm:$0xf]
        %v228 = vld [vmem:[%s189 + $0x78] sm:$0xf]
        %v229 = vld [vmem:[%s189 + $0x7c] sm:$0xf]
        %v230 = vunpack.c.l.bf16 %v198
        %v231 = vunpack.c.l.bf16 %v199
        %v232 = vunpack.c.l.bf16 %v200
        %v233 = vunpack.c.l.bf16 %v201
        %v234 = vunpack.c.l.bf16 %v202
        %v235 = vunpack.c.l.bf16 %v203
        %v236 = vunpack.c.l.bf16 %v204
        %v237 = vunpack.c.l.bf16 %v205
        %v238 = vunpack.c.l.bf16 %v206
        %v239 = vunpack.c.l.bf16 %v207
        %v240 = vunpack.c.l.bf16 %v208
        %v241 = vunpack.c.l.bf16 %v209
        %v242 = vunpack.c.l.bf16 %v210
        %v243 = vunpack.c.l.bf16 %v211
        %v244 = vunpack.c.l.bf16 %v212
        %v245 = vunpack.c.l.bf16 %v213
        %v246 = vunpack.c.l.bf16 %v214
        %v247 = vunpack.c.l.bf16 %v215
        %v248 = vunpack.c.l.bf16 %v216
        %v249 = vunpack.c.l.bf16 %v217
        %v250 = vunpack.c.l.bf16 %v218
        %v251 = vunpack.c.l.bf16 %v219
        %v252 = vunpack.c.l.bf16 %v220
        %v253 = vunpack.c.l.bf16 %v221
        %v254 = vunpack.c.l.bf16 %v222
        %v255 = vunpack.c.l.bf16 %v223
        %v256 = vunpack.c.l.bf16 %v224
        %v257 = vunpack.c.l.bf16 %v225
        %v258 = vunpack.c.l.bf16 %v226
        %v259 = vunpack.c.l.bf16 %v227
        %v260 = vunpack.c.l.bf16 %v228
        %v261 = vunpack.c.l.bf16 %v229
        %vm262 = vcmask 261120
        %v263 = vsel %vm262, %v230, 0.0
        %v264 = vsel %vm262, %v231, 0.0
        %v265 = vadd.f32 %v263, %v264
        %v266 = vsel %vm262, %v232, 0.0
        %v267 = vadd.f32 %v265, %v266
        %v268 = vsel %vm262, %v233, 0.0
        %v269 = vadd.f32 %v267, %v268
        %v270 = vsel %vm262, %v234, 0.0
        %v271 = vadd.f32 %v269, %v270
        %v272 = vsel %vm262, %v235, 0.0
        %v273 = vadd.f32 %v271, %v272
        %v274 = vsel %vm262, %v236, 0.0
        %v275 = vadd.f32 %v273, %v274
        %v276 = vsel %vm262, %v237, 0.0
        %v277 = vadd.f32 %v275, %v276
        %v278 = vsel %vm262, %v238, 0.0
        %v279 = vadd.f32 %v277, %v278
        %v280 = vsel %vm262, %v239, 0.0
        %v281 = vadd.f32 %v279, %v280
        %v282 = vsel %vm262, %v240, 0.0
        %v283 = vadd.f32 %v281, %v282
        %v284 = vsel %vm262, %v241, 0.0
        %v285 = vadd.f32 %v283, %v284
        %v286 = vsel %vm262, %v242, 0.0
        %v287 = vadd.f32 %v285, %v286
        %v288 = vsel %vm262, %v243, 0.0
        %v289 = vadd.f32 %v287, %v288
        %v290 = vsel %vm262, %v244, 0.0
        %v291 = vadd.f32 %v289, %v290
        %v292 = vsel %vm262, %v245, 0.0
        %v293 = vadd.f32 %v291, %v292
        %v294 = vsel %vm262, %v246, 0.0
        %v295 = vadd.f32 %v293, %v294
        %v296 = vsel %vm262, %v247, 0.0
        %v297 = vadd.f32 %v295, %v296
        %v298 = vsel %vm262, %v248, 0.0
        %v299 = vadd.f32 %v297, %v298
        %v300 = vsel %vm262, %v249, 0.0
        %v301 = vadd.f32 %v299, %v300
        %v302 = vsel %vm262, %v250, 0.0
        %v303 = vadd.f32 %v301, %v302
        %v304 = vsel %vm262, %v251, 0.0
        %v305 = vadd.f32 %v303, %v304
        %v306 = vsel %vm262, %v252, 0.0
        %v307 = vadd.f32 %v305, %v306
        %v308 = vsel %vm262, %v253, 0.0
        %v309 = vadd.f32 %v307, %v308
        %v310 = vsel %vm262, %v254, 0.0
        %v311 = vadd.f32 %v309, %v310
        %v312 = vsel %vm262, %v255, 0.0
        %v313 = vadd.f32 %v311, %v312
        %v314 = vsel %vm262, %v256, 0.0
        %v315 = vadd.f32 %v313, %v314
        %v316 = vsel %vm262, %v257, 0.0
        %v317 = vadd.f32 %v315, %v316
        %v318 = vsel %vm262, %v258, 0.0
        %v319 = vadd.f32 %v317, %v318
        %v320 = vsel %vm262, %v259, 0.0
        %v321 = vadd.f32 %v319, %v320
        %v322 = vsel %vm262, %v260, 0.0
        %v323 = vadd.f32 %v321, %v322
        %v324 = vsel %vm262, %v261, 0.0
        %v325 = vadd.f32 %v323, %v324
        %v326 = vrot.slane %v325, 4
        %v327 = vadd.f32 %v325, %v326
        %v328 = vrot.slane %v327, 2
        %v329 = vadd.f32 %v327, %v328
        %v330 = vrot.slane %v329, 1
        %v331 = vadd.f32 %v329, %v330
        %v332 = vrcp.pop 256.0
        %v333 = vmul.f32 %v331, %v332
        %v334 = vsub.f32 %v230, %v333
        %v335 = vsub.f32 %v231, %v333
        %v336 = vsub.f32 %v232, %v333
        %v337 = vsub.f32 %v233, %v333
        %v338 = vsub.f32 %v234, %v333
        %v339 = vsub.f32 %v235, %v333
        %v340 = vsub.f32 %v236, %v333
        %v341 = vsub.f32 %v237, %v333
        %v342 = vsub.f32 %v238, %v333
        %v343 = vsub.f32 %v239, %v333
        %v344 = vsub.f32 %v240, %v333
        %v345 = vsub.f32 %v241, %v333
        %v346 = vsub.f32 %v242, %v333
        %v347 = vsub.f32 %v243, %v333
        %v348 = vsub.f32 %v244, %v333
        %v349 = vsub.f32 %v245, %v333
        %v350 = vsub.f32 %v246, %v333
        %v351 = vsub.f32 %v247, %v333
        %v352 = vsub.f32 %v248, %v333
        %v353 = vsub.f32 %v249, %v333
        %v354 = vsub.f32 %v250, %v333
        %v355 = vsub.f32 %v251, %v333
        %v356 = vsub.f32 %v252, %v333
        %v357 = vsub.f32 %v253, %v333
        %v358 = vsub.f32 %v254, %v333
        %v359 = vsub.f32 %v255, %v333
        %v360 = vsub.f32 %v256, %v333
        %v361 = vsub.f32 %v257, %v333
        %v362 = vsub.f32 %v258, %v333
        %v363 = vsub.f32 %v259, %v333
        %v364 = vsub.f32 %v260, %v333
        %v365 = vsub.f32 %v261, %v333
        %v366 = vmul.f32 %v334, %v334
        %v367 = vmul.f32 %v335, %v335
        %v368 = vmul.f32 %v336, %v336
        %v369 = vmul.f32 %v337, %v337
        %v370 = vmul.f32 %v338, %v338
        %v371 = vmul.f32 %v339, %v339
        %v372 = vmul.f32 %v340, %v340
        %v373 = vmul.f32 %v341, %v341
        %v374 = vmul.f32 %v342, %v342
        %v375 = vmul.f32 %v343, %v343
        %v376 = vmul.f32 %v344, %v344
        %v377 = vmul.f32 %v345, %v345
        %v378 = vmul.f32 %v346, %v346
        %v379 = vmul.f32 %v347, %v347
        %v380 = vmul.f32 %v348, %v348
        %v381 = vmul.f32 %v349, %v349
        %v382 = vmul.f32 %v350, %v350
        %v383 = vmul.f32 %v351, %v351
        %v384 = vmul.f32 %v352, %v352
        %v385 = vmul.f32 %v353, %v353
        %v386 = vmul.f32 %v354, %v354
        %v387 = vmul.f32 %v355, %v355
        %v388 = vmul.f32 %v356, %v356
        %v389 = vmul.f32 %v357, %v357
        %v390 = vmul.f32 %v358, %v358
        %v391 = vmul.f32 %v359, %v359
        %v392 = vmul.f32 %v360, %v360
        %v393 = vmul.f32 %v361, %v361
        %v394 = vmul.f32 %v362, %v362
        %v395 = vmul.f32 %v363, %v363
        %v396 = vmul.f32 %v364, %v364
        %v397 = vmul.f32 %v365, %v365
        %v398 = vsel %vm262, %v366, 0.0
        %v399 = vsel %vm262, %v367, 0.0
        %v400 = vadd.f32 %v398, %v399
        %v401 = vsel %vm262, %v368, 0.0
        %v402 = vadd.f32 %v400, %v401
        %v403 = vsel %vm262, %v369, 0.0
        %v404 = vadd.f32 %v402, %v403
        %v405 = vsel %vm262, %v370, 0.0
        %v406 = vadd.f32 %v404, %v405
        %v407 = vsel %vm262, %v371, 0.0
        %v408 = vadd.f32 %v406, %v407
        %v409 = vsel %vm262, %v372, 0.0
        %v410 = vadd.f32 %v408, %v409
        %v411 = vsel %vm262, %v373, 0.0
        %v412 = vadd.f32 %v410, %v411
        %v413 = vsel %vm262, %v374, 0.0
        %v414 = vadd.f32 %v412, %v413
        %v415 = vsel %vm262, %v375, 0.0
        %v416 = vadd.f32 %v414, %v415
        %v417 = vsel %vm262, %v376, 0.0
        %v418 = vadd.f32 %v416, %v417
        %v419 = vsel %vm262, %v377, 0.0
        %v420 = vadd.f32 %v418, %v419
        %v421 = vsel %vm262, %v378, 0.0
        %v422 = vadd.f32 %v420, %v421
        %v423 = vsel %vm262, %v379, 0.0
        %v424 = vadd.f32 %v422, %v423
        %v425 = vsel %vm262, %v380, 0.0
        %v426 = vadd.f32 %v424, %v425
        %v427 = vsel %vm262, %v381, 0.0
        %v428 = vadd.f32 %v426, %v427
        %v429 = vsel %vm262, %v382, 0.0
        %v430 = vadd.f32 %v428, %v429
        %v431 = vsel %vm262, %v383, 0.0
        %v432 = vadd.f32 %v430, %v431
        %v433 = vsel %vm262, %v384, 0.0
        %v434 = vadd.f32 %v432, %v433
        %v435 = vsel %vm262, %v385, 0.0
        %v436 = vadd.f32 %v434, %v435
        %v437 = vsel %vm262, %v386, 0.0
        %v438 = vadd.f32 %v436, %v437
        %v439 = vsel %vm262, %v387, 0.0
        %v440 = vadd.f32 %v438, %v439
        %v441 = vsel %vm262, %v388, 0.0
        %v442 = vadd.f32 %v440, %v441
        %v443 = vsel %vm262, %v389, 0.0
        %v444 = vadd.f32 %v442, %v443
        %v445 = vsel %vm262, %v390, 0.0
        %v446 = vadd.f32 %v444, %v445
        %v447 = vsel %vm262, %v391, 0.0
        %v448 = vadd.f32 %v446, %v447
        %v449 = vsel %vm262, %v392, 0.0
        %v450 = vadd.f32 %v448, %v449
        %v451 = vsel %vm262, %v393, 0.0
        %v452 = vadd.f32 %v450, %v451
        %v453 = vsel %vm262, %v394, 0.0
        %v454 = vadd.f32 %v452, %v453
        %v455 = vsel %vm262, %v395, 0.0
        %v456 = vadd.f32 %v454, %v455
        %v457 = vsel %vm262, %v396, 0.0
        %v458 = vadd.f32 %v456, %v457
        %v459 = vsel %vm262, %v397, 0.0
        %v460 = vadd.f32 %v458, %v459
        %v461 = vrot.slane %v460, 4
        %v462 = vadd.f32 %v460, %v461
        %v463 = vrot.slane %v462, 2
        %v464 = vadd.f32 %v462, %v463
        %v465 = vrot.slane %v464, 1
        %v466 = vadd.f32 %v464, %v465
        %v467 = vmul.f32 %v466, %v332
        %v468 = vadd.f32 %v467, 1e-05
        %v469 = vrsqrt.pop %v468
        %v470 = vmul.f32 %v334, %v469
        %v471 = vmul.f32 %v335, %v469
        %v472 = vmul.f32 %v336, %v469
        %v473 = vmul.f32 %v337, %v469
        %v474 = vmul.f32 %v338, %v469
        %v475 = vmul.f32 %v339, %v469
        %v476 = vmul.f32 %v340, %v469
        %v477 = vmul.f32 %v341, %v469
        %v478 = vmul.f32 %v342, %v469
        %v479 = vmul.f32 %v343, %v469
        %v480 = vmul.f32 %v344, %v469
        %v481 = vmul.f32 %v345, %v469
        %v482 = vmul.f32 %v346, %v469
        %v483 = vmul.f32 %v347, %v469
        %v484 = vmul.f32 %v348, %v469
        %v485 = vmul.f32 %v349, %v469
        %v486 = vmul.f32 %v350, %v469
        %v487 = vmul.f32 %v351, %v469
        %v488 = vmul.f32 %v352, %v469
        %v489 = vmul.f32 %v353, %v469
        %v490 = vmul.f32 %v354, %v469
        %v491 = vmul.f32 %v355, %v469
        %v492 = vmul.f32 %v356, %v469
        %v493 = vmul.f32 %v357, %v469
        %v494 = vmul.f32 %v358, %v469
        %v495 = vmul.f32 %v359, %v469
        %v496 = vmul.f32 %v360, %v469
        %v497 = vmul.f32 %v361, %v469
        %v498 = vmul.f32 %v362, %v469
        %v499 = vmul.f32 %v363, %v469
        %v500 = vmul.f32 %v364, %v469
        %v501 = vmul.f32 %v365, %v469
        %v502 = vld [vmem:[%s197] sm:$0xff]
        %v503 = vld [vmem:[%s197 + $0x8] sm:$0xff]
        %v504 = vld [vmem:[%s197 + $0x10] sm:$0xff]
        %v505 = vld [vmem:[%s197 + $0x18] sm:$0xff]
        %v506 = vld [vmem:[%s197 + $0x20] sm:$0xff]
        %v507 = vld [vmem:[%s197 + $0x28] sm:$0xff]
        %v508 = vld [vmem:[%s197 + $0x30] sm:$0xff]
        %v509 = vld [vmem:[%s197 + $0x38] sm:$0xff]
        %v510 = vld [vmem:[%s197 + $0x40] sm:$0xff]
        %v511 = vld [vmem:[%s197 + $0x48] sm:$0xff]
        %v512 = vld [vmem:[%s197 + $0x50] sm:$0xff]
        %v513 = vld [vmem:[%s197 + $0x58] sm:$0xff]
        %v514 = vld [vmem:[%s197 + $0x60] sm:$0xff]
        %v515 = vld [vmem:[%s197 + $0x68] sm:$0xff]
        %v516 = vld [vmem:[%s197 + $0x70] sm:$0xff]
        %v517 = vld [vmem:[%s197 + $0x78] sm:$0xff]
        %v518 = vld [vmem:[%s197 + $0x80] sm:$0xff]
        %v519 = vld [vmem:[%s197 + $0x88] sm:$0xff]
        %v520 = vld [vmem:[%s197 + $0x90] sm:$0xff]
        %v521 = vld [vmem:[%s197 + $0x98] sm:$0xff]
        %v522 = vld [vmem:[%s197 + $0xa0] sm:$0xff]
        %v523 = vld [vmem:[%s197 + $0xa8] sm:$0xff]
        %v524 = vld [vmem:[%s197 + $0xb0] sm:$0xff]
        %v525 = vld [vmem:[%s197 + $0xb8] sm:$0xff]
        %v526 = vld [vmem:[%s197 + $0xc0] sm:$0xff]
        %v527 = vld [vmem:[%s197 + $0xc8] sm:$0xff]
        %v528 = vld [vmem:[%s197 + $0xd0] sm:$0xff]
        %v529 = vld [vmem:[%s197 + $0xd8] sm:$0xff]
        %v530 = vld [vmem:[%s197 + $0xe0] sm:$0xff]
        %v531 = vld [vmem:[%s197 + $0xe8] sm:$0xff]
        %v532 = vld [vmem:[%s197 + $0xf0] sm:$0xff]
        %v533 = vld [vmem:[%s197 + $0xf8] sm:$0xff]
        %v534 = vadd.f32 %v502, %v470
        %v535 = vadd.f32 %v503, %v471
        %v536 = vadd.f32 %v504, %v472
        %v537 = vadd.f32 %v505, %v473
        %v538 = vadd.f32 %v506, %v474
        %v539 = vadd.f32 %v507, %v475
        %v540 = vadd.f32 %v508, %v476
        %v541 = vadd.f32 %v509, %v477
        %v542 = vadd.f32 %v510, %v478
        %v543 = vadd.f32 %v511, %v479
        %v544 = vadd.f32 %v512, %v480
        %v545 = vadd.f32 %v513, %v481
        %v546 = vadd.f32 %v514, %v482
        %v547 = vadd.f32 %v515, %v483
        %v548 = vadd.f32 %v516, %v484
        %v549 = vadd.f32 %v517, %v485
        %v550 = vadd.f32 %v518, %v486
        %v551 = vadd.f32 %v519, %v487
        %v552 = vadd.f32 %v520, %v488
        %v553 = vadd.f32 %v521, %v489
        %v554 = vadd.f32 %v522, %v490
        %v555 = vadd.f32 %v523, %v491
        %v556 = vadd.f32 %v524, %v492
        %v557 = vadd.f32 %v525, %v493
        %v558 = vadd.f32 %v526, %v494
        %v559 = vadd.f32 %v527, %v495
        %v560 = vadd.f32 %v528, %v496
        %v561 = vadd.f32 %v529, %v497
        %v562 = vadd.f32 %v530, %v498
        %v563 = vadd.f32 %v531, %v499
        %v564 = vadd.f32 %v532, %v500
        %v565 = vadd.f32 %v533, %v501
        %566 = vst.msk [vmem:[%s181] sm:$0xff] %vm262, %v534
        %567 = vst.msk [vmem:[%s181 + $0x8] sm:$0xff] %vm262, %v535
        %568 = vst.msk [vmem:[%s181 + $0x10] sm:$0xff] %vm262, %v536
        %569 = vst.msk [vmem:[%s181 + $0x18] sm:$0xff] %vm262, %v537
        %570 = vst.msk [vmem:[%s181 + $0x20] sm:$0xff] %vm262, %v538
        %571 = vst.msk [vmem:[%s181 + $0x28] sm:$0xff] %vm262, %v539
        %572 = vst.msk [vmem:[%s181 + $0x30] sm:$0xff] %vm262, %v540
        %573 = vst.msk [vmem:[%s181 + $0x38] sm:$0xff] %vm262, %v541
        %574 = vst.msk [vmem:[%s181 + $0x40] sm:$0xff] %vm262, %v542
        %575 = vst.msk [vmem:[%s181 + $0x48] sm:$0xff] %vm262, %v543
        %576 = vst.msk [vmem:[%s181 + $0x50] sm:$0xff] %vm262, %v544
        %577 = vst.msk [vmem:[%s181 + $0x58] sm:$0xff] %vm262, %v545
        %578 = vst.msk [vmem:[%s181 + $0x60] sm:$0xff] %vm262, %v546
        %579 = vst.msk [vmem:[%s181 + $0x68] sm:$0xff] %vm262, %v547
        %580 = vst.msk [vmem:[%s181 + $0x70] sm:$0xff] %vm262, %v548
        %581 = vst.msk [vmem:[%s181 + $0x78] sm:$0xff] %vm262, %v549
        %582 = vst.msk [vmem:[%s181 + $0x80] sm:$0xff] %vm262, %v550
        %583 = vst.msk [vmem:[%s181 + $0x88] sm:$0xff] %vm262, %v551
        %584 = vst.msk [vmem:[%s181 + $0x90] sm:$0xff] %vm262, %v552
        %585 = vst.msk [vmem:[%s181 + $0x98] sm:$0xff] %vm262, %v553
        %586 = vst.msk [vmem:[%s181 + $0xa0] sm:$0xff] %vm262, %v554
        %587 = vst.msk [vmem:[%s181 + $0xa8] sm:$0xff] %vm262, %v555
        %588 = vst.msk [vmem:[%s181 + $0xb0] sm:$0xff] %vm262, %v556
        %589 = vst.msk [vmem:[%s181 + $0xb8] sm:$0xff] %vm262, %v557
        %590 = vst.msk [vmem:[%s181 + $0xc0] sm:$0xff] %vm262, %v558
        %591 = vst.msk [vmem:[%s181 + $0xc8] sm:$0xff] %vm262, %v559
        %592 = vst.msk [vmem:[%s181 + $0xd0] sm:$0xff] %vm262, %v560
        %593 = vst.msk [vmem:[%s181 + $0xd8] sm:$0xff] %vm262, %v561
        %594 = vst.msk [vmem:[%s181 + $0xe0] sm:$0xff] %vm262, %v562
        %595 = vst.msk [vmem:[%s181 + $0xe8] sm:$0xff] %vm262, %v563
        %596 = vst.msk [vmem:[%s181 + $0xf0] sm:$0xff] %vm262, %v564
        %597 = vst.msk [vmem:[%s181 + $0xf8] sm:$0xff] %vm262, %v565
        %s598 = sand.u32 %s94, 1
        %s599 = scalar_lea.sflag [#allocation3], %s598
        %s600 = sand.u32 %s94, 1
        %s601 = smul.addr %s600, 256
        %s602 = scalar_lea.vmem [#allocation2], %s601
        // Predicated region
        $region29: #{residual_block_forward.7} parent=27 // pred_check
          %p603 = pneg %p104
        $region30: #{residual_block_forward.7} parent=27 // pred_check_branch
          %605 = sbr.rel (%p603) target = $region32
        $region31: #{residual_block_forward.7} parent=27 // pred_region
          %s607 = ssub.s32 4096, 4096
          %608 = vsyncadd %s599, %s607
          %s609 = smul.addr %s20, 32
          %s610 = sadd.s32 %s21, %s609
          %s611 = smul.addr %s610, 128
          %s612 = scalar_lea.hbm %s2, %s611
          %s613 = sshll.u32 %s602, 4
          %s614 = int_to_ptr.vmem [resolvable:$true] %s613
          %619 = dma.vmem_to_hbm [thread:$0]  %s614, 4096, %s612, %s599, 128, 128, 8
        $region32: #{residual_block_forward.7} parent=27 // pred_fallthru
          _
      $region28: #{residual_block_forward.7} parent=5 // pred_fallthru
        _
      %p620 = scmp.le.s32.totalorder 2, %s11
      // Predicated region
      $region33: #{residual_block_forward.7} parent=5 // pred_check
        %p621 = pneg %p620
      $region34: #{residual_block_forward.7} parent=5 // pred_check_branch
        %623 = sbr.rel (%p621) target = $region36
      $region35: #{residual_block_forward.7} parent=5 // pred_region
        %s624 = ssub.s32 %s11, 2
        // Predicated region
        $region37: #{residual_block_forward.7} parent=35 // pred_check
          %p625 = pneg %p110
        $region38: #{residual_block_forward.7} parent=35 // pred_check_branch
          %627 = sbr.rel (%p625) target = $region40
        $region39: #{residual_block_forward.7} parent=35 // pred_region
          %s628 = sand.u32 %s95, 1
          %s629 = scalar_lea.sflag [#allocation3], %s628
          %s630 = sand.u32 %s95, 1
          %s631 = smul.addr %s630, 256
          %s632 = scalar_lea.vmem [#allocation2], %s631
          %633 = dma.done %s629, 4096
        $region40: #{residual_block_forward.7} parent=35 // pred_fallthru
          _
      $region36: #{residual_block_forward.7} parent=5 // pred_fallthru
        _
    $region6: #{residual_block_forward.7} parent=1 // loop_footer
      %s15 = sadd.s32 1, %s11
    $region7: #{residual_block_forward.7} parent=1 // loop_footer_branch
      %10 = sbr.rel target = $region3
    $region8: #{residual_block_forward.7} parent=1 // loop_exit
      _
    %634 = vsyncpa [#allocation3], 1
    %s635 = scalar_lea.sflag [#allocation3], 1
    %636 = vsyncpa %s635, 1

// kernel: residual_block_forward.4
$region0: #{residual_block_forward.4}
  #allocation0 [shape = 'u32[]', space=smem, size = 0x4, offset = 0x4, fixed_abs, tag = 'smem constant byte address 0x4 - core index']
  #allocation1 [shape = 'u32[144,128]{1,0:T(1,128)}', space=vmem, size = 0x12000, scoped, tag = 'internal scratch']
  %s0 = inlined_call_operand.vmem [shape: bf16[2,324,32], index: 0, kind: input, shape index: {}]
  %s1 = inlined_call_operand.vmem [shape: bf16[9,32,128], index: 1, kind: input, shape index: {}]
  %s2 = inlined_call_operand.vmem [shape: f32[1,128], index: 2, kind: input, shape index: {}]
  %s3 = inlined_call_operand.vmem [shape: bf16[2,286,128], index: 3, kind: output, shape index: {}]
  %s4 = sld [smem:[#allocation0]]
  $region45: #{residual_block_forward.4} parent=0
    _
  %s6 = ssub.s32 1, %s4
  %s7 = scalar_select 0, %s6, %s4
  loop: start=0, step=1, limit=4
  $region2: #{residual_block_forward.4} parent=0 // loop_pre_header
    _
  $region3: #{residual_block_forward.4} parent=0 // loop_header
    %s9 = sphi 0, %s13
    %p10 = scmp.ge.s32.totalorder %s9, 4
    %s16 = sphi 0, %s28
    %s17 = sphi 0, %s24
    %s18 = sphi 0, %s16
    %s19 = sphi 0, %s17
    %s20 = sphi 0, %s18
    %s21 = sphi 0, %s19
    %s31 = sphi 0, %s33
    %s34 = sphi 0, %s31
    %s35 = sphi 0, %s34
    %s51 = sphi 0, %s35
    %s57 = sphi 0, %s59
    %s60 = sphi 0, %s57
    %s61 = sphi 0, %s60
    %s77 = sphi 0, %s61
    %s83 = sphi 0, %s85
    %s86 = sphi 0, %s83
    %s87 = sphi 0, %s86
    %s103 = sphi 0, %s87
    %s111 = sphi 0, %s113
    %s114 = sphi 0, %s111
    %s115 = sphi 0, %s114
    %s131 = sphi 0, %s115
  $region4: #{residual_block_forward.4} parent=0 // loop_header_branch
    %12 = sbr.rel (%p10) target = $region8
  $region5: #{residual_block_forward.4} parent=0 // loop_body
    %s14 = ssub.s32 %s9, 1
    %s15 = ssub.s32 %s9, 2
    %s22 = sadd.s32 1, %s17
    %p23 = scmp.ge.s32.totalorder %s22, 1
    %s24 = scalar_select %p23, 0, %s22
    %s25 = sadd.s32 1, %s16
    %s26 = scalar_select %p23, %s25, %s16
    %p27 = scmp.ge.s32.totalorder %s26, 2
    %s28 = scalar_select %p27, 0, %s26
    %s29 = ssub.s32 %s16, %s28
    %p30 = scmp.eq.s32.totalorder %s29, 0
    %s32 = sadd.s32 %s31, 1
    %s33 = scalar_select %p30, %s31, %s32
    %p36 = pneg %p30
    %p37 = scmp.eq.s32.totalorder %s9, 1
    %p38 = por %p36, %p37
    %p39 = scmp.ne.s32.totalorder %s31, %s34
    %p40 = scmp.eq.s32.totalorder %s9, 0
    %p41 = por %p39, %p40
    %p42 = scmp.ne.s32.totalorder %s31, %s34
    %p43 = scmp.eq.s32.totalorder %s14, 1
    %p44 = por %p42, %p43
    %p45 = scmp.ne.s32.totalorder %s34, %s35
    %p46 = scmp.eq.s32.totalorder %s14, 0
    %p47 = por %p45, %p46
    %p48 = scmp.ne.s32.totalorder %s34, %s35
    %p49 = scmp.eq.s32.totalorder %s15, 1
    %p50 = por %p48, %p49
    %p52 = scmp.ne.s32.totalorder %s35, %s51
    %p53 = scmp.eq.s32.totalorder %s15, 0
    %p54 = por %p52, %p53
    %s55 = ssub.s32 %s17, %s24
    %p56 = scmp.eq.s32.totalorder %s55, 0
    %s58 = sadd.s32 %s57, 1
    %s59 = scalar_select %p56, %s57, %s58
    %p62 = pneg %p56
    %p63 = scmp.eq.s32.totalorder %s9, 1
    %p64 = por %p62, %p63
    %p65 = scmp.ne.s32.totalorder %s57, %s60
    %p66 = scmp.eq.s32.totalorder %s9, 0
    %p67 = por %p65, %p66
    %p68 = scmp.ne.s32.totalorder %s57, %s60
    %p69 = scmp.eq.s32.totalorder %s14, 1
    %p70 = por %p68, %p69
    %p71 = scmp.ne.s32.totalorder %s60, %s61
    %p72 = scmp.eq.s32.totalorder %s14, 0
    %p73 = por %p71, %p72
    %p74 = scmp.ne.s32.totalorder %s60, %s61
    %p75 = scmp.eq.s32.totalorder %s15, 1
    %p76 = por %p74, %p75
    %p78 = scmp.ne.s32.totalorder %s61, %s77
    %p79 = scmp.eq.s32.totalorder %s15, 0
    %p80 = por %p78, %p79
    %s81 = ssub.s32 %s17, %s24
    %p82 = scmp.eq.s32.totalorder %s81, 0
    %s84 = sadd.s32 %s83, 1
    %s85 = scalar_select %p82, %s83, %s84
    %p88 = pneg %p82
    %p89 = scmp.eq.s32.totalorder %s9, 1
    %p90 = por %p88, %p89
    %p91 = scmp.ne.s32.totalorder %s83, %s86
    %p92 = scmp.eq.s32.totalorder %s9, 0
    %p93 = por %p91, %p92
    %p94 = scmp.ne.s32.totalorder %s83, %s86
    %p95 = scmp.eq.s32.totalorder %s14, 1
    %p96 = por %p94, %p95
    %p97 = scmp.ne.s32.totalorder %s86, %s87
    %p98 = scmp.eq.s32.totalorder %s14, 0
    %p99 = por %p97, %p98
    %p100 = scmp.ne.s32.totalorder %s86, %s87
    %p101 = scmp.eq.s32.totalorder %s15, 1
    %p102 = por %p100, %p101
    %p104 = scmp.ne.s32.totalorder %s87, %s103
    %p105 = scmp.eq.s32.totalorder %s15, 0
    %p106 = por %p104, %p105
    %s107 = ssub.s32 %s16, %s28
    %s108 = ssub.s32 %s17, %s24
    %s109 = sor.u32 %s107, %s108
    %p110 = scmp.eq.s32.totalorder %s109, 0
    %s112 = sadd.s32 %s111, 1
    %s113 = scalar_select %p110, %s111, %s112
    %p116 = pneg %p110
    %p117 = scmp.eq.s32.totalorder %s9, 1
    %p118 = por %p116, %p117
    %p119 = scmp.ne.s32.totalorder %s111, %s114
    %p120 = scmp.eq.s32.totalorder %s9, 0
    %p121 = por %p119, %p120
    %p122 = scmp.ne.s32.totalorder %s111, %s114
    %p123 = scmp.eq.s32.totalorder %s14, 1
    %p124 = por %p122, %p123
    %p125 = scmp.ne.s32.totalorder %s114, %s115
    %p126 = scmp.eq.s32.totalorder %s14, 0
    %p127 = por %p125, %p126
    %p128 = scmp.ne.s32.totalorder %s114, %s115
    %p129 = scmp.eq.s32.totalorder %s15, 1
    %p130 = por %p128, %p129
    %p132 = scmp.ne.s32.totalorder %s115, %s131
    %p133 = scmp.eq.s32.totalorder %s15, 0
    %p134 = por %p132, %p133
    %p135 = scmp.le.s32.totalorder 1, %s9
    %p136 = scmp.lt.s32.totalorder %s9, 3
    %p137 = pnand %p135, %p136
    %p138 = pneg %p137
    // Predicated region
    $region9: #{residual_block_forward.4} parent=5 // pred_check
      _
    $region10: #{residual_block_forward.4} parent=5 // pred_check_branch
      %140 = sbr.rel (%p137) target = $region12
    $region11: #{residual_block_forward.4} parent=5 // pred_region
      %s141 = ssub.s32 %s9, 1
      // Predicated region
      $region13: #{residual_block_forward.4} parent=11 // pred_check
        %p142 = pneg %p73
      $region14: #{residual_block_forward.4} parent=11 // pred_check_branch
        %144 = sbr.rel (%p142) target = $region16
      $region15: #{residual_block_forward.4} parent=11 // pred_region
        %p145 = scmp.lt.s32.totalorder %s19, 0
        %s146 = scalar_select %p145, %s19, 0
        %s147 = smul.addr %s146, 4
        %s148 = scalar_lea.vmem %s1, %s147
      $region16: #{residual_block_forward.4} parent=11 // pred_fallthru
        _
      // Predicated region
      $region17: #{residual_block_forward.4} parent=11 // pred_check
        %p149 = pneg %p99
      $region18: #{residual_block_forward.4} parent=11 // pred_check_branch
        %151 = sbr.rel (%p149) target = $region20
      $region19: #{residual_block_forward.4} parent=11 // pred_region
        %p152 = scmp.lt.s32.totalorder %s19, 0
        %s153 = scalar_select %p152, %s19, 0
        %s154 = scalar_lea.vmem %s2, %s153
      $region20: #{residual_block_forward.4} parent=11 // pred_fallthru
        _
    $region12: #{residual_block_forward.4} parent=5 // pred_fallthru
      _
    %p155 = scmp.lt.s32.totalorder %s9, 2
    // Predicated region
    $region21: #{residual_block_forward.4} parent=5 // pred_check
      %p156 = pneg %p155
    $region22: #{residual_block_forward.4} parent=5 // pred_check_branch
      %158 = sbr.rel (%p156) target = $region24
    $region23: #{residual_block_forward.4} parent=5 // pred_region
      // Predicated region
      $region25: #{residual_block_forward.4} parent=23 // pred_check
        %p159 = pneg %p41
      $region26: #{residual_block_forward.4} parent=23 // pred_check_branch
        %161 = sbr.rel (%p159) target = $region28
      $region27: #{residual_block_forward.4} parent=23 // pred_region
        %p162 = scmp.lt.s32.totalorder %s16, 1
        %s163 = scalar_select %p162, %s16, 1
        %s164 = smul.addr %s163, 41
        %s165 = smul.addr %s164, 4
        %s166 = scalar_lea.vmem %s0, %s165
      $region28: #{residual_block_forward.4} parent=23 // pred_fallthru
        _
    $region24: #{residual_block_forward.4} parent=5 // pred_fallthru
      _
    %p167 = scmp.le.s32.totalorder 1, %s9
    %p168 = scmp.lt.s32.totalorder %s9, 3
    %p169 = pnand %p167, %p168
    %p170 = pneg %p169
    // Predicated region
    $region29: #{residual_block_forward.4} parent=5 // pred_check
      _
    $region30: #{residual_block_forward.4} parent=5 // pred_check_branch
      %172 = sbr.rel (%p169) target = $region32
    $region31: #{residual_block_forward.4} parent=5 // pred_region
      %s173 = ssub.s32 %s9, 1
      %p174 = scmp.lt.s32.totalorder %s18, 1
      %s175 = scalar_select %p174, %s18, 1
      %s176 = smul.addr %s175, 41
      %s177 = smul.addr %s176, 4
      %s178 = scalar_lea.vmem %s0, %s177
      %p179 = pneg %p47
      %p180 = pneg %p44
      %p181 = scmp.lt.s32.totalorder %s19, 0
      %s182 = scalar_select %p181, %s19, 0
      %s183 = smul.addr %s182, 4
      %s184 = scalar_lea.vmem %s1, %s183
      %p185 = pneg %p73
      %p186 = pneg %p70
      %p187 = scmp.lt.s32.totalorder %s19, 0
      %s188 = scalar_select %p187, %s19, 0
      %s189 = scalar_lea.vmem %s2, %s188
      %p190 = pneg %p99
      %p191 = pneg %p96
      %p192 = pneg %p127
      %p193 = pneg %p124
      %p194 = scmp.lt.s32.totalorder %s18, 1
      %s195 = scalar_select %p194, %s18, 1
      %p196 = scmp.lt.s32.totalorder %s19, 0
      %s197 = scalar_select %p196, %s19, 0
      %s198 = smul.addr %s195, 36
      %s199 = sadd.s32 %s197, %s198
      %s200 = smul.addr %s199, 4
      %s201 = scalar_lea.vmem %s3, %s200
      %p202 = scmp.lt.s32.totalorder %s18, 1
      %s203 = scalar_select %p202, %s18, 1
      %s204 = smul.addr %s203, 41
      %s205 = smul.addr %s204, 4
      %s206 = scalar_lea.vmem %s0, %s205
      %p207 = scmp.lt.s32.totalorder %s19, 0
      %s208 = scalar_select %p207, %s19, 0
      %s209 = smul.addr %s208, 4
      %s210 = scalar_lea.vmem %s1, %s209
      %p211 = scmp.lt.s32.totalorder %s19, 0
      %s212 = scalar_select %p211, %s19, 0
      %s213 = scalar_lea.vmem %s2, %s212
      %p214 = scmp.lt.s32.totalorder %s18, 1
      %s215 = scalar_select %p214, %s18, 1
      %p216 = scmp.lt.s32.totalorder %s19, 0
      %s217 = scalar_select %p216, %s19, 0
      %s218 = smul.addr %s215, 36
      %s219 = sadd.s32 %s217, %s218
      %s220 = smul.addr %s219, 4
      %s221 = scalar_lea.vmem %s3, %s220
      %v223 = vld [vmem:[%s206] sm:$0xf]
      %v224 = vld [vmem:[%s206 + $0x4] sm:$0xf]
      %v225 = vld [vmem:[%s206 + $0x8] sm:$0xf]
      %v226 = vld [vmem:[%s206 + $0xc] sm:$0xf]
      %v227 = vld [vmem:[%s206 + $0x10] sm:$0xf]
      %v228 = vld [vmem:[%s206 + $0x14] sm:$0xf]
      %v229 = vld [vmem:[%s206 + $0x18] sm:$0xf]
      %v230 = vld [vmem:[%s206 + $0x1c] sm:$0xf]
      %v231 = vld [vmem:[%s206 + $0x20] sm:$0xf]
      %v232 = vld [vmem:[%s206 + $0x24] sm:$0xf]
      %v233 = vld [vmem:[%s206 + $0x28] sm:$0xf]
      %v234 = vld [vmem:[%s206 + $0x2c] sm:$0xf]
      %v235 = vld [vmem:[%s206 + $0x30] sm:$0xf]
      %v236 = vld [vmem:[%s206 + $0x34] sm:$0xf]
      %v237 = vld [vmem:[%s206 + $0x38] sm:$0xf]
      %v238 = vld [vmem:[%s206 + $0x3c] sm:$0xf]
      %v239 = vld [vmem:[%s206 + $0x40] sm:$0xf]
      %v240 = vld [vmem:[%s206 + $0x44] sm:$0xf]
      %v241 = vld [vmem:[%s206 + $0x48] sm:$0xf]
      %v242 = vld [vmem:[%s206 + $0x4c] sm:$0xf]
      %v243 = vld [vmem:[%s206 + $0x50] sm:$0xf]
      %v244 = vld [vmem:[%s206 + $0x54] sm:$0xf]
      %v245 = vld [vmem:[%s206 + $0x58] sm:$0xf]
      %v246 = vld [vmem:[%s206 + $0x5c] sm:$0xf]
      %v247 = vld [vmem:[%s206 + $0x60] sm:$0xf]
      %v248 = vld [vmem:[%s206 + $0x64] sm:$0xf]
      %v249 = vld [vmem:[%s206 + $0x68] sm:$0xf]
      %v250 = vld [vmem:[%s206 + $0x6c] sm:$0xf]
      %v251 = vld [vmem:[%s206 + $0x70] sm:$0xf]
      %v252 = vld [vmem:[%s206 + $0x74] sm:$0xf]
      %v253 = vld [vmem:[%s206 + $0x78] sm:$0xf]
      %v254 = vld [vmem:[%s206 + $0x7c] sm:$0xf]
      %v255 = vld [vmem:[%s206 + $0x80] sm:$0xf]
      %v256 = vld [vmem:[%s206 + $0x84] sm:$0xf]
      %v257 = vld [vmem:[%s206 + $0x88] sm:$0xf]
      %v258 = vld [vmem:[%s206 + $0x8c] sm:$0x7]
      %v259 = vld [vmem:[%s210] sm:$0xf]
      %v260 = vld [vmem:[%s210 + $0x4] sm:$0xf]
      %v261 = vld [vmem:[%s210 + $0x8] sm:$0xf]
      %v262 = vld [vmem:[%s210 + $0xc] sm:$0xf]
      %v263 = vld [vmem:[%s206 + $0x8c] sm:$0xf]
      %s264 = scalar_lea.vmem %s210, 16
      %v265 = vld [vmem:[%s264] sm:$0xf]
      %v266 = vld [vmem:[%s264 + $0x4] sm:$0xf]
      %v267 = vld [vmem:[%s264 + $0x8] sm:$0xf]
      %v268 = vld [vmem:[%s264 + $0xc] sm:$0xf]
      %v305 = vunpack.c.l.b16 %v223
      %v306 = vunpack.c.l.b16 %v224
      %v307 = vunpack.c.l.b16 %v225
      %v308 = vunpack.c.l.b16 %v226
      %v309 = vunpack.c.l.b16 %v227
      %v310 = vunpack.c.l.b16 %v228
      %v311 = vunpack.c.l.b16 %v229
      %v312 = vunpack.c.l.b16 %v230
      %v313 = vunpack.c.l.b16 %v231
      %v314 = vunpack.c.l.b16 %v232
      %v315 = vunpack.c.l.b16 %v233
      %v316 = vunpack.c.l.b16 %v234
      %v317 = vunpack.c.l.b16 %v235
      %v318 = vunpack.c.l.b16 %v236
      %v319 = vunpack.c.l.b16 %v237
      %v320 = vunpack.c.l.b16 %v238
      %v321 = vunpack.c.l.b16 %v239
      %v322 = vunpack.c.l.b16 %v240
      %v323 = vunpack.c.l.b16 %v241
      %v324 = vunpack.c.l.b16 %v242
      %v325 = vunpack.c.l.b16 %v243
      %v326 = vunpack.c.l.b16 %v244
      %v327 = vunpack.c.l.b16 %v245
      %v328 = vunpack.c.l.b16 %v246
      %v329 = vunpack.c.l.b16 %v247
      %v330 = vunpack.c.l.b16 %v248
      %v331 = vunpack.c.l.b16 %v249
      %v332 = vunpack.c.l.b16 %v250
      %v333 = vunpack.c.l.b16 %v251
      %v334 = vunpack.c.l.b16 %v252
      %v335 = vunpack.c.l.b16 %v253
      %v336 = vunpack.c.l.b16 %v254
      %v337 = vunpack.c.l.b16 %v255
      %v338 = vunpack.c.l.b16 %v256
      %v339 = vunpack.c.l.b16 %v257
      %v340 = vunpack.c.l.b16 %v263
      %v341 = vpack.c.b16 %v306, %v305
      %v342 = vpack.c.b16 %v308, %v307
      %v343 = vpack.c.b16 %v310, %v309
      %v344 = vpack.c.b16 %v312, %v311
      %v345 = vpack.c.b16 %v314, %v313
      %v346 = vpack.c.b16 %v316, %v315
      %v347 = vpack.c.b16 %v318, %v317
      %v348 = vpack.c.b16 %v320, %v319
      %v349 = vpack.c.b16 %v322, %v321
      %v350 = vpack.c.b16 %v324, %v323
      %v351 = vpack.c.b16 %v326, %v325
      %v352 = vpack.c.b16 %v328, %v327
      %v353 = vpack.c.b16 %v330, %v329
      %v354 = vpack.c.b16 %v332, %v331
      %v355 = vpack.c.b16 %v334, %v333
      %v356 = vpack.c.b16 %v336, %v335
      %v357 = vpack.c.b16 %v338, %v337
      %v358 = vpack.c.b16 %v340, %v339
      %vm359 = vsmask.f32 7424
      %v361 = vshrl.u32 %v341, 16
      %v363 = vshll.u32 %v341, 16
      %v365 = vrot.slane %v363, 1
      %v366 = vor.u32 %v361, %v365
      %v368 = vshll.u32 %v342, 16
      %v370 = vrot.slane %v368, 1
      %v371 = vsel %vm359, %v366, %v370
      %v372 = vshrl.u32 %v342, 16
      %v374 = vor.u32 %v372, %v370
      %v376 = vshll.u32 %v343, 16
      %v378 = vrot.slane %v376, 1
      %v379 = vsel %vm359, %v374, %v378
      %v380 = vshrl.u32 %v343, 16
      %v382 = vor.u32 %v380, %v378
      %v384 = vshll.u32 %v344, 16
      %v386 = vrot.slane %v384, 1
      %v387 = vsel %vm359, %v382, %v386
      %v388 = vshrl.u32 %v344, 16
      %v390 = vor.u32 %v388, %v386
      %v392 = vshll.u32 %v345, 16
      %v394 = vrot.slane %v392, 1
      %v395 = vsel %vm359, %v390, %v394
      %v396 = vshrl.u32 %v345, 16
      %v398 = vor.u32 %v396, %v394
      %v400 = vshll.u32 %v346, 16
      %v402 = vrot.slane %v400, 1
      %v403 = vsel %vm359, %v398, %v402
      %v404 = vshrl.u32 %v346, 16
      %v406 = vor.u32 %v404, %v402
      %v408 = vshll.u32 %v347, 16
      %v410 = vrot.slane %v408, 1
      %v411 = vsel %vm359, %v406, %v410
      %v412 = vshrl.u32 %v347, 16
      %v414 = vor.u32 %v412, %v410
      %v416 = vshll.u32 %v348, 16
      %v418 = vrot.slane %v416, 1
      %v419 = vsel %vm359, %v414, %v418
      %v420 = vshrl.u32 %v348, 16
      %v422 = vor.u32 %v420, %v418
      %v424 = vshll.u32 %v349, 16
      %v426 = vrot.slane %v424, 1
      %v427 = vsel %vm359, %v422, %v426
      %v428 = vshrl.u32 %v349, 16
      %v430 = vor.u32 %v428, %v426
      %v432 = vshll.u32 %v350, 16
      %v434 = vrot.slane %v432, 1
      %v435 = vsel %vm359, %v430, %v434
      %v436 = vshrl.u32 %v350, 16
      %v438 = vor.u32 %v436, %v434
      %v440 = vshll.u32 %v351, 16
      %v442 = vrot.slane %v440, 1
      %v443 = vsel %vm359, %v438, %v442
      %v444 = vshrl.u32 %v351, 16
      %v446 = vor.u32 %v444, %v442
      %v448 = vshll.u32 %v352, 16
      %v450 = vrot.slane %v448, 1
      %v451 = vsel %vm359, %v446, %v450
      %v452 = vshrl.u32 %v352, 16
      %v454 = vor.u32 %v452, %v450
      %v456 = vshll.u32 %v353, 16
      %v458 = vrot.slane %v456, 1
      %v459 = vsel %vm359, %v454, %v458
      %v460 = vshrl.u32 %v353, 16
      %v462 = vor.u32 %v460, %v458
      %v464 = vshll.u32 %v354, 16
      %v466 = vrot.slane %v464, 1
      %v467 = vsel %vm359, %v462, %v466
      %v468 = vshrl.u32 %v354, 16
      %v470 = vor.u32 %v468, %v466
      %v472 = vshll.u32 %v355, 16
      %v474 = vrot.slane %v472, 1
      %v475 = vsel %vm359, %v470, %v474
      %v476 = vshrl.u32 %v355, 16
      %v478 = vor.u32 %v476, %v474
      %v480 = vshll.u32 %v356, 16
      %v482 = vrot.slane %v480, 1
      %v483 = vsel %vm359, %v478, %v482
      %v484 = vshrl.u32 %v356, 16
      %v486 = vor.u32 %v484, %v482
      %v488 = vshll.u32 %v357, 16
      %v490 = vrot.slane %v488, 1
      %v491 = vsel %vm359, %v486, %v490
      %v492 = vshrl.u32 %v357, 16
      %v494 = vor.u32 %v492, %v490
      %v496 = vshll.u32 %v358, 16
      %v498 = vrot.slane %v496, 1
      %v499 = vsel %vm359, %v494, %v498
      %v500 = vshrl.u32 %v358, 16
      %v502 = vor.u32 %v500, %v498
      %v507 = vunpack.c.l.b16 %v265
      %v508 = vunpack.c.l.b16 %v266
      %v509 = vunpack.c.l.b16 %v267
      %v510 = vunpack.c.l.b16 %v268
      %v511 = vpack.c.b16 %v508, %v507
      %v512 = vpack.c.b16 %v510, %v509
      %vm515 = vcmask 261120
      %v517 = vsel %vm515, %v371, 0
      %v520 = vsel %vm515, %v379, 0
      %v523 = vsel %vm515, %v387, 0
      %v526 = vsel %vm515, %v395, 0
      %v529 = vsel %vm515, %v403, 0
      %v532 = vsel %vm515, %v411, 0
      %v535 = vsel %vm515, %v419, 0
      %v538 = vsel %vm515, %v427, 0
      %v541 = vsel %vm515, %v435, 0
      %v544 = vsel %vm515, %v443, 0
      %v547 = vsel %vm515, %v451, 0
      %v550 = vsel %vm515, %v459, 0
      %v553 = vsel %vm515, %v467, 0
      %v556 = vsel %vm515, %v475, 0
      %v559 = vsel %vm515, %v483, 0
      %v562 = vsel %vm515, %v491, 0
      %v565 = vsel %vm515, %v499, 0
      %v568 = vsel %vm515, %v502, 0
      %570 = vmatprep.subr.bf16.mxu0 0
      %571 = vmatpush1.bf16.msra.mxu0 0
      %572 = vmatprep.subr.bf16.mxu0 0
      %573 = vmatpush1.bf16.msra.mxu0 0
      %574 = vmatprep.subr.bf16.mxu0 0
      %575 = vmatpush1.bf16.msra.mxu0 0
      %576 = vmatprep.subr.bf16.mxu0 0
      %577 = vmatpush1.bf16.msra.mxu0 0
      %578 = vmatprep.subr.bf16.mxu0 0
      %579 = vmatpush1.bf16.msra.mxu0 0
      %580 = vmatprep.subr.bf16.mxu0 0
      %581 = vmatpush1.bf16.msra.mxu0 0
      %582 = vmatprep.subr.bf16.mxu0 0
      %583 = vmatpush1.bf16.msra.mxu0 %v512
      %584 = vmatprep.subr.bf16.mxu0 0
      %585 = vmatpush1.bf16.msra.mxu0 %v511
      %586 = vmatprep.subr.bf16.mxu0 0
      %587 = vmatpush2.bf16.msra.mxu0 0
      %588 = vmatprep.subr.bf16.mxu0 0
      %589 = vmatpush2.bf16.msra.mxu0 0
      %590 = vmatprep.subr.bf16.mxu0 0
      %591 = vmatpush2.bf16.msra.mxu0 0
      %592 = vmatprep.subr.bf16.mxu0 0
      %593 = vmatpush2.bf16.msra.mxu0 0
      %594 = vmatprep.subr.bf16.mxu0 0
      %595 = vmatpush2.bf16.msra.mxu0 0
      %596 = vmatprep.subr.bf16.mxu0 0
      %597 = vmatpush2.bf16.msra.mxu0 0
      %598 = vmatprep.subr.bf16.mxu0 0
      %599 = vmatpush2.bf16.msra.mxu0 0
      %600 = vmatprep.subr.bf16.mxu0 0
      %601 = vmatpush2.bf16.msra.mxu0 0
      %602 = vmatprep.mubr.bf16.mxu0 0
      %603 = vmatmul.mubr.bf16.gmra.mxu0 %v517
      %v604 = vpop.f32.mrf.mxu0
      %v605 = vadd.f32 0.0, %v604
      %v606 = vpop.f32.mrf.mxu0
      %v607 = vpop.f32.mrf.mxu0
      %v608 = vadd.f32 0.0, %v607
      %v609 = vpop.f32.mrf.mxu0
      %610 = vmatprep.mubr.bf16.mxu0 0
      %611 = vmatmul.mubr.bf16.gmra.mxu0 %v520
      %v612 = vpop.f32.mrf.mxu0
      %v613 = vadd.f32 0.0, %v612
      %v614 = vpop.f32.mrf.mxu0
      %v615 = vpop.f32.mrf.mxu0
      %v616 = vadd.f32 0.0, %v615
      %v617 = vpop.f32.mrf.mxu0
      %618 = vmatprep.mubr.bf16.mxu0 0
      %619 = vmatmul.mubr.bf16.gmra.mxu0 %v523
      %v620 = vpop.f32.mrf.mxu0
      %v621 = vadd.f32 0.0, %v620
      %v622 = vpop.f32.mrf.mxu0
      %v623 = vpop.f32.mrf.mxu0
      %v624 = vadd.f32 0.0, %v623
      %v625 = vpop.f32.mrf.mxu0
      %626 = vmatprep.mubr.bf16.mxu0 0
      %627 = vmatmul.mubr.bf16.gmra.mxu0 %v526
      %v628 = vpop.f32.mrf.mxu0
      %v629 = vadd.f32 0.0, %v628
      %v630 = vpop.f32.mrf.mxu0
      %v631 = vpop.f32.mrf.mxu0
      %v632 = vadd.f32 0.0, %v631
      %v633 = vpop.f32.mrf.mxu0
      %634 = vmatprep.mubr.bf16.mxu0 0
      %635 = vmatmul.mubr.bf16.gmra.mxu0 %v529
      %v636 = vpop.f32.mrf.mxu0
      %v637 = vadd.f32 0.0, %v636
      %v638 = vpop.f32.mrf.mxu0
      %v639 = vpop.f32.mrf.mxu0
      %v640 = vadd.f32 0.0, %v639
      %v641 = vpop.f32.mrf.mxu0
      %642 = vmatprep.mubr.bf16.mxu0 0
      %643 = vmatmul.mubr.bf16.gmra.mxu0 %v532
      %v644 = vpop.f32.mrf.mxu0
      %v645 = vadd.f32 0.0, %v644
      %v646 = vpop.f32.mrf.mxu0
      %v647 = vpop.f32.mrf.mxu0
      %v648 = vadd.f32 0.0, %v647
      %v649 = vpop.f32.mrf.mxu0
      %650 = vmatprep.mubr.bf16.mxu0 0
      %651 = vmatmul.mubr.bf16.gmra.mxu0 %v535
      %v652 = vpop.f32.mrf.mxu0
      %v653 = vadd.f32 0.0, %v652
      %v654 = vpop.f32.mrf.mxu0
      %v655 = vpop.f32.mrf.mxu0
      %v656 = vadd.f32 0.0, %v655
      %v657 = vpop.f32.mrf.mxu0
      %658 = vmatprep.mubr.bf16.mxu0 0
      %659 = vmatmul.mubr.bf16.gmra.mxu0 %v538
      %v660 = vpop.f32.mrf.mxu0
      %v661 = vadd.f32 0.0, %v660
      %v662 = vpop.f32.mrf.mxu0
      %v663 = vpop.f32.mrf.mxu0
      %v664 = vadd.f32 0.0, %v663
      %v665 = vpop.f32.mrf.mxu0
      %666 = vmatprep.mubr.bf16.mxu0 0
      %667 = vmatmul.mubr.bf16.gmra.mxu0 %v541
      %v668 = vpop.f32.mrf.mxu0
      %v669 = vadd.f32 0.0, %v668
      %v670 = vpop.f32.mrf.mxu0
      %v671 = vpop.f32.mrf.mxu0
      %v672 = vadd.f32 0.0, %v671
      %v673 = vpop.f32.mrf.mxu0
      %674 = vmatprep.mubr.bf16.mxu0 0
      %675 = vmatmul.mubr.bf16.gmra.mxu0 %v544
      %v676 = vpop.f32.mrf.mxu0
      %v677 = vadd.f32 0.0, %v676
      %v678 = vpop.f32.mrf.mxu0
      %v679 = vpop.f32.mrf.mxu0
      %v680 = vadd.f32 0.0, %v679
      %v681 = vpop.f32.mrf.mxu0
      %682 = vmatprep.mubr.bf16.mxu0 0
      %683 = vmatmul.mubr.bf16.gmra.mxu0 %v547
      %v684 = vpop.f32.mrf.mxu0
      %v685 = vadd.f32 0.0, %v684
      %v686 = vpop.f32.mrf.mxu0
      %v687 = vpop.f32.mrf.mxu0
      %v688 = vadd.f32 0.0, %v687
      %v689 = vpop.f32.mrf.mxu0
      %690 = vmatprep.mubr.bf16.mxu0 0
      %691 = vmatmul.mubr.bf16.gmra.mxu0 %v550
      %v692 = vpop.f32.mrf.mxu0
      %v693 = vadd.f32 0.0, %v692
      %v694 = vpop.f32.mrf.mxu0
      %v695 = vpop.f32.mrf.mxu0
      %v696 = vadd.f32 0.0, %v695
      %v697 = vpop.f32.mrf.mxu0
      %698 = vmatprep.mubr.bf16.mxu0 0
      %699 = vmatmul.mubr.bf16.gmra.mxu0 %v553
      %v700 = vpop.f32.mrf.mxu0
      %v701 = vadd.f32 0.0, %v700
      %v702 = vpop.f32.mrf.mxu0
      %v703 = vpop.f32.mrf.mxu0
      %v704 = vadd.f32 0.0, %v703
      %v705 = vpop.f32.mrf.mxu0
      %706 = vmatprep.mubr.bf16.mxu0 0
      %707 = vmatmul.mubr.bf16.gmra.mxu0 %v556
      %v708 = vpop.f32.mrf.mxu0
      %v709 = vadd.f32 0.0, %v708
      %v710 = vpop.f32.mrf.mxu0
      %v711 = vpop.f32.mrf.mxu0
      %v712 = vadd.f32 0.0, %v711
      %v713 = vpop.f32.mrf.mxu0
      %714 = vmatprep.mubr.bf16.mxu0 0
      %715 = vmatmul.mubr.bf16.gmra.mxu0 %v559
      %v716 = vpop.f32.mrf.mxu0
      %v717 = vadd.f32 0.0, %v716
      %v718 = vpop.f32.mrf.mxu0
      %v719 = vpop.f32.mrf.mxu0
      %v720 = vadd.f32 0.0, %v719
      %v721 = vpop.f32.mrf.mxu0
      %722 = vmatprep.mubr.bf16.mxu0 0
      %723 = vmatmul.mubr.bf16.gmra.mxu0 %v562
      %v724 = vpop.f32.mrf.mxu0
      %v725 = vadd.f32 0.0, %v724
      %v726 = vpop.f32.mrf.mxu0
      %v727 = vpop.f32.mrf.mxu0
      %v728 = vadd.f32 0.0, %v727
      %v729 = vpop.f32.mrf.mxu0
      %730 = vmatprep.mubr.bf16.mxu0 0
      %731 = vmatmul.mubr.bf16.gmra.mxu0 %v565
      %v732 = vpop.f32.mrf.mxu0
      %v733 = vadd.f32 0.0, %v732
      %v734 = vpop.f32.mrf.mxu0
      %v735 = vpop.f32.mrf.mxu0
      %v736 = vadd.f32 0.0, %v735
      %v737 = vpop.f32.mrf.mxu0
      %738 = vmatprep.mubr.bf16.mxu0 0
      %739 = vmatmul.mubr.bf16.gmra.mxu0 %v568
      %v740 = vpop.f32.mrf.mxu0
      %v741 = vadd.f32 0.0, %v740
      %v742 = vpop.f32.mrf.mxu0
      %v743 = vpop.f32.mrf.mxu0
      %v744 = vadd.f32 0.0, %v743
      %v745 = vpop.f32.mrf.mxu0
      %746 = vdwg.mxu0
      %v748 = vunpack.c.l.b16 %v258
      %v749 = vpack.c.b16 %v748, %v339
      %v754 = vunpack.c.l.b16 %v259
      %v755 = vunpack.c.l.b16 %v260
      %v756 = vunpack.c.l.b16 %v261
      %v757 = vunpack.c.l.b16 %v262
      %v758 = vpack.c.b16 %v755, %v754
      %v759 = vpack.c.b16 %v757, %v756
      %v762 = vsel %vm515, %v341, 0
      %v764 = vsel %vm515, %v342, 0
      %v766 = vsel %vm515, %v343, 0
      %v768 = vsel %vm515, %v344, 0
      %v770 = vsel %vm515, %v345, 0
      %v772 = vsel %vm515, %v346, 0
      %v774 = vsel %vm515, %v347, 0
      %v776 = vsel %vm515, %v348, 0
      %v778 = vsel %vm515, %v349, 0
      %v780 = vsel %vm515, %v350, 0
      %v782 = vsel %vm515, %v351, 0
      %v784 = vsel %vm515, %v352, 0
      %v786 = vsel %vm515, %v353, 0
      %v788 = vsel %vm515, %v354, 0
      %v790 = vsel %vm515, %v355, 0
      %v792 = vsel %vm515, %v356, 0
      %v794 = vsel %vm515, %v357, 0
      %v797 = vsel %vm515, %v749, 0
      %799 = vmatprep.subr.bf16.mxu0 0
      %800 = vmatpush1.bf16.msra.mxu0 0
      %801 = vmatprep.subr.bf16.mxu0 0
      %802 = vmatpush1.bf16.msra.mxu0 0
      %803 = vmatprep.subr.bf16.mxu0 0
      %804 = vmatpush1.bf16.msra.mxu0 0
      %805 = vmatprep.subr.bf16.mxu0 0
      %806 = vmatpush1.bf16.msra.mxu0 0
      %807 = vmatprep.subr.bf16.mxu0 0
      %808 = vmatpush1.bf16.msra.mxu0 0
      %809 = vmatprep.subr.bf16.mxu0 0
      %810 = vmatpush1.bf16.msra.mxu0 0
      %811 = vmatprep.subr.bf16.mxu0 0
      %812 = vmatpush1.bf16.msra.mxu0 %v759
      %813 = vmatprep.subr.bf16.mxu0 0
      %814 = vmatpush1.bf16.msra.mxu0 %v758
      %815 = vmatprep.subr.bf16.mxu0 0
      %816 = vmatpush2.bf16.msra.mxu0 0
      %817 = vmatprep.subr.bf16.mxu0 0
      %818 = vmatpush2.bf16.msra.mxu0 0
      %819 = vmatprep.subr.bf16.mxu0 0
      %820 = vmatpush2.bf16.msra.mxu0 0
      %821 = vmatprep.subr.bf16.mxu0 0
      %822 = vmatpush2.bf16.msra.mxu0 0
      %823 = vmatprep.subr.bf16.mxu0 0
      %824 = vmatpush2.bf16.msra.mxu0 0
      %825 = vmatprep.subr.bf16.mxu0 0
      %826 = vmatpush2.bf16.msra.mxu0 0
      %827 = vmatprep.subr.bf16.mxu0 0
      %828 = vmatpush2.bf16.msra.mxu0 0
      %829 = vmatprep.subr.bf16.mxu0 0
      %830 = vmatpush2.bf16.msra.mxu0 0
      %831 = vmatprep.mubr.bf16.mxu0 0
      %832 = vmatmul.mubr.bf16.gmra.mxu0 %v762
      %v833 = vpop.f32.mrf.mxu0
      %v834 = vadd.f32 %v605, %v833
      %v835 = vpop.f32.mrf.mxu0
      %v836 = vpop.f32.mrf.mxu0
      %v837 = vadd.f32 %v608, %v836
      %v838 = vpop.f32.mrf.mxu0
      %839 = vmatprep.mubr.bf16.mxu0 0
      %840 = vmatmul.mubr.bf16.gmra.mxu0 %v764
      %v841 = vpop.f32.mrf.mxu0
      %v842 = vadd.f32 %v613, %v841
      %v843 = vpop.f32.mrf.mxu0
      %v844 = vpop.f32.mrf.mxu0
      %v845 = vadd.f32 %v616, %v844
      %v846 = vpop.f32.mrf.mxu0
      %847 = vmatprep.mubr.bf16.mxu0 0
      %848 = vmatmul.mubr.bf16.gmra.mxu0 %v766
      %v849 = vpop.f32.mrf.mxu0
      %v850 = vadd.f32 %v621, %v849
      %v851 = vpop.f32.mrf.mxu0
      %v852 = vpop.f32.mrf.mxu0
      %v853 = vadd.f32 %v624, %v852
      %v854 = vpop.f32.mrf.mxu0
      %855 = vmatprep.mubr.bf16.mxu0 0
      %856 = vmatmul.mubr.bf16.gmra.mxu0 %v768
      %v857 = vpop.f32.mrf.mxu0
      %v858 = vadd.f32 %v629, %v857
      %v859 = vpop.f32.mrf.mxu0
      %v860 = vpop.f32.mrf.mxu0
      %v861 = vadd.f32 %v632, %v860
      %v862 = vpop.f32.mrf.mxu0
      %863 = vmatprep.mubr.bf16.mxu0 0
      %864 = vmatmul.mubr.bf16.gmra.mxu0 %v770
      %v865 = vpop.f32.mrf.mxu0
      %v866 = vadd.f32 %v637, %v865
      %v867 = vpop.f32.mrf.mxu0
      %v868 = vpop.f32.mrf.mxu0
      %v869 = vadd.f32 %v640, %v868
      %v870 = vpop.f32.mrf.mxu0
      %871 = vmatprep.mubr.bf16.mxu0 0
      %872 = vmatmul.mubr.bf16.gmra.mxu0 %v772
      %v873 = vpop.f32.mrf.mxu0
      %v874 = vadd.f32 %v645, %v873
      %v875 = vpop.f32.mrf.mxu0
      %v876 = vpop.f32.mrf.mxu0
      %v877 = vadd.f32 %v648, %v876
      %v878 = vpop.f32.mrf.mxu0
      %879 = vmatprep.mubr.bf16.mxu0 0
      %880 = vmatmul.mubr.bf16.gmra.mxu0 %v774
      %v881 = vpop.f32.mrf.mxu0
      %v882 = vadd.f32 %v653, %v881
      %v883 = vpop.f32.mrf.mxu0
      %v884 = vpop.f32.mrf.mxu0
      %v885 = vadd.f32 %v656, %v884
      %v886 = vpop.f32.mrf.mxu0
      %887 = vmatprep.mubr.bf16.mxu0 0
      %888 = vmatmul.mubr.bf16.gmra.mxu0 %v776
      %v889 = vpop.f32.mrf.mxu0
      %v890 = vadd.f32 %v661, %v889
      %v891 = vpop.f32.mrf.mxu0
      %v892 = vpop.f32.mrf.mxu0
      %v893 = vadd.f32 %v664, %v892
      %v894 = vpop.f32.mrf.mxu0
      %895 = vmatprep.mubr.bf16.mxu0 0
      %896 = vmatmul.mubr.bf16.gmra.mxu0 %v778
      %v897 = vpop.f32.mrf.mxu0
      %v898 = vadd.f32 %v669, %v897
      %v899 = vpop.f32.mrf.mxu0
      %v900 = vpop.f32.mrf.mxu0
      %v901 = vadd.f32 %v672, %v900
      %v902 = vpop.f32.mrf.mxu0
      %903 = vmatprep.mubr.bf16.mxu0 0
      %904 = vmatmul.mubr.bf16.gmra.mxu0 %v780
      %v905 = vpop.f32.mrf.mxu0
      %v906 = vadd.f32 %v677, %v905
      %v907 = vpop.f32.mrf.mxu0
      %v908 = vpop.f32.mrf.mxu0
      %v909 = vadd.f32 %v680, %v908
      %v910 = vpop.f32.mrf.mxu0
      %911 = vmatprep.mubr.bf16.mxu0 0
      %912 = vmatmul.mubr.bf16.gmra.mxu0 %v782
      %v913 = vpop.f32.mrf.mxu0
      %v914 = vadd.f32 %v685, %v913
      %v915 = vpop.f32.mrf.mxu0
      %v916 = vpop.f32.mrf.mxu0
      %v917 = vadd.f32 %v688, %v916
      %v918 = vpop.f32.mrf.mxu0
      %919 = vmatprep.mubr.bf16.mxu0 0
      %920 = vmatmul.mubr.bf16.gmra.mxu0 %v784
      %v921 = vpop.f32.mrf.mxu0
      %v922 = vadd.f32 %v693, %v921
      %v923 = vpop.f32.mrf.mxu0
      %v924 = vpop.f32.mrf.mxu0
      %v925 = vadd.f32 %v696, %v924
      %v926 = vpop.f32.mrf.mxu0
      %927 = vmatprep.mubr.bf16.mxu0 0
      %928 = vmatmul.mubr.bf16.gmra.mxu0 %v786
      %v929 = vpop.f32.mrf.mxu0
      %v930 = vadd.f32 %v701, %v929
      %v931 = vpop.f32.mrf.mxu0
      %v932 = vpop.f32.mrf.mxu0
      %v933 = vadd.f32 %v704, %v932
      %v934 = vpop.f32.mrf.mxu0
      %935 = vmatprep.mubr.bf16.mxu0 0
      %936 = vmatmul.mubr.bf16.gmra.mxu0 %v788
      %v937 = vpop.f32.mrf.mxu0
      %v938 = vadd.f32 %v709, %v937
      %v939 = vpop.f32.mrf.mxu0
      %v940 = vpop.f32.mrf.mxu0
      %v941 = vadd.f32 %v712, %v940
      %v942 = vpop.f32.mrf.mxu0
      %943 = vmatprep.mubr.bf16.mxu0 0
      %944 = vmatmul.mubr.bf16.gmra.mxu0 %v790
      %v945 = vpop.f32.mrf.mxu0
      %v946 = vadd.f32 %v717, %v945
      %v947 = vpop.f32.mrf.mxu0
      %v948 = vpop.f32.mrf.mxu0
      %v949 = vadd.f32 %v720, %v948
      %v950 = vpop.f32.mrf.mxu0
      %951 = vmatprep.mubr.bf16.mxu0 0
      %952 = vmatmul.mubr.bf16.gmra.mxu0 %v792
      %v953 = vpop.f32.mrf.mxu0
      %v954 = vadd.f32 %v725, %v953
      %v955 = vpop.f32.mrf.mxu0
      %v956 = vpop.f32.mrf.mxu0
      %v957 = vadd.f32 %v728, %v956
      %v958 = vpop.f32.mrf.mxu0
      %959 = vmatprep.mubr.bf16.mxu0 0
      %960 = vmatmul.mubr.bf16.gmra.mxu0 %v794
      %v961 = vpop.f32.mrf.mxu0
      %v962 = vadd.f32 %v733, %v961
      %v963 = vpop.f32.mrf.mxu0
      %v964 = vpop.f32.mrf.mxu0
      %v965 = vadd.f32 %v736, %v964
      %v966 = vpop.f32.mrf.mxu0
      %967 = vmatprep.mubr.bf16.mxu0 0
      %968 = vmatmul.mubr.bf16.gmra.mxu0 %v797
      %v969 = vpop.f32.mrf.mxu0
      %v970 = vadd.f32 %v741, %v969
      %v971 = vpop.f32.mrf.mxu0
      %v972 = vpop.f32.mrf.mxu0
      %v973 = vadd.f32 %v744, %v972
      %v974 = vpop.f32.mrf.mxu0
      %975 = vdwg.mxu0
      %v976 = vld [vmem:[%s206] sm:$0xe]
      %s977 = scalar_lea.vmem %s210, 32
      %v978 = vld [vmem:[%s977] sm:$0xf]
      %v979 = vld [vmem:[%s977 + $0x4] sm:$0xf]
      %v980 = vld [vmem:[%s977 + $0x8] sm:$0xf]
      %v981 = vld [vmem:[%s977 + $0xc] sm:$0xf]
      %v983 = vunpack.c.l.b16 %v976
      %v984 = vpack.c.b16 %v306, %v983
      %vm985 = vcmask 1046528
      %v986 = vrot.slane %v984, 1
      %v987 = vrot.slane %v342, 1
      %v988 = vsel %vm985, %v986, %v987
      %v989 = vrot.slane %v343, 1
      %v990 = vsel %vm985, %v987, %v989
      %v991 = vrot.slane %v344, 1
      %v992 = vsel %vm985, %v989, %v991
      %v993 = vrot.slane %v345, 1
      %v994 = vsel %vm985, %v991, %v993
      %v995 = vrot.slane %v346, 1
      %v996 = vsel %vm985, %v993, %v995
      %v997 = vrot.slane %v347, 1
      %v998 = vsel %vm985, %v995, %v997
      %v999 = vrot.slane %v348, 1
      %v1000 = vsel %vm985, %v997, %v999
      %v1001 = vrot.slane %v349, 1
      %v1002 = vsel %vm985, %v999, %v1001
      %v1003 = vrot.slane %v350, 1
      %v1004 = vsel %vm985, %v1001, %v1003
      %v1005 = vrot.slane %v351, 1
      %v1006 = vsel %vm985, %v1003, %v1005
      %v1007 = vrot.slane %v352, 1
      %v1008 = vsel %vm985, %v1005, %v1007
      %v1009 = vrot.slane %v353, 1
      %v1010 = vsel %vm985, %v1007, %v1009
      %v1011 = vrot.slane %v354, 1
      %v1012 = vsel %vm985, %v1009, %v1011
      %v1013 = vrot.slane %v355, 1
      %v1014 = vsel %vm985, %v1011, %v1013
      %v1015 = vrot.slane %v356, 1
      %v1016 = vsel %vm985, %v1013, %v1015
      %v1017 = vrot.slane %v357, 1
      %v1018 = vsel %vm985, %v1015, %v1017
      %v1019 = vrot.slane %v358, 1
      %v1020 = vsel %vm985, %v1017, %v1019
      %v1025 = vunpack.c.l.b16 %v978
      %v1026 = vunpack.c.l.b16 %v979
      %v1027 = vunpack.c.l.b16 %v980
      %v1028 = vunpack.c.l.b16 %v981
      %v1029 = vpack.c.b16 %v1026, %v1025
      %v1030 = vpack.c.b16 %v1028, %v1027
      %v1034 = vsel %vm515, %v988, 0
      %v1037 = vsel %vm515, %v990, 0
      %v1040 = vsel %vm515, %v992, 0
      %v1043 = vsel %vm515, %v994, 0
      %v1046 = vsel %vm515, %v996, 0
      %v1049 = vsel %vm515, %v998, 0
      %v1052 = vsel %vm515, %v1000, 0
      %v1055 = vsel %vm515, %v1002, 0
      %v1058 = vsel %vm515, %v1004, 0
      %v1061 = vsel %vm515, %v1006, 0
      %v1064 = vsel %vm515, %v1008, 0
      %v1067 = vsel %vm515, %v1010, 0
      %v1070 = vsel %vm515, %v1012, 0
      %v1073 = vsel %vm515, %v1014, 0
      %v1076 = vsel %vm515, %v1016, 0
      %v1079 = vsel %vm515, %v1018, 0
      %v1082 = vsel %vm515, %v1020, 0
      %v1085 = vsel %vm515, %v1019, 0
      %1087 = vmatprep.subr.bf16.mxu0 0
      %1088 = vmatpush1.bf16.msra.mxu0 0
      %1089 = vmatprep.subr.bf16.mxu0 0
      %1090 = vmatpush1.bf16.msra.mxu0 0
      %1091 = vmatprep.subr.bf16.mxu0 0
      %1092 = vmatpush1.bf16.msra.mxu0 0
      %1093 = vmatprep.subr.bf16.mxu0 0
      %1094 = vmatpush1.bf16.msra.mxu0 0
      %1095 = vmatprep.subr.bf16.mxu0 0
      %1096 = vmatpush1.bf16.msra.mxu0 0
      %1097 = vmatprep.subr.bf16.mxu0 0
      %1098 = vmatpush1.bf16.msra.mxu0 0
      %1099 = vmatprep.subr.bf16.mxu0 0
      %1100 = vmatpush1.bf16.msra.mxu0 %v1030
      %1101 = vmatprep.subr.bf16.mxu0 0
      %1102 = vmatpush1.bf16.msra.mxu0 %v1029
      %1103 = vmatprep.subr.bf16.mxu0 0
      %1104 = vmatpush2.bf16.msra.mxu0 0
      %1105 = vmatprep.subr.bf16.mxu0 0
      %1106 = vmatpush2.bf16.msra.mxu0 0
      %1107 = vmatprep.subr.bf16.mxu0 0
      %1108 = vmatpush2.bf16.msra.mxu0 0
      %1109 = vmatprep.subr.bf16.mxu0 0
      %1110 = vmatpush2.bf16.msra.mxu0 0
      %1111 = vmatprep.subr.bf16.mxu0 0
      %1112 = vmatpush2.bf16.msra.mxu0 0
      %1113 = vmatprep.subr.bf16.mxu0 0
      %1114 = vmatpush2.bf16.msra.mxu0 0
      %1115 = vmatprep.subr.bf16.mxu0 0
      %1116 = vmatpush2.bf16.msra.mxu0 0
      %1117 = vmatprep.subr.bf16.mxu0 0
      %1118 = vmatpush2.bf16.msra.mxu0 0
      %1119 = vmatprep.mubr.bf16.mxu0 0
      %1120 = vmatmul.mubr.bf16.gmra.mxu0 %v1034
      %v1121 = vpop.f32.mrf.mxu0
      %v1122 = vadd.f32 0.0, %v1121
      %v1123 = vpop.f32.mrf.mxu0
      %v1124 = vpop.f32.mrf.mxu0
      %v1125 = vadd.f32 0.0, %v1124
      %v1126 = vpop.f32.mrf.mxu0
      %1127 = vmatprep.mubr.bf16.mxu0 0
      %1128 = vmatmul.mubr.bf16.gmra.mxu0 %v1037
      %v1129 = vpop.f32.mrf.mxu0
      %v1130 = vadd.f32 0.0, %v1129
      %v1131 = vpop.f32.mrf.mxu0
      %v1132 = vpop.f32.mrf.mxu0
      %v1133 = vadd.f32 0.0, %v1132
      %v1134 = vpop.f32.mrf.mxu0
      %1135 = vmatprep.mubr.bf16.mxu0 0
      %1136 = vmatmul.mubr.bf16.gmra.mxu0 %v1040
      %v1137 = vpop.f32.mrf.mxu0
      %v1138 = vadd.f32 0.0, %v1137
      %v1139 = vpop.f32.mrf.mxu0
      %v1140 = vpop.f32.mrf.mxu0
      %v1141 = vadd.f32 0.0, %v1140
      %v1142 = vpop.f32.mrf.mxu0
      %1143 = vmatprep.mubr.bf16.mxu0 0
      %1144 = vmatmul.mubr.bf16.gmra.mxu0 %v1043
      %v1145 = vpop.f32.mrf.mxu0
      %v1146 = vadd.f32 0.0, %v1145
      %v1147 = vpop.f32.mrf.mxu0
      %v1148 = vpop.f32.mrf.mxu0
      %v1149 = vadd.f32 0.0, %v1148
      %v1150 = vpop.f32.mrf.mxu0
      %1151 = vmatprep.mubr.bf16.mxu0 0
      %1152 = vmatmul.mubr.bf16.gmra.mxu0 %v1046
      %v1153 = vpop.f32.mrf.mxu0
      %v1154 = vadd.f32 0.0, %v1153
      %v1155 = vpop.f32.mrf.mxu0
      %v1156 = vpop.f32.mrf.mxu0
      %v1157 = vadd.f32 0.0, %v1156
      %v1158 = vpop.f32.mrf.mxu0
      %1159 = vmatprep.mubr.bf16.mxu0 0
      %1160 = vmatmul.mubr.bf16.gmra.mxu0 %v1049
      %v1161 = vpop.f32.mrf.mxu0
      %v1162 = vadd.f32 0.0, %v1161
      %v1163 = vpop.f32.mrf.mxu0
      %v1164 = vpop.f32.mrf.mxu0
      %v1165 = vadd.f32 0.0, %v1164
      %v1166 = vpop.f32.mrf.mxu0
      %1167 = vmatprep.mubr.bf16.mxu0 0
      %1168 = vmatmul.mubr.bf16.gmra.mxu0 %v1052
      %v1169 = vpop.f32.mrf.mxu0
      %v1170 = vadd.f32 0.0, %v1169
      %v1171 = vpop.f32.mrf.mxu0
      %v1172 = vpop.f32.mrf.mxu0
      %v1173 = vadd.f32 0.0, %v1172
      %v1174 = vpop.f32.mrf.mxu0
      %1175 = vmatprep.mubr.bf16.mxu0 0
      %1176 = vmatmul.mubr.bf16.gmra.mxu0 %v1055
      %v1177 = vpop.f32.mrf.mxu0
      %v1178 = vadd.f32 0.0, %v1177
      %v1179 = vpop.f32.mrf.mxu0
      %v1180 = vpop.f32.mrf.mxu0
      %v1181 = vadd.f32 0.0, %v1180
      %v1182 = vpop.f32.mrf.mxu0
      %1183 = vmatprep.mubr.bf16.mxu0 0
      %1184 = vmatmul.mubr.bf16.gmra.mxu0 %v1058
      %v1185 = vpop.f32.mrf.mxu0
      %v1186 = vadd.f32 0.0, %v1185
      %v1187 = vpop.f32.mrf.mxu0
      %v1188 = vpop.f32.mrf.mxu0
      %v1189 = vadd.f32 0.0, %v1188
      %v1190 = vpop.f32.mrf.mxu0
      %1191 = vmatprep.mubr.bf16.mxu0 0
      %1192 = vmatmul.mubr.bf16.gmra.mxu0 %v1061
      %v1193 = vpop.f32.mrf.mxu0
      %v1194 = vadd.f32 0.0, %v1193
      %v1195 = vpop.f32.mrf.mxu0
      %v1196 = vpop.f32.mrf.mxu0
      %v1197 = vadd.f32 0.0, %v1196
      %v1198 = vpop.f32.mrf.mxu0
      %1199 = vmatprep.mubr.bf16.mxu0 0
      %1200 = vmatmul.mubr.bf16.gmra.mxu0 %v1064
      %v1201 = vpop.f32.mrf.mxu0
      %v1202 = vadd.f32 0.0, %v1201
      %v1203 = vpop.f32.mrf.mxu0
      %v1204 = vpop.f32.mrf.mxu0
      %v1205 = vadd.f32 0.0, %v1204
      %v1206 = vpop.f32.mrf.mxu0
      %1207 = vmatprep.mubr.bf16.mxu0 0
      %1208 = vmatmul.mubr.bf16.gmra.mxu0 %v1067
      %v1209 = vpop.f32.mrf.mxu0
      %v1210 = vadd.f32 0.0, %v1209
      %v1211 = vpop.f32.mrf.mxu0
      %v1212 = vpop.f32.mrf.mxu0
      %v1213 = vadd.f32 0.0, %v1212
      %v1214 = vpop.f32.mrf.mxu0
      %1215 = vmatprep.mubr.bf16.mxu0 0
      %1216 = vmatmul.mubr.bf16.gmra.mxu0 %v1070
      %v1217 = vpop.f32.mrf.mxu0
      %v1218 = vadd.f32 0.0, %v1217
      %v1219 = vpop.f32.mrf.mxu0
      %v1220 = vpop.f32.mrf.mxu0
      %v1221 = vadd.f32 0.0, %v1220
      %v1222 = vpop.f32.mrf.mxu0
      %1223 = vmatprep.mubr.bf16.mxu0 0
      %1224 = vmatmul.mubr.bf16.gmra.mxu0 %v1073
      %v1225 = vpop.f32.mrf.mxu0
      %v1226 = vadd.f32 0.0, %v1225
      %v1227 = vpop.f32.mrf.mxu0
      %v1228 = vpop.f32.mrf.mxu0
      %v1229 = vadd.f32 0.0, %v1228
      %v1230 = vpop.f32.mrf.mxu0
      %1231 = vmatprep.mubr.bf16.mxu0 0
      %1232 = vmatmul.mubr.bf16.gmra.mxu0 %v1076
      %v1233 = vpop.f32.mrf.mxu0
      %v1234 = vadd.f32 0.0, %v1233
      %v1235 = vpop.f32.mrf.mxu0
      %v1236 = vpop.f32.mrf.mxu0
      %v1237 = vadd.f32 0.0, %v1236
      %v1238 = vpop.f32.mrf.mxu0
      %1239 = vmatprep.mubr.bf16.mxu0 0
      %1240 = vmatmul.mubr.bf16.gmra.mxu0 %v1079
      %v1241 = vpop.f32.mrf.mxu0
      %v1242 = vadd.f32 0.0, %v1241
      %v1243 = vpop.f32.mrf.mxu0
      %v1244 = vpop.f32.mrf.mxu0
      %v1245 = vadd.f32 0.0, %v1244
      %v1246 = vpop.f32.mrf.mxu0
      %1247 = vmatprep.mubr.bf16.mxu0 0
      %1248 = vmatmul.mubr.bf16.gmra.mxu0 %v1082
      %v1249 = vpop.f32.mrf.mxu0
      %v1250 = vadd.f32 0.0, %v1249
      %v1251 = vpop.f32.mrf.mxu0
      %v1252 = vpop.f32.mrf.mxu0
      %v1253 = vadd.f32 0.0, %v1252
      %v1254 = vpop.f32.mrf.mxu0
      %1255 = vmatprep.mubr.bf16.mxu0 0
      %1256 = vmatmul.mubr.bf16.gmra.mxu0 %v1085
      %v1257 = vpop.f32.mrf.mxu0
      %v1258 = vadd.f32 0.0, %v1257
      %v1259 = vpop.f32.mrf.mxu0
      %v1260 = vpop.f32.mrf.mxu0
      %v1261 = vadd.f32 0.0, %v1260
      %v1262 = vpop.f32.mrf.mxu0
      %1263 = vdwg.mxu0
      %v1264 = vadd.f32 %v834, %v1122
      %v1265 = vadd.f32 %v837, %v1125
      %v1266 = vadd.f32 %v842, %v1130
      %v1267 = vadd.f32 %v845, %v1133
      %v1268 = vadd.f32 %v850, %v1138
      %v1269 = vadd.f32 %v853, %v1141
      %v1270 = vadd.f32 %v858, %v1146
      %v1271 = vadd.f32 %v861, %v1149
      %v1272 = vadd.f32 %v866, %v1154
      %v1273 = vadd.f32 %v869, %v1157
      %v1274 = vadd.f32 %v874, %v1162
      %v1275 = vadd.f32 %v877, %v1165
      %v1276 = vadd.f32 %v882, %v1170
      %v1277 = vadd.f32 %v885, %v1173
      %v1278 = vadd.f32 %v890, %v1178
      %v1279 = vadd.f32 %v893, %v1181
      %v1280 = vadd.f32 %v898, %v1186
      %v1281 = vadd.f32 %v901, %v1189
      %v1282 = vadd.f32 %v906, %v1194
      %v1283 = vadd.f32 %v909, %v1197
      %v1284 = vadd.f32 %v914, %v1202
      %v1285 = vadd.f32 %v917, %v1205
      %v1286 = vadd.f32 %v922, %v1210
      %v1287 = vadd.f32 %v925, %v1213
      %v1288 = vadd.f32 %v930, %v1218
      %v1289 = vadd.f32 %v933, %v1221
      %v1290 = vadd.f32 %v938, %v1226
      %v1291 = vadd.f32 %v941, %v1229
      %v1292 = vadd.f32 %v946, %v1234
      %v1293 = vadd.f32 %v949, %v1237
      %v1294 = vadd.f32 %v954, %v1242
      %v1295 = vadd.f32 %v957, %v1245
      %v1296 = vadd.f32 %v962, %v1250
      %v1297 = vadd.f32 %v965, %v1253
      %v1298 = vadd.f32 %v970, %v1258
      %v1299 = vadd.f32 %v973, %v1261
      %v1300 = vld [vmem:[%s206 + $0x8] sm:$0xe]
      %v1301 = vld [vmem:[%s206 + $0xc] sm:$0xf]
      %v1302 = vld [vmem:[%s206 + $0x10] sm:$0xf]
      %v1303 = vld [vmem:[%s206 + $0x14] sm:$0xf]
      %v1304 = vld [vmem:[%s206 + $0x18] sm:$0xf]
      %v1305 = vld [vmem:[%s206 + $0x1c] sm:$0xf]
      %v1306 = vld [vmem:[%s206 + $0x20] sm:$0xf]
      %v1307 = vld [vmem:[%s206 + $0x24] sm:$0xf]
      %v1308 = vld [vmem:[%s206 + $0x28] sm:$0xf]
      %v1309 = vld [vmem:[%s206 + $0x2c] sm:$0xf]
      %v1310 = vld [vmem:[%s206 + $0x30] sm:$0xf]
      %v1311 = vld [vmem:[%s206 + $0x34] sm:$0xf]
      %v1312 = vld [vmem:[%s206 + $0x38] sm:$0xf]
      %v1313 = vld [vmem:[%s206 + $0x3c] sm:$0xf]
      %v1314 = vld [vmem:[%s206 + $0x40] sm:$0xf]
      %v1315 = vld [vmem:[%s206 + $0x44] sm:$0xf]
      %v1316 = vld [vmem:[%s206 + $0x48] sm:$0xf]
      %v1317 = vld [vmem:[%s206 + $0x4c] sm:$0xf]
      %v1318 = vld [vmem:[%s206 + $0x50] sm:$0xf]
      %v1319 = vld [vmem:[%s206 + $0x54] sm:$0xf]
      %v1320 = vld [vmem:[%s206 + $0x58] sm:$0xf]
      %v1321 = vld [vmem:[%s206 + $0x5c] sm:$0xf]
      %v1322 = vld [vmem:[%s206 + $0x60] sm:$0xf]
      %v1323 = vld [vmem:[%s206 + $0x64] sm:$0xf]
      %v1324 = vld [vmem:[%s206 + $0x68] sm:$0xf]
      %v1325 = vld [vmem:[%s206 + $0x6c] sm:$0xf]
      %v1326 = vld [vmem:[%s206 + $0x70] sm:$0xf]
      %v1327 = vld [vmem:[%s206 + $0x74] sm:$0xf]
      %v1328 = vld [vmem:[%s206 + $0x78] sm:$0xf]
      %v1329 = vld [vmem:[%s206 + $0x7c] sm:$0xf]
      %v1330 = vld [vmem:[%s206 + $0x80] sm:$0xf]
      %v1331 = vld [vmem:[%s206 + $0x84] sm:$0xf]
      %v1332 = vld [vmem:[%s206 + $0x88] sm:$0xf]
      %v1333 = vld [vmem:[%s206 + $0x8c] sm:$0xf]
      %v1334 = vld [vmem:[%s206 + $0x90] sm:$0xf]
      %v1335 = vld [vmem:[%s206 + $0x94] sm:$0xf]
      %s1336 = scalar_lea.vmem %s210, 48
      %v1337 = vld [vmem:[%s1336] sm:$0xf]
      %v1338 = vld [vmem:[%s1336 + $0x4] sm:$0xf]
      %v1339 = vld [vmem:[%s1336 + $0x8] sm:$0xf]
      %v1340 = vld [vmem:[%s1336 + $0xc] sm:$0xf]
      %v1377 = vunpack.c.l.b16 %v1300
      %v1378 = vunpack.c.l.b16 %v1301
      %v1379 = vunpack.c.l.b16 %v1302
      %v1380 = vunpack.c.l.b16 %v1303
      %v1381 = vunpack.c.l.b16 %v1304
      %v1382 = vunpack.c.l.b16 %v1305
      %v1383 = vunpack.c.l.b16 %v1306
      %v1384 = vunpack.c.l.b16 %v1307
      %v1385 = vunpack.c.l.b16 %v1308
      %v1386 = vunpack.c.l.b16 %v1309
      %v1387 = vunpack.c.l.b16 %v1310
      %v1388 = vunpack.c.l.b16 %v1311
      %v1389 = vunpack.c.l.b16 %v1312
      %v1390 = vunpack.c.l.b16 %v1313
      %v1391 = vunpack.c.l.b16 %v1314
      %v1392 = vunpack.c.l.b16 %v1315
      %v1393 = vunpack.c.l.b16 %v1316
      %v1394 = vunpack.c.l.b16 %v1317
      %v1395 = vunpack.c.l.b16 %v1318
      %v1396 = vunpack.c.l.b16 %v1319
      %v1397 = vunpack.c.l.b16 %v1320
      %v1398 = vunpack.c.l.b16 %v1321
      %v1399 = vunpack.c.l.b16 %v1322
      %v1400 = vunpack.c.l.b16 %v1323
      %v1401 = vunpack.c.l.b16 %v1324
      %v1402 = vunpack.c.l.b16 %v1325
      %v1403 = vunpack.c.l.b16 %v1326
      %v1404 = vunpack.c.l.b16 %v1327
      %v1405 = vunpack.c.l.b16 %v1328
      %v1406 = vunpack.c.l.b16 %v1329
      %v1407 = vunpack.c.l.b16 %v1330
      %v1408 = vunpack.c.l.b16 %v1331
      %v1409 = vunpack.c.l.b16 %v1332
      %v1410 = vunpack.c.l.b16 %v1333
      %v1411 = vunpack.c.l.b16 %v1334
      %v1412 = vunpack.c.l.b16 %v1335
      %v1413 = vpack.c.b16 %v1378, %v1377
      %v1414 = vpack.c.b16 %v1380, %v1379
      %v1415 = vpack.c.b16 %v1382, %v1381
      %v1416 = vpack.c.b16 %v1384, %v1383
      %v1417 = vpack.c.b16 %v1386, %v1385
      %v1418 = vpack.c.b16 %v1388, %v1387
      %v1419 = vpack.c.b16 %v1390, %v1389
      %v1420 = vpack.c.b16 %v1392, %v1391
      %v1421 = vpack.c.b16 %v1394, %v1393
      %v1422 = vpack.c.b16 %v1396, %v1395
      %v1423 = vpack.c.b16 %v1398, %v1397
      %v1424 = vpack.c.b16 %v1400, %v1399
      %v1425 = vpack.c.b16 %v1402, %v1401
      %v1426 = vpack.c.b16 %v1404, %v1403
      %v1427 = vpack.c.b16 %v1406, %v1405
      %v1428 = vpack.c.b16 %v1408, %v1407
      %v1429 = vpack.c.b16 %v1410, %v1409
      %v1430 = vpack.c.b16 %v1412, %v1411
      %v1431 = vrot.slane %v1413, 1
      %v1432 = vrot.slane %v1414, 1
      %v1433 = vsel %vm985, %v1431, %v1432
      %v1434 = vrot.slane %v1415, 1
      %v1435 = vsel %vm985, %v1432, %v1434
      %v1436 = vrot.slane %v1416, 1
      %v1437 = vsel %vm985, %v1434, %v1436
      %v1438 = vrot.slane %v1417, 1
      %v1439 = vsel %vm985, %v1436, %v1438
      %v1440 = vrot.slane %v1418, 1
      %v1441 = vsel %vm985, %v1438, %v1440
      %v1442 = vrot.slane %v1419, 1
      %v1443 = vsel %vm985, %v1440, %v1442
      %v1444 = vrot.slane %v1420, 1
      %v1445 = vsel %vm985, %v1442, %v1444
      %v1446 = vrot.slane %v1421, 1
      %v1447 = vsel %vm985, %v1444, %v1446
      %v1448 = vrot.slane %v1422, 1
      %v1449 = vsel %vm985, %v1446, %v1448
      %v1450 = vrot.slane %v1423, 1
      %v1451 = vsel %vm985, %v1448, %v1450
      %v1452 = vrot.slane %v1424, 1
      %v1453 = vsel %vm985, %v1450, %v1452
      %v1454 = vrot.slane %v1425, 1
      %v1455 = vsel %vm985, %v1452, %v1454
      %v1456 = vrot.slane %v1426, 1
      %v1457 = vsel %vm985, %v1454, %v1456
      %v1458 = vrot.slane %v1427, 1
      %v1459 = vsel %vm985, %v1456, %v1458
      %v1460 = vrot.slane %v1428, 1
      %v1461 = vsel %vm985, %v1458, %v1460
      %v1462 = vrot.slane %v1429, 1
      %v1463 = vsel %vm985, %v1460, %v1462
      %v1464 = vrot.slane %v1430, 1
      %v1465 = vsel %vm985, %v1462, %v1464
      %v1470 = vunpack.c.l.b16 %v1337
      %v1471 = vunpack.c.l.b16 %v1338
      %v1472 = vunpack.c.l.b16 %v1339
      %v1473 = vunpack.c.l.b16 %v1340
      %v1474 = vpack.c.b16 %v1471, %v1470
      %v1475 = vpack.c.b16 %v1473, %v1472
      %v1479 = vsel %vm515, %v1433, 0
      %v1482 = vsel %vm515, %v1435, 0
      %v1485 = vsel %vm515, %v1437, 0
      %v1488 = vsel %vm515, %v1439, 0
      %v1491 = vsel %vm515, %v1441, 0
      %v1494 = vsel %vm515, %v1443, 0
      %v1497 = vsel %vm515, %v1445, 0
      %v1500 = vsel %vm515, %v1447, 0
      %v1503 = vsel %vm515, %v1449, 0
      %v1506 = vsel %vm515, %v1451, 0
      %v1509 = vsel %vm515, %v1453, 0
      %v1512 = vsel %vm515, %v1455, 0
      %v1515 = vsel %vm515, %v1457, 0
      %v1518 = vsel %vm515, %v1459, 0
      %v1521 = vsel %vm515, %v1461, 0
      %v1524 = vsel %vm515, %v1463, 0
      %v1527 = vsel %vm515, %v1465, 0
      %v1530 = vsel %vm515, %v1464, 0
      %1532 = vmatprep.subr.bf16.mxu0 0
      %1533 = vmatpush1.bf16.msra.mxu0 0
      %1534 = vmatprep.subr.bf16.mxu0 0
      %1535 = vmatpush1.bf16.msra.mxu0 0
      %1536 = vmatprep.subr.bf16.mxu0 0
      %1537 = vmatpush1.bf16.msra.mxu0 0
      %1538 = vmatprep.subr.bf16.mxu0 0
      %1539 = vmatpush1.bf16.msra.mxu0 0
      %1540 = vmatprep.subr.bf16.mxu0 0
      %1541 = vmatpush1.bf16.msra.mxu0 0
      %1542 = vmatprep.subr.bf16.mxu0 0
      %1543 = vmatpush1.bf16.msra.mxu0 0
      %1544 = vmatprep.subr.bf16.mxu0 0
      %1545 = vmatpush1.bf16.msra.mxu0 %v1475
      %1546 = vmatprep.subr.bf16.mxu0 0
      %1547 = vmatpush1.bf16.msra.mxu0 %v1474
      %1548 = vmatprep.subr.bf16.mxu0 0
      %1549 = vmatpush2.bf16.msra.mxu0 0
      %1550 = vmatprep.subr.bf16.mxu0 0
      %1551 = vmatpush2.bf16.msra.mxu0 0
      %1552 = vmatprep.subr.bf16.mxu0 0
      %1553 = vmatpush2.bf16.msra.mxu0 0
      %1554 = vmatprep.subr.bf16.mxu0 0
      %1555 = vmatpush2.bf16.msra.mxu0 0
      %1556 = vmatprep.subr.bf16.mxu0 0
      %1557 = vmatpush2.bf16.msra.mxu0 0
      %1558 = vmatprep.subr.bf16.mxu0 0
      %1559 = vmatpush2.bf16.msra.mxu0 0
      %1560 = vmatprep.subr.bf16.mxu0 0
      %1561 = vmatpush2.bf16.msra.mxu0 0
      %1562 = vmatprep.subr.bf16.mxu0 0
      %1563 = vmatpush2.bf16.msra.mxu0 0
      %1564 = vmatprep.mubr.bf16.mxu0 0
      %1565 = vmatmul.mubr.bf16.gmra.mxu0 %v1479
      %v1566 = vpop.f32.mrf.mxu0
      %v1567 = vadd.f32 0.0, %v1566
      %v1568 = vpop.f32.mrf.mxu0
      %v1569 = vpop.f32.mrf.mxu0
      %v1570 = vadd.f32 0.0, %v1569
      %v1571 = vpop.f32.mrf.mxu0
      %1572 = vmatprep.mubr.bf16.mxu0 0
      %1573 = vmatmul.mubr.bf16.gmra.mxu0 %v1482
      %v1574 = vpop.f32.mrf.mxu0
      %v1575 = vadd.f32 0.0, %v1574
      %v1576 = vpop.f32.mrf.mxu0
      %v1577 = vpop.f32.mrf.mxu0
      %v1578 = vadd.f32 0.0, %v1577
      %v1579 = vpop.f32.mrf.mxu0
      %1580 = vmatprep.mubr.bf16.mxu0 0
      %1581 = vmatmul.mubr.bf16.gmra.mxu0 %v1485
      %v1582 = vpop.f32.mrf.mxu0
      %v1583 = vadd.f32 0.0, %v1582
      %v1584 = vpop.f32.mrf.mxu0
      %v1585 = vpop.f32.mrf.mxu0
      %v1586 = vadd.f32 0.0, %v1585
      %v1587 = vpop.f32.mrf.mxu0
      %1588 = vmatprep.mubr.bf16.mxu0 0
      %1589 = vmatmul.mubr.bf16.gmra.mxu0 %v1488
      %v1590 = vpop.f32.mrf.mxu0
      %v1591 = vadd.f32 0.0, %v1590
      %v1592 = vpop.f32.mrf.mxu0
      %v1593 = vpop.f32.mrf.mxu0
      %v1594 = vadd.f32 0.0, %v1593
      %v1595 = vpop.f32.mrf.mxu0
      %1596 = vmatprep.mubr.bf16.mxu0 0
      %1597 = vmatmul.mubr.bf16.gmra.mxu0 %v1491
      %v1598 = vpop.f32.mrf.mxu0
      %v1599 = vadd.f32 0.0, %v1598
      %v1600 = vpop.f32.mrf.mxu0
      %v1601 = vpop.f32.mrf.mxu0
      %v1602 = vadd.f32 0.0, %v1601
      %v1603 = vpop.f32.mrf.mxu0
      %1604 = vmatprep.mubr.bf16.mxu0 0
      %1605 = vmatmul.mubr.bf16.gmra.mxu0 %v1494
      %v1606 = vpop.f32.mrf.mxu0
      %v1607 = vadd.f32 0.0, %v1606
      %v1608 = vpop.f32.mrf.mxu0
      %v1609 = vpop.f32.mrf.mxu0
      %v1610 = vadd.f32 0.0, %v1609
      %v1611 = vpop.f32.mrf.mxu0
      %1612 = vmatprep.mubr.bf16.mxu0 0
      %1613 = vmatmul.mubr.bf16.gmra.mxu0 %v1497
      %v1614 = vpop.f32.mrf.mxu0
      %v1615 = vadd.f32 0.0, %v1614
      %v1616 = vpop.f32.mrf.mxu0
      %v1617 = vpop.f32.mrf.mxu0
      %v1618 = vadd.f32 0.0, %v1617
      %v1619 = vpop.f32.mrf.mxu0
      %1620 = vmatprep.mubr.bf16.mxu0 0
      %1621 = vmatmul.mubr.bf16.gmra.mxu0 %v1500
      %v1622 = vpop.f32.mrf.mxu0
      %v1623 = vadd.f32 0.0, %v1622
      %v1624 = vpop.f32.mrf.mxu0
      %v1625 = vpop.f32.mrf.mxu0
      %v1626 = vadd.f32 0.0, %v1625
      %v1627 = vpop.f32.mrf.mxu0
      %1628 = vmatprep.mubr.bf16.mxu0 0
      %1629 = vmatmul.mubr.bf16.gmra.mxu0 %v1503
      %v1630 = vpop.f32.mrf.mxu0
      %v1631 = vadd.f32 0.0, %v1630
      %v1632 = vpop.f32.mrf.mxu0
      %v1633 = vpop.f32.mrf.mxu0
      %v1634 = vadd.f32 0.0, %v1633
      %v1635 = vpop.f32.mrf.mxu0
      %1636 = vmatprep.mubr.bf16.mxu0 0
      %1637 = vmatmul.mubr.bf16.gmra.mxu0 %v1506
      %v1638 = vpop.f32.mrf.mxu0
      %v1639 = vadd.f32 0.0, %v1638
      %v1640 = vpop.f32.mrf.mxu0
      %v1641 = vpop.f32.mrf.mxu0
      %v1642 = vadd.f32 0.0, %v1641
      %v1643 = vpop.f32.mrf.mxu0
      %1644 = vmatprep.mubr.bf16.mxu0 0
      %1645 = vmatmul.mubr.bf16.gmra.mxu0 %v1509
      %v1646 = vpop.f32.mrf.mxu0
      %v1647 = vadd.f32 0.0, %v1646
      %v1648 = vpop.f32.mrf.mxu0
      %v1649 = vpop.f32.mrf.mxu0
      %v1650 = vadd.f32 0.0, %v1649
      %v1651 = vpop.f32.mrf.mxu0
      %1652 = vmatprep.mubr.bf16.mxu0 0
      %1653 = vmatmul.mubr.bf16.gmra.mxu0 %v1512
      %v1654 = vpop.f32.mrf.mxu0
      %v1655 = vadd.f32 0.0, %v1654
      %v1656 = vpop.f32.mrf.mxu0
      %v1657 = vpop.f32.mrf.mxu0
      %v1658 = vadd.f32 0.0, %v1657
      %v1659 = vpop.f32.mrf.mxu0
      %1660 = vmatprep.mubr.bf16.mxu0 0
      %1661 = vmatmul.mubr.bf16.gmra.mxu0 %v1515
      %v1662 = vpop.f32.mrf.mxu0
      %v1663 = vadd.f32 0.0, %v1662
      %v1664 = vpop.f32.mrf.mxu0
      %v1665 = vpop.f32.mrf.mxu0
      %v1666 = vadd.f32 0.0, %v1665
      %v1667 = vpop.f32.mrf.mxu0
      %1668 = vmatprep.mubr.bf16.mxu0 0
      %1669 = vmatmul.mubr.bf16.gmra.mxu0 %v1518
      %v1670 = vpop.f32.mrf.mxu0
      %v1671 = vadd.f32 0.0, %v1670
      %v1672 = vpop.f32.mrf.mxu0
      %v1673 = vpop.f32.mrf.mxu0
      %v1674 = vadd.f32 0.0, %v1673
      %v1675 = vpop.f32.mrf.mxu0
      %1676 = vmatprep.mubr.bf16.mxu0 0
      %1677 = vmatmul.mubr.bf16.gmra.mxu0 %v1521
      %v1678 = vpop.f32.mrf.mxu0
      %v1679 = vadd.f32 0.0, %v1678
      %v1680 = vpop.f32.mrf.mxu0
      %v1681 = vpop.f32.mrf.mxu0
      %v1682 = vadd.f32 0.0, %v1681
      %v1683 = vpop.f32.mrf.mxu0
      %1684 = vmatprep.mubr.bf16.mxu0 0
      %1685 = vmatmul.mubr.bf16.gmra.mxu0 %v1524
      %v1686 = vpop.f32.mrf.mxu0
      %v1687 = vadd.f32 0.0, %v1686
      %v1688 = vpop.f32.mrf.mxu0
      %v1689 = vpop.f32.mrf.mxu0
      %v1690 = vadd.f32 0.0, %v1689
      %v1691 = vpop.f32.mrf.mxu0
      %1692 = vmatprep.mubr.bf16.mxu0 0
      %1693 = vmatmul.mubr.bf16.gmra.mxu0 %v1527
      %v1694 = vpop.f32.mrf.mxu0
      %v1695 = vadd.f32 0.0, %v1694
      %v1696 = vpop.f32.mrf.mxu0
      %v1697 = vpop.f32.mrf.mxu0
      %v1698 = vadd.f32 0.0, %v1697
      %v1699 = vpop.f32.mrf.mxu0
      %1700 = vmatprep.mubr.bf16.mxu0 0
      %1701 = vmatmul.mubr.bf16.gmra.mxu0 %v1530
      %v1702 = vpop.f32.mrf.mxu0
      %v1703 = vadd.f32 0.0, %v1702
      %v1704 = vpop.f32.mrf.mxu0
      %v1705 = vpop.f32.mrf.mxu0
      %v1706 = vadd.f32 0.0, %v1705
      %v1707 = vpop.f32.mrf.mxu0
      %1708 = vdwg.mxu0
      %v1709 = vadd.f32 %v1264, %v1567
      %v1710 = vadd.f32 %v1265, %v1570
      %v1711 = vadd.f32 %v1266, %v1575
      %v1712 = vadd.f32 %v1267, %v1578
      %v1713 = vadd.f32 %v1268, %v1583
      %v1714 = vadd.f32 %v1269, %v1586
      %v1715 = vadd.f32 %v1270, %v1591
      %v1716 = vadd.f32 %v1271, %v1594
      %v1717 = vadd.f32 %v1272, %v1599
      %v1718 = vadd.f32 %v1273, %v1602
      %v1719 = vadd.f32 %v1274, %v1607
      %v1720 = vadd.f32 %v1275, %v1610
      %v1721 = vadd.f32 %v1276, %v1615
      %v1722 = vadd.f32 %v1277, %v1618
      %v1723 = vadd.f32 %v1278, %v1623
      %v1724 = vadd.f32 %v1279, %v1626
      %v1725 = vadd.f32 %v1280, %v1631
      %v1726 = vadd.f32 %v1281, %v1634
      %v1727 = vadd.f32 %v1282, %v1639
      %v1728 = vadd.f32 %v1283, %v1642
      %v1729 = vadd.f32 %v1284, %v1647
      %v1730 = vadd.f32 %v1285, %v1650
      %v1731 = vadd.f32 %v1286, %v1655
      %v1732 = vadd.f32 %v1287, %v1658
      %v1733 = vadd.f32 %v1288, %v1663
      %v1734 = vadd.f32 %v1289, %v1666
      %v1735 = vadd.f32 %v1290, %v1671
      %v1736 = vadd.f32 %v1291, %v1674
      %v1737 = vadd.f32 %v1292, %v1679
      %v1738 = vadd.f32 %v1293, %v1682
      %v1739 = vadd.f32 %v1294, %v1687
      %v1740 = vadd.f32 %v1295, %v1690
      %v1741 = vadd.f32 %v1296, %v1695
      %v1742 = vadd.f32 %v1297, %v1698
      %v1743 = vadd.f32 %v1298, %v1703
      %v1744 = vadd.f32 %v1299, %v1706
      %v1745 = vld [vmem:[%s206 + $0x8] sm:$0xe]
      %v1746 = vld [vmem:[%s206 + $0xc] sm:$0xf]
      %v1747 = vld [vmem:[%s206 + $0x10] sm:$0xf]
      %v1748 = vld [vmem:[%s206 + $0x14] sm:$0xf]
      %v1749 = vld [vmem:[%s206 + $0x18] sm:$0xf]
      %v1750 = vld [vmem:[%s206 + $0x1c] sm:$0xf]
      %v1751 = vld [vmem:[%s206 + $0x20] sm:$0xf]
      %v1752 = vld [vmem:[%s206 + $0x24] sm:$0xf]
      %v1753 = vld [vmem:[%s206 + $0x28] sm:$0xf]
      %v1754 = vld [vmem:[%s206 + $0x2c] sm:$0xf]
      %v1755 = vld [vmem:[%s206 + $0x30] sm:$0xf]
      %v1756 = vld [vmem:[%s206 + $0x34] sm:$0xf]
      %v1757 = vld [vmem:[%s206 + $0x38] sm:$0xf]
      %v1758 = vld [vmem:[%s206 + $0x3c] sm:$0xf]
      %v1759 = vld [vmem:[%s206 + $0x40] sm:$0xf]
      %v1760 = vld [vmem:[%s206 + $0x44] sm:$0xf]
      %v1761 = vld [vmem:[%s206 + $0x48] sm:$0xf]
      %v1762 = vld [vmem:[%s206 + $0x4c] sm:$0xf]
      %v1763 = vld [vmem:[%s206 + $0x50] sm:$0xf]
      %v1764 = vld [vmem:[%s206 + $0x54] sm:$0xf]
      %v1765 = vld [vmem:[%s206 + $0x58] sm:$0xf]
      %v1766 = vld [vmem:[%s206 + $0x5c] sm:$0xf]
      %v1767 = vld [vmem:[%s206 + $0x60] sm:$0xf]
      %v1768 = vld [vmem:[%s206 + $0x64] sm:$0xf]
      %v1769 = vld [vmem:[%s206 + $0x68] sm:$0xf]
      %v1770 = vld [vmem:[%s206 + $0x6c] sm:$0xf]
      %v1771 = vld [vmem:[%s206 + $0x70] sm:$0xf]
      %v1772 = vld [vmem:[%s206 + $0x74] sm:$0xf]
      %v1773 = vld [vmem:[%s206 + $0x78] sm:$0xf]
      %v1774 = vld [vmem:[%s206 + $0x7c] sm:$0xf]
      %v1775 = vld [vmem:[%s206 + $0x80] sm:$0xf]
      %v1776 = vld [vmem:[%s206 + $0x84] sm:$0xf]
      %v1777 = vld [vmem:[%s206 + $0x88] sm:$0xf]
      %v1778 = vld [vmem:[%s206 + $0x8c] sm:$0xf]
      %v1779 = vld [vmem:[%s206 + $0x90] sm:$0xf]
      %v1780 = vld [vmem:[%s206 + $0x94] sm:$0xf]
      %v1781 = vld [vmem:[%s206 + $0x98] sm:$0x1]
      %s1782 = scalar_lea.vmem %s210, 64
      %v1783 = vld [vmem:[%s1782] sm:$0xf]
      %v1784 = vld [vmem:[%s1782 + $0x4] sm:$0xf]
      %v1785 = vld [vmem:[%s1782 + $0x8] sm:$0xf]
      %v1786 = vld [vmem:[%s1782 + $0xc] sm:$0xf]
      %v1824 = vunpack.c.l.b16 %v1745
      %v1825 = vunpack.c.l.b16 %v1746
      %v1826 = vunpack.c.l.b16 %v1747
      %v1827 = vunpack.c.l.b16 %v1748
      %v1828 = vunpack.c.l.b16 %v1749
      %v1829 = vunpack.c.l.b16 %v1750
      %v1830 = vunpack.c.l.b16 %v1751
      %v1831 = vunpack.c.l.b16 %v1752
      %v1832 = vunpack.c.l.b16 %v1753
      %v1833 = vunpack.c.l.b16 %v1754
      %v1834 = vunpack.c.l.b16 %v1755
      %v1835 = vunpack.c.l.b16 %v1756
      %v1836 = vunpack.c.l.b16 %v1757
      %v1837 = vunpack.c.l.b16 %v1758
      %v1838 = vunpack.c.l.b16 %v1759
      %v1839 = vunpack.c.l.b16 %v1760
      %v1840 = vunpack.c.l.b16 %v1761
      %v1841 = vunpack.c.l.b16 %v1762
      %v1842 = vunpack.c.l.b16 %v1763
      %v1843 = vunpack.c.l.b16 %v1764
      %v1844 = vunpack.c.l.b16 %v1765
      %v1845 = vunpack.c.l.b16 %v1766
      %v1846 = vunpack.c.l.b16 %v1767
      %v1847 = vunpack.c.l.b16 %v1768
      %v1848 = vunpack.c.l.b16 %v1769
      %v1849 = vunpack.c.l.b16 %v1770
      %v1850 = vunpack.c.l.b16 %v1771
      %v1851 = vunpack.c.l.b16 %v1772
      %v1852 = vunpack.c.l.b16 %v1773
      %v1853 = vunpack.c.l.b16 %v1774
      %v1854 = vunpack.c.l.b16 %v1775
      %v1855 = vunpack.c.l.b16 %v1776
      %v1856 = vunpack.c.l.b16 %v1777
      %v1857 = vunpack.c.l.b16 %v1778
      %v1858 = vunpack.c.l.b16 %v1779
      %v1859 = vunpack.c.l.b16 %v1780
      %v1860 = vunpack.c.l.b16 %v1781
      %v1861 = vpack.c.b16 %v1825, %v1824
      %v1862 = vpack.c.b16 %v1827, %v1826
      %v1863 = vpack.c.b16 %v1829, %v1828
      %v1864 = vpack.c.b16 %v1831, %v1830
      %v1865 = vpack.c.b16 %v1833, %v1832
      %v1866 = vpack.c.b16 %v1835, %v1834
      %v1867 = vpack.c.b16 %v1837, %v1836
      %v1868 = vpack.c.b16 %v1839, %v1838
      %v1869 = vpack.c.b16 %v1841, %v1840
      %v1870 = vpack.c.b16 %v1843, %v1842
      %v1871 = vpack.c.b16 %v1845, %v1844
      %v1872 = vpack.c.b16 %v1847, %v1846
      %v1873 = vpack.c.b16 %v1849, %v1848
      %v1874 = vpack.c.b16 %v1851, %v1850
      %v1875 = vpack.c.b16 %v1853, %v1852
      %v1876 = vpack.c.b16 %v1855, %v1854
      %v1877 = vpack.c.b16 %v1857, %v1856
      %v1878 = vpack.c.b16 %v1859, %v1858
      %v1879 = vpack.c.b16 %v1860, %v1860
      %vm1880 = vsmask.f32 6400
      %v1882 = vshrl.u32 %v1861, 16
      %v1884 = vrot.slane %v1882, 1
      %v1885 = vshll.u32 %v1861, 16
      %v1887 = vrot.slane %v1885, 2
      %v1888 = vor.u32 %v1884, %v1887
      %v1890 = vshrl.u32 %v1862, 16
      %v1892 = vrot.slane %v1890, 1
      %v1893 = vshll.u32 %v1862, 16
      %v1895 = vrot.slane %v1893, 2
      %v1896 = vor.u32 %v1892, %v1895
      %v1897 = vsel %vm1880, %v1888, %v1896
      %v1899 = vshrl.u32 %v1863, 16
      %v1901 = vrot.slane %v1899, 1
      %v1902 = vshll.u32 %v1863, 16
      %v1904 = vrot.slane %v1902, 2
      %v1905 = vor.u32 %v1901, %v1904
      %v1906 = vsel %vm1880, %v1896, %v1905
      %v1908 = vshrl.u32 %v1864, 16
      %v1910 = vrot.slane %v1908, 1
      %v1911 = vshll.u32 %v1864, 16
      %v1913 = vrot.slane %v1911, 2
      %v1914 = vor.u32 %v1910, %v1913
      %v1915 = vsel %vm1880, %v1905, %v1914
      %v1917 = vshrl.u32 %v1865, 16
      %v1919 = vrot.slane %v1917, 1
      %v1920 = vshll.u32 %v1865, 16
      %v1922 = vrot.slane %v1920, 2
      %v1923 = vor.u32 %v1919, %v1922
      %v1924 = vsel %vm1880, %v1914, %v1923
      %v1926 = vshrl.u32 %v1866, 16
      %v1928 = vrot.slane %v1926, 1
      %v1929 = vshll.u32 %v1866, 16
      %v1931 = vrot.slane %v1929, 2
      %v1932 = vor.u32 %v1928, %v1931
      %v1933 = vsel %vm1880, %v1923, %v1932
      %v1935 = vshrl.u32 %v1867, 16
      %v1937 = vrot.slane %v1935, 1
      %v1938 = vshll.u32 %v1867, 16
      %v1940 = vrot.slane %v1938, 2
      %v1941 = vor.u32 %v1937, %v1940
      %v1942 = vsel %vm1880, %v1932, %v1941
      %v1944 = vshrl.u32 %v1868, 16
      %v1946 = vrot.slane %v1944, 1
      %v1947 = vshll.u32 %v1868, 16
      %v1949 = vrot.slane %v1947, 2
      %v1950 = vor.u32 %v1946, %v1949
      %v1951 = vsel %vm1880, %v1941, %v1950
      %v1953 = vshrl.u32 %v1869, 16
      %v1955 = vrot.slane %v1953, 1
      %v1956 = vshll.u32 %v1869, 16
      %v1958 = vrot.slane %v1956, 2
      %v1959 = vor.u32 %v1955, %v1958
      %v1960 = vsel %vm1880, %v1950, %v1959
      %v1962 = vshrl.u32 %v1870, 16
      %v1964 = vrot.slane %v1962, 1
      %v1965 = vshll.u32 %v1870, 16
      %v1967 = vrot.slane %v1965, 2
      %v1968 = vor.u32 %v1964, %v1967
      %v1969 = vsel %vm1880, %v1959, %v1968
      %v1971 = vshrl.u32 %v1871, 16
      %v1973 = vrot.slane %v1971, 1
      %v1974 = vshll.u32 %v1871, 16
      %v1976 = vrot.slane %v1974, 2
      %v1977 = vor.u32 %v1973, %v1976
      %v1978 = vsel %vm1880, %v1968, %v1977
      %v1980 = vshrl.u32 %v1872, 16
      %v1982 = vrot.slane %v1980, 1
      %v1983 = vshll.u32 %v1872, 16
      %v1985 = vrot.slane %v1983, 2
      %v1986 = vor.u32 %v1982, %v1985
      %v1987 = vsel %vm1880, %v1977, %v1986
      %v1989 = vshrl.u32 %v1873, 16
      %v1991 = vrot.slane %v1989, 1
      %v1992 = vshll.u32 %v1873, 16
      %v1994 = vrot.slane %v1992, 2
      %v1995 = vor.u32 %v1991, %v1994
      %v1996 = vsel %vm1880, %v1986, %v1995
      %v1998 = vshrl.u32 %v1874, 16
      %v2000 = vrot.slane %v1998, 1
      %v2001 = vshll.u32 %v1874, 16
      %v2003 = vrot.slane %v2001, 2
      %v2004 = vor.u32 %v2000, %v2003
      %v2005 = vsel %vm1880, %v1995, %v2004
      %v2007 = vshrl.u32 %v1875, 16
      %v2009 = vrot.slane %v2007, 1
      %v2010 = vshll.u32 %v1875, 16
      %v2012 = vrot.slane %v2010, 2
      %v2013 = vor.u32 %v2009, %v2012
      %v2014 = vsel %vm1880, %v2004, %v2013
      %v2016 = vshrl.u32 %v1876, 16
      %v2018 = vrot.slane %v2016, 1
      %v2019 = vshll.u32 %v1876, 16
      %v2021 = vrot.slane %v2019, 2
      %v2022 = vor.u32 %v2018, %v2021
      %v2023 = vsel %vm1880, %v2013, %v2022
      %v2025 = vshrl.u32 %v1877, 16
      %v2027 = vrot.slane %v2025, 1
      %v2028 = vshll.u32 %v1877, 16
      %v2030 = vrot.slane %v2028, 2
      %v2031 = vor.u32 %v2027, %v2030
      %v2032 = vsel %vm1880, %v2022, %v2031
      %v2034 = vshrl.u32 %v1878, 16
      %v2036 = vrot.slane %v2034, 1
      %v2037 = vshll.u32 %v1878, 16
      %v2039 = vrot.slane %v2037, 2
      %v2040 = vor.u32 %v2036, %v2039
      %v2041 = vsel %vm1880, %v2031, %v2040
      %v2043 = vshll.u32 %v1879, 16
      %v2045 = vrot.slane %v2043, 2
      %v2046 = vsel %vm1880, %v2040, %v2045
      %v2051 = vunpack.c.l.b16 %v1783
      %v2052 = vunpack.c.l.b16 %v1784
      %v2053 = vunpack.c.l.b16 %v1785
      %v2054 = vunpack.c.l.b16 %v1786
      %v2055 = vpack.c.b16 %v2052, %v2051
      %v2056 = vpack.c.b16 %v2054, %v2053
      %v2060 = vsel %vm515, %v1897, 0
      %v2063 = vsel %vm515, %v1906, 0
      %v2066 = vsel %vm515, %v1915, 0
      %v2069 = vsel %vm515, %v1924, 0
      %v2072 = vsel %vm515, %v1933, 0
      %v2075 = vsel %vm515, %v1942, 0
      %v2078 = vsel %vm515, %v1951, 0
      %v2081 = vsel %vm515, %v1960, 0
      %v2084 = vsel %vm515, %v1969, 0
      %v2087 = vsel %vm515, %v1978, 0
      %v2090 = vsel %vm515, %v1987, 0
      %v2093 = vsel %vm515, %v1996, 0
      %v2096 = vsel %vm515, %v2005, 0
      %v2099 = vsel %vm515, %v2014, 0
      %v2102 = vsel %vm515, %v2023, 0
      %v2105 = vsel %vm515, %v2032, 0
      %v2108 = vsel %vm515, %v2041, 0
      %v2111 = vsel %vm515, %v2046, 0
      %2113 = vmatprep.subr.bf16.mxu0 0
      %2114 = vmatpush1.bf16.msra.mxu0 0
      %2115 = vmatprep.subr.bf16.mxu0 0
      %2116 = vmatpush1.bf16.msra.mxu0 0
      %2117 = vmatprep.subr.bf16.mxu0 0
      %2118 = vmatpush1.bf16.msra.mxu0 0
      %2119 = vmatprep.subr.bf16.mxu0 0
      %2120 = vmatpush1.bf16.msra.mxu0 0
      %2121 = vmatprep.subr.bf16.mxu0 0
      %2122 = vmatpush1.bf16.msra.mxu0 0
      %2123 = vmatprep.subr.bf16.mxu0 0
      %2124 = vmatpush1.bf16.msra.mxu0 0
      %2125 = vmatprep.subr.bf16.mxu0 0
      %2126 = vmatpush1.bf16.msra.mxu0 %v2056
      %2127 = vmatprep.subr.bf16.mxu0 0
      %2128 = vmatpush1.bf16.msra.mxu0 %v2055
      %2129 = vmatprep.subr.bf16.mxu0 0
      %2130 = vmatpush2.bf16.msra.mxu0 0
      %2131 = vmatprep.subr.bf16.mxu0 0
      %2132 = vmatpush2.bf16.msra.mxu0 0
      %2133 = vmatprep.subr.bf16.mxu0 0
      %2134 = vmatpush2.bf16.msra.mxu0 0
      %2135 = vmatprep.subr.bf16.mxu0 0
      %2136 = vmatpush2.bf16.msra.mxu0 0
      %2137 = vmatprep.subr.bf16.mxu0 0
      %2138 = vmatpush2.bf16.msra.mxu0 0
      %2139 = vmatprep.subr.bf16.mxu0 0
      %2140 = vmatpush2.bf16.msra.mxu0 0
      %2141 = vmatprep.subr.bf16.mxu0 0
      %2142 = vmatpush2.bf16.msra.mxu0 0
      %2143 = vmatprep.subr.bf16.mxu0 0
      %2144 = vmatpush2.bf16.msra.mxu0 0
      %2145 = vmatprep.mubr.bf16.mxu0 0
      %2146 = vmatmul.mubr.bf16.gmra.mxu0 %v2060
      %v2147 = vpop.f32.mrf.mxu0
      %v2148 = vadd.f32 0.0, %v2147
      %v2149 = vpop.f32.mrf.mxu0
      %v2150 = vpop.f32.mrf.mxu0
      %v2151 = vadd.f32 0.0, %v2150
      %v2152 = vpop.f32.mrf.mxu0
      %2153 = vmatprep.mubr.bf16.mxu0 0
      %2154 = vmatmul.mubr.bf16.gmra.mxu0 %v2063
      %v2155 = vpop.f32.mrf.mxu0
      %v2156 = vadd.f32 0.0, %v2155
      %v2157 = vpop.f32.mrf.mxu0
      %v2158 = vpop.f32.mrf.mxu0
      %v2159 = vadd.f32 0.0, %v2158
      %v2160 = vpop.f32.mrf.mxu0
      %2161 = vmatprep.mubr.bf16.mxu0 0
      %2162 = vmatmul.mubr.bf16.gmra.mxu0 %v2066
      %v2163 = vpop.f32.mrf.mxu0
      %v2164 = vadd.f32 0.0, %v2163
      %v2165 = vpop.f32.mrf.mxu0
      %v2166 = vpop.f32.mrf.mxu0
      %v2167 = vadd.f32 0.0, %v2166
      %v2168 = vpop.f32.mrf.mxu0
      %2169 = vmatprep.mubr.bf16.mxu0 0
      %2170 = vmatmul.mubr.bf16.gmra.mxu0 %v2069
      %v2171 = vpop.f32.mrf.mxu0
      %v2172 = vadd.f32 0.0, %v2171
      %v2173 = vpop.f32.mrf.mxu0
      %v2174 = vpop.f32.mrf.mxu0
      %v2175 = vadd.f32 0.0, %v2174
      %v2176 = vpop.f32.mrf.mxu0
      %2177 = vmatprep.mubr.bf16.mxu0 0
      %2178 = vmatmul.mubr.bf16.gmra.mxu0 %v2072
      %v2179 = vpop.f32.mrf.mxu0
      %v2180 = vadd.f32 0.0, %v2179
      %v2181 = vpop.f32.mrf.mxu0
      %v2182 = vpop.f32.mrf.mxu0
      %v2183 = vadd.f32 0.0, %v2182
      %v2184 = vpop.f32.mrf.mxu0
      %2185 = vmatprep.mubr.bf16.mxu0 0
      %2186 = vmatmul.mubr.bf16.gmra.mxu0 %v2075
      %v2187 = vpop.f32.mrf.mxu0
      %v2188 = vadd.f32 0.0, %v2187
      %v2189 = vpop.f32.mrf.mxu0
      %v2190 = vpop.f32.mrf.mxu0
      %v2191 = vadd.f32 0.0, %v2190
      %v2192 = vpop.f32.mrf.mxu0
      %2193 = vmatprep.mubr.bf16.mxu0 0
      %2194 = vmatmul.mubr.bf16.gmra.mxu0 %v2078
      %v2195 = vpop.f32.mrf.mxu0
      %v2196 = vadd.f32 0.0, %v2195
      %v2197 = vpop.f32.mrf.mxu0
      %v2198 = vpop.f32.mrf.mxu0
      %v2199 = vadd.f32 0.0, %v2198
      %v2200 = vpop.f32.mrf.mxu0
      %2201 = vmatprep.mubr.bf16.mxu0 0
      %2202 = vmatmul.mubr.bf16.gmra.mxu0 %v2081
      %v2203 = vpop.f32.mrf.mxu0
      %v2204 = vadd.f32 0.0, %v2203
      %v2205 = vpop.f32.mrf.mxu0
      %v2206 = vpop.f32.mrf.mxu0
      %v2207 = vadd.f32 0.0, %v2206
      %v2208 = vpop.f32.mrf.mxu0
      %2209 = vmatprep.mubr.bf16.mxu0 0
      %2210 = vmatmul.mubr.bf16.gmra.mxu0 %v2084
      %v2211 = vpop.f32.mrf.mxu0
      %v2212 = vadd.f32 0.0, %v2211
      %v2213 = vpop.f32.mrf.mxu0
      %v2214 = vpop.f32.mrf.mxu0
      %v2215 = vadd.f32 0.0, %v2214
      %v2216 = vpop.f32.mrf.mxu0
      %2217 = vmatprep.mubr.bf16.mxu0 0
      %2218 = vmatmul.mubr.bf16.gmra.mxu0 %v2087
      %v2219 = vpop.f32.mrf.mxu0
      %v2220 = vadd.f32 0.0, %v2219
      %v2221 = vpop.f32.mrf.mxu0
      %v2222 = vpop.f32.mrf.mxu0
      %v2223 = vadd.f32 0.0, %v2222
      %v2224 = vpop.f32.mrf.mxu0
      %2225 = vmatprep.mubr.bf16.mxu0 0
      %2226 = vmatmul.mubr.bf16.gmra.mxu0 %v2090
      %v2227 = vpop.f32.mrf.mxu0
      %v2228 = vadd.f32 0.0, %v2227
      %v2229 = vpop.f32.mrf.mxu0
      %v2230 = vpop.f32.mrf.mxu0
      %v2231 = vadd.f32 0.0, %v2230
      %v2232 = vpop.f32.mrf.mxu0
      %2233 = vmatprep.mubr.bf16.mxu0 0
      %2234 = vmatmul.mubr.bf16.gmra.mxu0 %v2093
      %v2235 = vpop.f32.mrf.mxu0
      %v2236 = vadd.f32 0.0, %v2235
      %v2237 = vpop.f32.mrf.mxu0
      %v2238 = vpop.f32.mrf.mxu0
      %v2239 = vadd.f32 0.0, %v2238
      %v2240 = vpop.f32.mrf.mxu0
      %2241 = vmatprep.mubr.bf16.mxu0 0
      %2242 = vmatmul.mubr.bf16.gmra.mxu0 %v2096
      %v2243 = vpop.f32.mrf.mxu0
      %v2244 = vadd.f32 0.0, %v2243
      %v2245 = vpop.f32.mrf.mxu0
      %v2246 = vpop.f32.mrf.mxu0
      %v2247 = vadd.f32 0.0, %v2246
      %v2248 = vpop.f32.mrf.mxu0
      %2249 = vmatprep.mubr.bf16.mxu0 0
      %2250 = vmatmul.mubr.bf16.gmra.mxu0 %v2099
      %v2251 = vpop.f32.mrf.mxu0
      %v2252 = vadd.f32 0.0, %v2251
      %v2253 = vpop.f32.mrf.mxu0
      %v2254 = vpop.f32.mrf.mxu0
      %v2255 = vadd.f32 0.0, %v2254
      %v2256 = vpop.f32.mrf.mxu0
      %2257 = vmatprep.mubr.bf16.mxu0 0
      %2258 = vmatmul.mubr.bf16.gmra.mxu0 %v2102
      %v2259 = vpop.f32.mrf.mxu0
      %v2260 = vadd.f32 0.0, %v2259
      %v2261 = vpop.f32.mrf.mxu0
      %v2262 = vpop.f32.mrf.mxu0
      %v2263 = vadd.f32 0.0, %v2262
      %v2264 = vpop.f32.mrf.mxu0
      %2265 = vmatprep.mubr.bf16.mxu0 0
      %2266 = vmatmul.mubr.bf16.gmra.mxu0 %v2105
      %v2267 = vpop.f32.mrf.mxu0
      %v2268 = vadd.f32 0.0, %v2267
      %v2269 = vpop.f32.mrf.mxu0
      %v2270 = vpop.f32.mrf.mxu0
      %v2271 = vadd.f32 0.0, %v2270
      %v2272 = vpop.f32.mrf.mxu0
      %2273 = vmatprep.mubr.bf16.mxu0 0
      %2274 = vmatmul.mubr.bf16.gmra.mxu0 %v2108
      %v2275 = vpop.f32.mrf.mxu0
      %v2276 = vadd.f32 0.0, %v2275
      %v2277 = vpop.f32.mrf.mxu0
      %v2278 = vpop.f32.mrf.mxu0
      %v2279 = vadd.f32 0.0, %v2278
      %v2280 = vpop.f32.mrf.mxu0
      %2281 = vmatprep.mubr.bf16.mxu0 0
      %2282 = vmatmul.mubr.bf16.gmra.mxu0 %v2111
      %v2283 = vpop.f32.mrf.mxu0
      %v2284 = vadd.f32 0.0, %v2283
      %v2285 = vpop.f32.mrf.mxu0
      %v2286 = vpop.f32.mrf.mxu0
      %v2287 = vadd.f32 0.0, %v2286
      %v2288 = vpop.f32.mrf.mxu0
      %2289 = vdwg.mxu0
      %v2290 = vadd.f32 %v1709, %v2148
      %v2291 = vadd.f32 %v1710, %v2151
      %v2292 = vadd.f32 %v1711, %v2156
      %v2293 = vadd.f32 %v1712, %v2159
      %v2294 = vadd.f32 %v1713, %v2164
      %v2295 = vadd.f32 %v1714, %v2167
      %v2296 = vadd.f32 %v1715, %v2172
      %v2297 = vadd.f32 %v1716, %v2175
      %v2298 = vadd.f32 %v1717, %v2180
      %v2299 = vadd.f32 %v1718, %v2183
      %v2300 = vadd.f32 %v1719, %v2188
      %v2301 = vadd.f32 %v1720, %v2191
      %v2302 = vadd.f32 %v1721, %v2196
      %v2303 = vadd.f32 %v1722, %v2199
      %v2304 = vadd.f32 %v1723, %v2204
      %v2305 = vadd.f32 %v1724, %v2207
      %v2306 = vadd.f32 %v1725, %v2212
      %v2307 = vadd.f32 %v1726, %v2215
      %v2308 = vadd.f32 %v1727, %v2220
      %v2309 = vadd.f32 %v1728, %v2223
      %v2310 = vadd.f32 %v1729, %v2228
      %v2311 = vadd.f32 %v1730, %v2231
      %v2312 = vadd.f32 %v1731, %v2236
      %v2313 = vadd.f32 %v1732, %v2239
      %v2314 = vadd.f32 %v1733, %v2244
      %v2315 = vadd.f32 %v1734, %v2247
      %v2316 = vadd.f32 %v1735, %v2252
      %v2317 = vadd.f32 %v1736, %v2255
      %v2318 = vadd.f32 %v1737, %v2260
      %v2319 = vadd.f32 %v1738, %v2263
      %v2320 = vadd.f32 %v1739, %v2268
      %v2321 = vadd.f32 %v1740, %v2271
      %v2322 = vadd.f32 %v1741, %v2276
      %v2323 = vadd.f32 %v1742, %v2279
      %v2324 = vadd.f32 %v1743, %v2284
      %v2325 = vadd.f32 %v1744, %v2287
      %v2326 = vld [vmem:[%s206 + $0x8] sm:$0xc]
      %s2327 = scalar_lea.vmem %s210, 80
      %v2328 = vld [vmem:[%s2327] sm:$0xf]
      %v2329 = vld [vmem:[%s2327 + $0x4] sm:$0xf]
      %v2330 = vld [vmem:[%s2327 + $0x8] sm:$0xf]
      %v2331 = vld [vmem:[%s2327 + $0xc] sm:$0xf]
      %v2333 = vunpack.c.l.b16 %v2326
      %v2334 = vpack.c.b16 %v1825, %v2333
      %vm2335 = vcmask 1045504
      %v2336 = vrot.slane %v2334, 2
      %v2337 = vrot.slane %v1862, 2
      %v2338 = vsel %vm2335, %v2336, %v2337
      %v2339 = vrot.slane %v1863, 2
      %v2340 = vsel %vm2335, %v2337, %v2339
      %v2341 = vrot.slane %v1864, 2
      %v2342 = vsel %vm2335, %v2339, %v2341
      %v2343 = vrot.slane %v1865, 2
      %v2344 = vsel %vm2335, %v2341, %v2343
      %v2345 = vrot.slane %v1866, 2
      %v2346 = vsel %vm2335, %v2343, %v2345
      %v2347 = vrot.slane %v1867, 2
      %v2348 = vsel %vm2335, %v2345, %v2347
      %v2349 = vrot.slane %v1868, 2
      %v2350 = vsel %vm2335, %v2347, %v2349
      %v2351 = vrot.slane %v1869, 2
      %v2352 = vsel %vm2335, %v2349, %v2351
      %v2353 = vrot.slane %v1870, 2
      %v2354 = vsel %vm2335, %v2351, %v2353
      %v2355 = vrot.slane %v1871, 2
      %v2356 = vsel %vm2335, %v2353, %v2355
      %v2357 = vrot.slane %v1872, 2
      %v2358 = vsel %vm2335, %v2355, %v2357
      %v2359 = vrot.slane %v1873, 2
      %v2360 = vsel %vm2335, %v2357, %v2359
      %v2361 = vrot.slane %v1874, 2
      %v2362 = vsel %vm2335, %v2359, %v2361
      %v2363 = vrot.slane %v1875, 2
      %v2364 = vsel %vm2335, %v2361, %v2363
      %v2365 = vrot.slane %v1876, 2
      %v2366 = vsel %vm2335, %v2363, %v2365
      %v2367 = vrot.slane %v1877, 2
      %v2368 = vsel %vm2335, %v2365, %v2367
      %v2369 = vrot.slane %v1878, 2
      %v2370 = vsel %vm2335, %v2367, %v2369
      %v2371 = vrot.slane %v1879, 2
      %v2372 = vsel %vm2335, %v2369, %v2371
      %v2377 = vunpack.c.l.b16 %v2328
      %v2378 = vunpack.c.l.b16 %v2329
      %v2379 = vunpack.c.l.b16 %v2330
      %v2380 = vunpack.c.l.b16 %v2331
      %v2381 = vpack.c.b16 %v2378, %v2377
      %v2382 = vpack.c.b16 %v2380, %v2379
      %v2386 = vsel %vm515, %v2338, 0
      %v2389 = vsel %vm515, %v2340, 0
      %v2392 = vsel %vm515, %v2342, 0
      %v2395 = vsel %vm515, %v2344, 0
      %v2398 = vsel %vm515, %v2346, 0
      %v2401 = vsel %vm515, %v2348, 0
      %v2404 = vsel %vm515, %v2350, 0
      %v2407 = vsel %vm515, %v2352, 0
      %v2410 = vsel %vm515, %v2354, 0
      %v2413 = vsel %vm515, %v2356, 0
      %v2416 = vsel %vm515, %v2358, 0
      %v2419 = vsel %vm515, %v2360, 0
      %v2422 = vsel %vm515, %v2362, 0
      %v2425 = vsel %vm515, %v2364, 0
      %v2428 = vsel %vm515, %v2366, 0
      %v2431 = vsel %vm515, %v2368, 0
      %v2434 = vsel %vm515, %v2370, 0
      %v2437 = vsel %vm515, %v2372, 0
      %2439 = vmatprep.subr.bf16.mxu0 0
      %2440 = vmatpush1.bf16.msra.mxu0 0
      %2441 = vmatprep.subr.bf16.mxu0 0
      %2442 = vmatpush1.bf16.msra.mxu0 0
      %2443 = vmatprep.subr.bf16.mxu0 0
      %2444 = vmatpush1.bf16.msra.mxu0 0
      %2445 = vmatprep.subr.bf16.mxu0 0
      %2446 = vmatpush1.bf16.msra.mxu0 0
      %2447 = vmatprep.subr.bf16.mxu0 0
      %2448 = vmatpush1.bf16.msra.mxu0 0
      %2449 = vmatprep.subr.bf16.mxu0 0
      %2450 = vmatpush1.bf16.msra.mxu0 0
      %2451 = vmatprep.subr.bf16.mxu0 0
      %2452 = vmatpush1.bf16.msra.mxu0 %v2382
      %2453 = vmatprep.subr.bf16.mxu0 0
      %2454 = vmatpush1.bf16.msra.mxu0 %v2381
      %2455 = vmatprep.subr.bf16.mxu0 0
      %2456 = vmatpush2.bf16.msra.mxu0 0
      %2457 = vmatprep.subr.bf16.mxu0 0
      %2458 = vmatpush2.bf16.msra.mxu0 0
      %2459 = vmatprep.subr.bf16.mxu0 0
      %2460 = vmatpush2.bf16.msra.mxu0 0
      %2461 = vmatprep.subr.bf16.mxu0 0
      %2462 = vmatpush2.bf16.msra.mxu0 0
      %2463 = vmatprep.subr.bf16.mxu0 0
      %2464 = vmatpush2.bf16.msra.mxu0 0
      %2465 = vmatprep.subr.bf16.mxu0 0
      %2466 = vmatpush2.bf16.msra.mxu0 0
      %2467 = vmatprep.subr.bf16.mxu0 0
      %2468 = vmatpush2.bf16.msra.mxu0 0
      %2469 = vmatprep.subr.bf16.mxu0 0
      %2470 = vmatpush2.bf16.msra.mxu0 0
      %2471 = vmatprep.mubr.bf16.mxu0 0
      %2472 = vmatmul.mubr.bf16.gmra.mxu0 %v2386
      %v2473 = vpop.f32.mrf.mxu0
      %v2474 = vadd.f32 0.0, %v2473
      %v2475 = vpop.f32.mrf.mxu0
      %v2476 = vpop.f32.mrf.mxu0
      %v2477 = vadd.f32 0.0, %v2476
      %v2478 = vpop.f32.mrf.mxu0
      %2479 = vmatprep.mubr.bf16.mxu0 0
      %2480 = vmatmul.mubr.bf16.gmra.mxu0 %v2389
      %v2481 = vpop.f32.mrf.mxu0
      %v2482 = vadd.f32 0.0, %v2481
      %v2483 = vpop.f32.mrf.mxu0
      %v2484 = vpop.f32.mrf.mxu0
      %v2485 = vadd.f32 0.0, %v2484
      %v2486 = vpop.f32.mrf.mxu0
      %2487 = vmatprep.mubr.bf16.mxu0 0
      %2488 = vmatmul.mubr.bf16.gmra.mxu0 %v2392
      %v2489 = vpop.f32.mrf.mxu0
      %v2490 = vadd.f32 0.0, %v2489
      %v2491 = vpop.f32.mrf.mxu0
      %v2492 = vpop.f32.mrf.mxu0
      %v2493 = vadd.f32 0.0, %v2492
      %v2494 = vpop.f32.mrf.mxu0
      %2495 = vmatprep.mubr.bf16.mxu0 0
      %2496 = vmatmul.mubr.bf16.gmra.mxu0 %v2395
      %v2497 = vpop.f32.mrf.mxu0
      %v2498 = vadd.f32 0.0, %v2497
      %v2499 = vpop.f32.mrf.mxu0
      %v2500 = vpop.f32.mrf.mxu0
      %v2501 = vadd.f32 0.0, %v2500
      %v2502 = vpop.f32.mrf.mxu0
      %2503 = vmatprep.mubr.bf16.mxu0 0
      %2504 = vmatmul.mubr.bf16.gmra.mxu0 %v2398
      %v2505 = vpop.f32.mrf.mxu0
      %v2506 = vadd.f32 0.0, %v2505
      %v2507 = vpop.f32.mrf.mxu0
      %v2508 = vpop.f32.mrf.mxu0
      %v2509 = vadd.f32 0.0, %v2508
      %v2510 = vpop.f32.mrf.mxu0
      %2511 = vmatprep.mubr.bf16.mxu0 0
      %2512 = vmatmul.mubr.bf16.gmra.mxu0 %v2401
      %v2513 = vpop.f32.mrf.mxu0
      %v2514 = vadd.f32 0.0, %v2513
      %v2515 = vpop.f32.mrf.mxu0
      %v2516 = vpop.f32.mrf.mxu0
      %v2517 = vadd.f32 0.0, %v2516
      %v2518 = vpop.f32.mrf.mxu0
      %2519 = vmatprep.mubr.bf16.mxu0 0
      %2520 = vmatmul.mubr.bf16.gmra.mxu0 %v2404
      %v2521 = vpop.f32.mrf.mxu0
      %v2522 = vadd.f32 0.0, %v2521
      %v2523 = vpop.f32.mrf.mxu0
      %v2524 = vpop.f32.mrf.mxu0
      %v2525 = vadd.f32 0.0, %v2524
      %v2526 = vpop.f32.mrf.mxu0
      %2527 = vmatprep.mubr.bf16.mxu0 0
      %2528 = vmatmul.mubr.bf16.gmra.mxu0 %v2407
      %v2529 = vpop.f32.mrf.mxu0
      %v2530 = vadd.f32 0.0, %v2529
      %v2531 = vpop.f32.mrf.mxu0
      %v2532 = vpop.f32.mrf.mxu0
      %v2533 = vadd.f32 0.0, %v2532
      %v2534 = vpop.f32.mrf.mxu0
      %2535 = vmatprep.mubr.bf16.mxu0 0
      %2536 = vmatmul.mubr.bf16.gmra.mxu0 %v2410
      %v2537 = vpop.f32.mrf.mxu0
      %v2538 = vadd.f32 0.0, %v2537
      %v2539 = vpop.f32.mrf.mxu0
      %v2540 = vpop.f32.mrf.mxu0
      %v2541 = vadd.f32 0.0, %v2540
      %v2542 = vpop.f32.mrf.mxu0
      %2543 = vmatprep.mubr.bf16.mxu0 0
      %2544 = vmatmul.mubr.bf16.gmra.mxu0 %v2413
      %v2545 = vpop.f32.mrf.mxu0
      %v2546 = vadd.f32 0.0, %v2545
      %v2547 = vpop.f32.mrf.mxu0
      %v2548 = vpop.f32.mrf.mxu0
      %v2549 = vadd.f32 0.0, %v2548
      %v2550 = vpop.f32.mrf.mxu0
      %2551 = vmatprep.mubr.bf16.mxu0 0
      %2552 = vmatmul.mubr.bf16.gmra.mxu0 %v2416
      %v2553 = vpop.f32.mrf.mxu0
      %v2554 = vadd.f32 0.0, %v2553
      %v2555 = vpop.f32.mrf.mxu0
      %v2556 = vpop.f32.mrf.mxu0
      %v2557 = vadd.f32 0.0, %v2556
      %v2558 = vpop.f32.mrf.mxu0
      %2559 = vmatprep.mubr.bf16.mxu0 0
      %2560 = vmatmul.mubr.bf16.gmra.mxu0 %v2419
      %v2561 = vpop.f32.mrf.mxu0
      %v2562 = vadd.f32 0.0, %v2561
      %v2563 = vpop.f32.mrf.mxu0
      %v2564 = vpop.f32.mrf.mxu0
      %v2565 = vadd.f32 0.0, %v2564
      %v2566 = vpop.f32.mrf.mxu0
      %2567 = vmatprep.mubr.bf16.mxu0 0
      %2568 = vmatmul.mubr.bf16.gmra.mxu0 %v2422
      %v2569 = vpop.f32.mrf.mxu0
      %v2570 = vadd.f32 0.0, %v2569
      %v2571 = vpop.f32.mrf.mxu0
      %v2572 = vpop.f32.mrf.mxu0
      %v2573 = vadd.f32 0.0, %v2572
      %v2574 = vpop.f32.mrf.mxu0
      %2575 = vmatprep.mubr.bf16.mxu0 0
      %2576 = vmatmul.mubr.bf16.gmra.mxu0 %v2425
      %v2577 = vpop.f32.mrf.mxu0
      %v2578 = vadd.f32 0.0, %v2577
      %v2579 = vpop.f32.mrf.mxu0
      %v2580 = vpop.f32.mrf.mxu0
      %v2581 = vadd.f32 0.0, %v2580
      %v2582 = vpop.f32.mrf.mxu0
      %2583 = vmatprep.mubr.bf16.mxu0 0
      %2584 = vmatmul.mubr.bf16.gmra.mxu0 %v2428
      %v2585 = vpop.f32.mrf.mxu0
      %v2586 = vadd.f32 0.0, %v2585
      %v2587 = vpop.f32.mrf.mxu0
      %v2588 = vpop.f32.mrf.mxu0
      %v2589 = vadd.f32 0.0, %v2588
      %v2590 = vpop.f32.mrf.mxu0
      %2591 = vmatprep.mubr.bf16.mxu0 0
      %2592 = vmatmul.mubr.bf16.gmra.mxu0 %v2431
      %v2593 = vpop.f32.mrf.mxu0
      %v2594 = vadd.f32 0.0, %v2593
      %v2595 = vpop.f32.mrf.mxu0
      %v2596 = vpop.f32.mrf.mxu0
      %v2597 = vadd.f32 0.0, %v2596
      %v2598 = vpop.f32.mrf.mxu0
      %2599 = vmatprep.mubr.bf16.mxu0 0
      %2600 = vmatmul.mubr.bf16.gmra.mxu0 %v2434
      %v2601 = vpop.f32.mrf.mxu0
      %v2602 = vadd.f32 0.0, %v2601
      %v2603 = vpop.f32.mrf.mxu0
      %v2604 = vpop.f32.mrf.mxu0
      %v2605 = vadd.f32 0.0, %v2604
      %v2606 = vpop.f32.mrf.mxu0
      %2607 = vmatprep.mubr.bf16.mxu0 0
      %2608 = vmatmul.mubr.bf16.gmra.mxu0 %v2437
      %v2609 = vpop.f32.mrf.mxu0
      %v2610 = vadd.f32 0.0, %v2609
      %v2611 = vpop.f32.mrf.mxu0
      %v2612 = vpop.f32.mrf.mxu0
      %v2613 = vadd.f32 0.0, %v2612
      %v2614 = vpop.f32.mrf.mxu0
      %2615 = vdwg.mxu0
      %v2616 = vadd.f32 %v2290, %v2474
      %v2617 = vadd.f32 %v2291, %v2477
      %v2618 = vadd.f32 %v2292, %v2482
      %v2619 = vadd.f32 %v2293, %v2485
      %v2620 = vadd.f32 %v2294, %v2490
      %v2621 = vadd.f32 %v2295, %v2493
      %v2622 = vadd.f32 %v2296, %v2498
      %v2623 = vadd.f32 %v2297, %v2501
      %v2624 = vadd.f32 %v2298, %v2506
      %v2625 = vadd.f32 %v2299, %v2509
      %v2626 = vadd.f32 %v2300, %v2514
      %v2627 = vadd.f32 %v2301, %v2517
      %v2628 = vadd.f32 %v2302, %v2522
      %v2629 = vadd.f32 %v2303, %v2525
      %v2630 = vadd.f32 %v2304, %v2530
      %v2631 = vadd.f32 %v2305, %v2533
      %v2632 = vadd.f32 %v2306, %v2538
      %v2633 = vadd.f32 %v2307, %v2541
      %v2634 = vadd.f32 %v2308, %v2546
      %v2635 = vadd.f32 %v2309, %v2549
      %v2636 = vadd.f32 %v2310, %v2554
      %v2637 = vadd.f32 %v2311, %v2557
      %v2638 = vadd.f32 %v2312, %v2562
      %v2639 = vadd.f32 %v2313, %v2565
      %v2640 = vadd.f32 %v2314, %v2570
      %v2641 = vadd.f32 %v2315, %v2573
      %v2642 = vadd.f32 %v2316, %v2578
      %v2643 = vadd.f32 %v2317, %v2581
      %v2644 = vadd.f32 %v2318, %v2586
      %v2645 = vadd.f32 %v2319, %v2589
      %v2646 = vadd.f32 %v2320, %v2594
      %v2647 = vadd.f32 %v2321, %v2597
      %v2648 = vadd.f32 %v2322, %v2602
      %v2649 = vadd.f32 %v2323, %v2605
      %v2650 = vadd.f32 %v2324, %v2610
      %v2651 = vadd.f32 %v2325, %v2613
      %v2652 = vld [vmem:[%s206 + $0x10] sm:$0xc]
      %v2653 = vld [vmem:[%s206 + $0x14] sm:$0xf]
      %v2654 = vld [vmem:[%s206 + $0x18] sm:$0xf]
      %v2655 = vld [vmem:[%s206 + $0x1c] sm:$0xf]
      %v2656 = vld [vmem:[%s206 + $0x20] sm:$0xf]
      %v2657 = vld [vmem:[%s206 + $0x24] sm:$0xf]
      %v2658 = vld [vmem:[%s206 + $0x28] sm:$0xf]
      %v2659 = vld [vmem:[%s206 + $0x2c] sm:$0xf]
      %v2660 = vld [vmem:[%s206 + $0x30] sm:$0xf]
      %v2661 = vld [vmem:[%s206 + $0x34] sm:$0xf]
      %v2662 = vld [vmem:[%s206 + $0x38] sm:$0xf]
      %v2663 = vld [vmem:[%s206 + $0x3c] sm:$0xf]
      %v2664 = vld [vmem:[%s206 + $0x40] sm:$0xf]
      %v2665 = vld [vmem:[%s206 + $0x44] sm:$0xf]
      %v2666 = vld [vmem:[%s206 + $0x48] sm:$0xf]
      %v2667 = vld [vmem:[%s206 + $0x4c] sm:$0xf]
      %v2668 = vld [vmem:[%s206 + $0x50] sm:$0xf]
      %v2669 = vld [vmem:[%s206 + $0x54] sm:$0xf]
      %v2670 = vld [vmem:[%s206 + $0x58] sm:$0xf]
      %v2671 = vld [vmem:[%s206 + $0x5c] sm:$0xf]
      %v2672 = vld [vmem:[%s206 + $0x60] sm:$0xf]
      %v2673 = vld [vmem:[%s206 + $0x64] sm:$0xf]
      %v2674 = vld [vmem:[%s206 + $0x68] sm:$0xf]
      %v2675 = vld [vmem:[%s206 + $0x6c] sm:$0xf]
      %v2676 = vld [vmem:[%s206 + $0x70] sm:$0xf]
      %v2677 = vld [vmem:[%s206 + $0x74] sm:$0xf]
      %v2678 = vld [vmem:[%s206 + $0x78] sm:$0xf]
      %v2679 = vld [vmem:[%s206 + $0x7c] sm:$0xf]
      %v2680 = vld [vmem:[%s206 + $0x80] sm:$0xf]
      %v2681 = vld [vmem:[%s206 + $0x84] sm:$0xf]
      %v2682 = vld [vmem:[%s206 + $0x88] sm:$0xf]
      %v2683 = vld [vmem:[%s206 + $0x8c] sm:$0xf]
      %v2684 = vld [vmem:[%s206 + $0x90] sm:$0xf]
      %v2685 = vld [vmem:[%s206 + $0x94] sm:$0xf]
      %v2686 = vld [vmem:[%s206 + $0x98] sm:$0xf]
      %v2687 = vld [vmem:[%s206 + $0x9c] sm:$0xf]
      %v2688 = vld [vmem:[%s206 + $0xa0] sm:$0x1]
      %s2689 = scalar_lea.vmem %s210, 96
      %v2690 = vld [vmem:[%s2689] sm:$0xf]
      %v2691 = vld [vmem:[%s2689 + $0x4] sm:$0xf]
      %v2692 = vld [vmem:[%s2689 + $0x8] sm:$0xf]
      %v2693 = vld [vmem:[%s2689 + $0xc] sm:$0xf]
      %v2731 = vunpack.c.l.b16 %v2652
      %v2732 = vunpack.c.l.b16 %v2653
      %v2733 = vunpack.c.l.b16 %v2654
      %v2734 = vunpack.c.l.b16 %v2655
      %v2735 = vunpack.c.l.b16 %v2656
      %v2736 = vunpack.c.l.b16 %v2657
      %v2737 = vunpack.c.l.b16 %v2658
      %v2738 = vunpack.c.l.b16 %v2659
      %v2739 = vunpack.c.l.b16 %v2660
      %v2740 = vunpack.c.l.b16 %v2661
      %v2741 = vunpack.c.l.b16 %v2662
      %v2742 = vunpack.c.l.b16 %v2663
      %v2743 = vunpack.c.l.b16 %v2664
      %v2744 = vunpack.c.l.b16 %v2665
      %v2745 = vunpack.c.l.b16 %v2666
      %v2746 = vunpack.c.l.b16 %v2667
      %v2747 = vunpack.c.l.b16 %v2668
      %v2748 = vunpack.c.l.b16 %v2669
      %v2749 = vunpack.c.l.b16 %v2670
      %v2750 = vunpack.c.l.b16 %v2671
      %v2751 = vunpack.c.l.b16 %v2672
      %v2752 = vunpack.c.l.b16 %v2673
      %v2753 = vunpack.c.l.b16 %v2674
      %v2754 = vunpack.c.l.b16 %v2675
      %v2755 = vunpack.c.l.b16 %v2676
      %v2756 = vunpack.c.l.b16 %v2677
      %v2757 = vunpack.c.l.b16 %v2678
      %v2758 = vunpack.c.l.b16 %v2679
      %v2759 = vunpack.c.l.b16 %v2680
      %v2760 = vunpack.c.l.b16 %v2681
      %v2761 = vunpack.c.l.b16 %v2682
      %v2762 = vunpack.c.l.b16 %v2683
      %v2763 = vunpack.c.l.b16 %v2684
      %v2764 = vunpack.c.l.b16 %v2685
      %v2765 = vunpack.c.l.b16 %v2686
      %v2766 = vunpack.c.l.b16 %v2687
      %v2767 = vunpack.c.l.b16 %v2688
      %v2768 = vpack.c.b16 %v2732, %v2731
      %v2769 = vpack.c.b16 %v2734, %v2733
      %v2770 = vpack.c.b16 %v2736, %v2735
      %v2771 = vpack.c.b16 %v2738, %v2737
      %v2772 = vpack.c.b16 %v2740, %v2739
      %v2773 = vpack.c.b16 %v2742, %v2741
      %v2774 = vpack.c.b16 %v2744, %v2743
      %v2775 = vpack.c.b16 %v2746, %v2745
      %v2776 = vpack.c.b16 %v2748, %v2747
      %v2777 = vpack.c.b16 %v2750, %v2749
      %v2778 = vpack.c.b16 %v2752, %v2751
      %v2779 = vpack.c.b16 %v2754, %v2753
      %v2780 = vpack.c.b16 %v2756, %v2755
      %v2781 = vpack.c.b16 %v2758, %v2757
      %v2782 = vpack.c.b16 %v2760, %v2759
      %v2783 = vpack.c.b16 %v2762, %v2761
      %v2784 = vpack.c.b16 %v2764, %v2763
      %v2785 = vpack.c.b16 %v2766, %v2765
      %v2786 = vpack.c.b16 %v2767, %v2767
      %v2787 = vrot.slane %v2768, 2
      %v2788 = vrot.slane %v2769, 2
      %v2789 = vsel %vm2335, %v2787, %v2788
      %v2790 = vrot.slane %v2770, 2
      %v2791 = vsel %vm2335, %v2788, %v2790
      %v2792 = vrot.slane %v2771, 2
      %v2793 = vsel %vm2335, %v2790, %v2792
      %v2794 = vrot.slane %v2772, 2
      %v2795 = vsel %vm2335, %v2792, %v2794
      %v2796 = vrot.slane %v2773, 2
      %v2797 = vsel %vm2335, %v2794, %v2796
      %v2798 = vrot.slane %v2774, 2
      %v2799 = vsel %vm2335, %v2796, %v2798
      %v2800 = vrot.slane %v2775, 2
      %v2801 = vsel %vm2335, %v2798, %v2800
      %v2802 = vrot.slane %v2776, 2
      %v2803 = vsel %vm2335, %v2800, %v2802
      %v2804 = vrot.slane %v2777, 2
      %v2805 = vsel %vm2335, %v2802, %v2804
      %v2806 = vrot.slane %v2778, 2
      %v2807 = vsel %vm2335, %v2804, %v2806
      %v2808 = vrot.slane %v2779, 2
      %v2809 = vsel %vm2335, %v2806, %v2808
      %v2810 = vrot.slane %v2780, 2
      %v2811 = vsel %vm2335, %v2808, %v2810
      %v2812 = vrot.slane %v2781, 2
      %v2813 = vsel %vm2335, %v2810, %v2812
      %v2814 = vrot.slane %v2782, 2
      %v2815 = vsel %vm2335, %v2812, %v2814
      %v2816 = vrot.slane %v2783, 2
      %v2817 = vsel %vm2335, %v2814, %v2816
      %v2818 = vrot.slane %v2784, 2
      %v2819 = vsel %vm2335, %v2816, %v2818
      %v2820 = vrot.slane %v2785, 2
      %v2821 = vsel %vm2335, %v2818, %v2820
      %v2822 = vrot.slane %v2786, 2
      %v2823 = vsel %vm2335, %v2820, %v2822
      %v2828 = vunpack.c.l.b16 %v2690
      %v2829 = vunpack.c.l.b16 %v2691
      %v2830 = vunpack.c.l.b16 %v2692
      %v2831 = vunpack.c.l.b16 %v2693
      %v2832 = vpack.c.b16 %v2829, %v2828
      %v2833 = vpack.c.b16 %v2831, %v2830
      %v2837 = vsel %vm515, %v2789, 0
      %v2840 = vsel %vm515, %v2791, 0
      %v2843 = vsel %vm515, %v2793, 0
      %v2846 = vsel %vm515, %v2795, 0
      %v2849 = vsel %vm515, %v2797, 0
      %v2852 = vsel %vm515, %v2799, 0
      %v2855 = vsel %vm515, %v2801, 0
      %v2858 = vsel %vm515, %v2803, 0
      %v2861 = vsel %vm515, %v2805, 0
      %v2864 = vsel %vm515, %v2807, 0
      %v2867 = vsel %vm515, %v2809, 0
      %v2870 = vsel %vm515, %v2811, 0
      %v2873 = vsel %vm515, %v2813, 0
      %v2876 = vsel %vm515, %v2815, 0
      %v2879 = vsel %vm515, %v2817, 0
      %v2882 = vsel %vm515, %v2819, 0
      %v2885 = vsel %vm515, %v2821, 0
      %v2888 = vsel %vm515, %v2823, 0
      %2890 = vmatprep.subr.bf16.mxu0 0
      %2891 = vmatpush1.bf16.msra.mxu0 0
      %2892 = vmatprep.subr.bf16.mxu0 0
      %2893 = vmatpush1.bf16.msra.mxu0 0
      %2894 = vmatprep.subr.bf16.mxu0 0
      %2895 = vmatpush1.bf16.msra.mxu0 0
      %2896 = vmatprep.subr.bf16.mxu0 0
      %2897 = vmatpush1.bf16.msra.mxu0 0
      %2898 = vmatprep.subr.bf16.mxu0 0
      %2899 = vmatpush1.bf16.msra.mxu0 0
      %2900 = vmatprep.subr.bf16.mxu0 0
      %2901 = vmatpush1.bf16.msra.mxu0 0
      %2902 = vmatprep.subr.bf16.mxu0 0
      %2903 = vmatpush1.bf16.msra.mxu0 %v2833
      %2904 = vmatprep.subr.bf16.mxu0 0
      %2905 = vmatpush1.bf16.msra.mxu0 %v2832
      %2906 = vmatprep.subr.bf16.mxu0 0
      %2907 = vmatpush2.bf16.msra.mxu0 0
      %2908 = vmatprep.subr.bf16.mxu0 0
      %2909 = vmatpush2.bf16.msra.mxu0 0
      %2910 = vmatprep.subr.bf16.mxu0 0
      %2911 = vmatpush2.bf16.msra.mxu0 0
      %2912 = vmatprep.subr.bf16.mxu0 0
      %2913 = vmatpush2.bf16.msra.mxu0 0
      %2914 = vmatprep.subr.bf16.mxu0 0
      %2915 = vmatpush2.bf16.msra.mxu0 0
      %2916 = vmatprep.subr.bf16.mxu0 0
      %2917 = vmatpush2.bf16.msra.mxu0 0
      %2918 = vmatprep.subr.bf16.mxu0 0
      %2919 = vmatpush2.bf16.msra.mxu0 0
      %2920 = vmatprep.subr.bf16.mxu0 0
      %2921 = vmatpush2.bf16.msra.mxu0 0
      %2922 = vmatprep.mubr.bf16.mxu0 0
      %2923 = vmatmul.mubr.bf16.gmra.mxu0 %v2837
      %v2924 = vpop.f32.mrf.mxu0
      %v2925 = vadd.f32 0.0, %v2924
      %v2926 = vpop.f32.mrf.mxu0
      %v2927 = vpop.f32.mrf.mxu0
      %v2928 = vadd.f32 0.0, %v2927
      %v2929 = vpop.f32.mrf.mxu0
      %2930 = vmatprep.mubr.bf16.mxu0 0
      %2931 = vmatmul.mubr.bf16.gmra.mxu0 %v2840
      %v2932 = vpop.f32.mrf.mxu0
      %v2933 = vadd.f32 0.0, %v2932
      %v2934 = vpop.f32.mrf.mxu0
      %v2935 = vpop.f32.mrf.mxu0
      %v2936 = vadd.f32 0.0, %v2935
      %v2937 = vpop.f32.mrf.mxu0
      %2938 = vmatprep.mubr.bf16.mxu0 0
      %2939 = vmatmul.mubr.bf16.gmra.mxu0 %v2843
      %v2940 = vpop.f32.mrf.mxu0
      %v2941 = vadd.f32 0.0, %v2940
      %v2942 = vpop.f32.mrf.mxu0
      %v2943 = vpop.f32.mrf.mxu0
      %v2944 = vadd.f32 0.0, %v2943
      %v2945 = vpop.f32.mrf.mxu0
      %2946 = vmatprep.mubr.bf16.mxu0 0
      %2947 = vmatmul.mubr.bf16.gmra.mxu0 %v2846
      %v2948 = vpop.f32.mrf.mxu0
      %v2949 = vadd.f32 0.0, %v2948
      %v2950 = vpop.f32.mrf.mxu0
      %v2951 = vpop.f32.mrf.mxu0
      %v2952 = vadd.f32 0.0, %v2951
      %v2953 = vpop.f32.mrf.mxu0
      %2954 = vmatprep.mubr.bf16.mxu0 0
      %2955 = vmatmul.mubr.bf16.gmra.mxu0 %v2849
      %v2956 = vpop.f32.mrf.mxu0
      %v2957 = vadd.f32 0.0, %v2956
      %v2958 = vpop.f32.mrf.mxu0
      %v2959 = vpop.f32.mrf.mxu0
      %v2960 = vadd.f32 0.0, %v2959
      %v2961 = vpop.f32.mrf.mxu0
      %2962 = vmatprep.mubr.bf16.mxu0 0
      %2963 = vmatmul.mubr.bf16.gmra.mxu0 %v2852
      %v2964 = vpop.f32.mrf.mxu0
      %v2965 = vadd.f32 0.0, %v2964
      %v2966 = vpop.f32.mrf.mxu0
      %v2967 = vpop.f32.mrf.mxu0
      %v2968 = vadd.f32 0.0, %v2967
      %v2969 = vpop.f32.mrf.mxu0
      %2970 = vmatprep.mubr.bf16.mxu0 0
      %2971 = vmatmul.mubr.bf16.gmra.mxu0 %v2855
      %v2972 = vpop.f32.mrf.mxu0
      %v2973 = vadd.f32 0.0, %v2972
      %v2974 = vpop.f32.mrf.mxu0
      %v2975 = vpop.f32.mrf.mxu0
      %v2976 = vadd.f32 0.0, %v2975
      %v2977 = vpop.f32.mrf.mxu0
      %2978 = vmatprep.mubr.bf16.mxu0 0
      %2979 = vmatmul.mubr.bf16.gmra.mxu0 %v2858
      %v2980 = vpop.f32.mrf.mxu0
      %v2981 = vadd.f32 0.0, %v2980
      %v2982 = vpop.f32.mrf.mxu0
      %v2983 = vpop.f32.mrf.mxu0
      %v2984 = vadd.f32 0.0, %v2983
      %v2985 = vpop.f32.mrf.mxu0
      %2986 = vmatprep.mubr.bf16.mxu0 0
      %2987 = vmatmul.mubr.bf16.gmra.mxu0 %v2861
      %v2988 = vpop.f32.mrf.mxu0
      %v2989 = vadd.f32 0.0, %v2988
      %v2990 = vpop.f32.mrf.mxu0
      %v2991 = vpop.f32.mrf.mxu0
      %v2992 = vadd.f32 0.0, %v2991
      %v2993 = vpop.f32.mrf.mxu0
      %2994 = vmatprep.mubr.bf16.mxu0 0
      %2995 = vmatmul.mubr.bf16.gmra.mxu0 %v2864
      %v2996 = vpop.f32.mrf.mxu0
      %v2997 = vadd.f32 0.0, %v2996
      %v2998 = vpop.f32.mrf.mxu0
      %v2999 = vpop.f32.mrf.mxu0
      %v3000 = vadd.f32 0.0, %v2999
      %v3001 = vpop.f32.mrf.mxu0
      %3002 = vmatprep.mubr.bf16.mxu0 0
      %3003 = vmatmul.mubr.bf16.gmra.mxu0 %v2867
      %v3004 = vpop.f32.mrf.mxu0
      %v3005 = vadd.f32 0.0, %v3004
      %v3006 = vpop.f32.mrf.mxu0
      %v3007 = vpop.f32.mrf.mxu0
      %v3008 = vadd.f32 0.0, %v3007
      %v3009 = vpop.f32.mrf.mxu0
      %3010 = vmatprep.mubr.bf16.mxu0 0
      %3011 = vmatmul.mubr.bf16.gmra.mxu0 %v2870
      %v3012 = vpop.f32.mrf.mxu0
      %v3013 = vadd.f32 0.0, %v3012
      %v3014 = vpop.f32.mrf.mxu0
      %v3015 = vpop.f32.mrf.mxu0
      %v3016 = vadd.f32 0.0, %v3015
      %v3017 = vpop.f32.mrf.mxu0
      %3018 = vmatprep.mubr.bf16.mxu0 0
      %3019 = vmatmul.mubr.bf16.gmra.mxu0 %v2873
      %v3020 = vpop.f32.mrf.mxu0
      %v3021 = vadd.f32 0.0, %v3020
      %v3022 = vpop.f32.mrf.mxu0
      %v3023 = vpop.f32.mrf.mxu0
      %v3024 = vadd.f32 0.0, %v3023
      %v3025 = vpop.f32.mrf.mxu0
      %3026 = vmatprep.mubr.bf16.mxu0 0
      %3027 = vmatmul.mubr.bf16.gmra.mxu0 %v2876
      %v3028 = vpop.f32.mrf.mxu0
      %v3029 = vadd.f32 0.0, %v3028
      %v3030 = vpop.f32.mrf.mxu0
      %v3031 = vpop.f32.mrf.mxu0
      %v3032 = vadd.f32 0.0, %v3031
      %v3033 = vpop.f32.mrf.mxu0
      %3034 = vmatprep.mubr.bf16.mxu0 0
      %3035 = vmatmul.mubr.bf16.gmra.mxu0 %v2879
      %v3036 = vpop.f32.mrf.mxu0
      %v3037 = vadd.f32 0.0, %v3036
      %v3038 = vpop.f32.mrf.mxu0
      %v3039 = vpop.f32.mrf.mxu0
      %v3040 = vadd.f32 0.0, %v3039
      %v3041 = vpop.f32.mrf.mxu0
      %3042 = vmatprep.mubr.bf16.mxu0 0
      %3043 = vmatmul.mubr.bf16.gmra.mxu0 %v2882
      %v3044 = vpop.f32.mrf.mxu0
      %v3045 = vadd.f32 0.0, %v3044
      %v3046 = vpop.f32.mrf.mxu0
      %v3047 = vpop.f32.mrf.mxu0
      %v3048 = vadd.f32 0.0, %v3047
      %v3049 = vpop.f32.mrf.mxu0
      %3050 = vmatprep.mubr.bf16.mxu0 0
      %3051 = vmatmul.mubr.bf16.gmra.mxu0 %v2885
      %v3052 = vpop.f32.mrf.mxu0
      %v3053 = vadd.f32 0.0, %v3052
      %v3054 = vpop.f32.mrf.mxu0
      %v3055 = vpop.f32.mrf.mxu0
      %v3056 = vadd.f32 0.0, %v3055
      %v3057 = vpop.f32.mrf.mxu0
      %3058 = vmatprep.mubr.bf16.mxu0 0
      %3059 = vmatmul.mubr.bf16.gmra.mxu0 %v2888
      %v3060 = vpop.f32.mrf.mxu0
      %v3061 = vadd.f32 0.0, %v3060
      %v3062 = vpop.f32.mrf.mxu0
      %v3063 = vpop.f32.mrf.mxu0
      %v3064 = vadd.f32 0.0, %v3063
      %v3065 = vpop.f32.mrf.mxu0
      %3066 = vdwg.mxu0
      %v3067 = vadd.f32 %v2616, %v2925
      %v3068 = vadd.f32 %v2617, %v2928
      %v3069 = vadd.f32 %v2618, %v2933
      %v3070 = vadd.f32 %v2619, %v2936
      %v3071 = vadd.f32 %v2620, %v2941
      %v3072 = vadd.f32 %v2621, %v2944
      %v3073 = vadd.f32 %v2622, %v2949
      %v3074 = vadd.f32 %v2623, %v2952
      %v3075 = vadd.f32 %v2624, %v2957
      %v3076 = vadd.f32 %v2625, %v2960
      %v3077 = vadd.f32 %v2626, %v2965
      %v3078 = vadd.f32 %v2627, %v2968
      %v3079 = vadd.f32 %v2628, %v2973
      %v3080 = vadd.f32 %v2629, %v2976
      %v3081 = vadd.f32 %v2630, %v2981
      %v3082 = vadd.f32 %v2631, %v2984
      %v3083 = vadd.f32 %v2632, %v2989
      %v3084 = vadd.f32 %v2633, %v2992
      %v3085 = vadd.f32 %v2634, %v2997
      %v3086 = vadd.f32 %v2635, %v3000
      %v3087 = vadd.f32 %v2636, %v3005
      %v3088 = vadd.f32 %v2637, %v3008
      %v3089 = vadd.f32 %v2638, %v3013
      %v3090 = vadd.f32 %v2639, %v3016
      %v3091 = vadd.f32 %v2640, %v3021
      %v3092 = vadd.f32 %v2641, %v3024
      %v3093 = vadd.f32 %v2642, %v3029
      %v3094 = vadd.f32 %v2643, %v3032
      %v3095 = vadd.f32 %v2644, %v3037
      %v3096 = vadd.f32 %v2645, %v3040
      %v3097 = vadd.f32 %v2646, %v3045
      %v3098 = vadd.f32 %v2647, %v3048
      %v3099 = vadd.f32 %v2648, %v3053
      %v3100 = vadd.f32 %v2649, %v3056
      %v3101 = vadd.f32 %v2650, %v3061
      %v3102 = vadd.f32 %v2651, %v3064
      %v3103 = vld [vmem:[%s206 + $0xa0] sm:$0x3]
      %s3104 = scalar_lea.vmem %s210, 112
      %v3105 = vld [vmem:[%s3104] sm:$0xf]
      %v3106 = vld [vmem:[%s3104 + $0x4] sm:$0xf]
      %v3107 = vld [vmem:[%s3104 + $0x8] sm:$0xf]
      %v3108 = vld [vmem:[%s3104 + $0xc] sm:$0xf]
      %v3110 = vunpack.c.l.b16 %v3103
      %v3111 = vpack.c.b16 %v3110, %v3110
      %vm3112 = vsmask.f32 5376
      %v3114 = vshrl.u32 %v2768, 16
      %v3116 = vrot.slane %v3114, 2
      %v3117 = vshll.u32 %v2768, 16
      %v3119 = vrot.slane %v3117, 3
      %v3120 = vor.u32 %v3116, %v3119
      %v3122 = vshrl.u32 %v2769, 16
      %v3124 = vrot.slane %v3122, 2
      %v3125 = vshll.u32 %v2769, 16
      %v3127 = vrot.slane %v3125, 3
      %v3128 = vor.u32 %v3124, %v3127
      %v3129 = vsel %vm3112, %v3120, %v3128
      %v3131 = vshrl.u32 %v2770, 16
      %v3133 = vrot.slane %v3131, 2
      %v3134 = vshll.u32 %v2770, 16
      %v3136 = vrot.slane %v3134, 3
      %v3137 = vor.u32 %v3133, %v3136
      %v3138 = vsel %vm3112, %v3128, %v3137
      %v3140 = vshrl.u32 %v2771, 16
      %v3142 = vrot.slane %v3140, 2
      %v3143 = vshll.u32 %v2771, 16
      %v3145 = vrot.slane %v3143, 3
      %v3146 = vor.u32 %v3142, %v3145
      %v3147 = vsel %vm3112, %v3137, %v3146
      %v3149 = vshrl.u32 %v2772, 16
      %v3151 = vrot.slane %v3149, 2
      %v3152 = vshll.u32 %v2772, 16
      %v3154 = vrot.slane %v3152, 3
      %v3155 = vor.u32 %v3151, %v3154
      %v3156 = vsel %vm3112, %v3146, %v3155
      %v3158 = vshrl.u32 %v2773, 16
      %v3160 = vrot.slane %v3158, 2
      %v3161 = vshll.u32 %v2773, 16
      %v3163 = vrot.slane %v3161, 3
      %v3164 = vor.u32 %v3160, %v3163
      %v3165 = vsel %vm3112, %v3155, %v3164
      %v3167 = vshrl.u32 %v2774, 16
      %v3169 = vrot.slane %v3167, 2
      %v3170 = vshll.u32 %v2774, 16
      %v3172 = vrot.slane %v3170, 3
      %v3173 = vor.u32 %v3169, %v3172
      %v3174 = vsel %vm3112, %v3164, %v3173
      %v3176 = vshrl.u32 %v2775, 16
      %v3178 = vrot.slane %v3176, 2
      %v3179 = vshll.u32 %v2775, 16
      %v3181 = vrot.slane %v3179, 3
      %v3182 = vor.u32 %v3178, %v3181
      %v3183 = vsel %vm3112, %v3173, %v3182
      %v3185 = vshrl.u32 %v2776, 16
      %v3187 = vrot.slane %v3185, 2
      %v3188 = vshll.u32 %v2776, 16
      %v3190 = vrot.slane %v3188, 3
      %v3191 = vor.u32 %v3187, %v3190
      %v3192 = vsel %vm3112, %v3182, %v3191
      %v3194 = vshrl.u32 %v2777, 16
      %v3196 = vrot.slane %v3194, 2
      %v3197 = vshll.u32 %v2777, 16
      %v3199 = vrot.slane %v3197, 3
      %v3200 = vor.u32 %v3196, %v3199
      %v3201 = vsel %vm3112, %v3191, %v3200
      %v3203 = vshrl.u32 %v2778, 16
      %v3205 = vrot.slane %v3203, 2
      %v3206 = vshll.u32 %v2778, 16
      %v3208 = vrot.slane %v3206, 3
      %v3209 = vor.u32 %v3205, %v3208
      %v3210 = vsel %vm3112, %v3200, %v3209
      %v3212 = vshrl.u32 %v2779, 16
      %v3214 = vrot.slane %v3212, 2
      %v3215 = vshll.u32 %v2779, 16
      %v3217 = vrot.slane %v3215, 3
      %v3218 = vor.u32 %v3214, %v3217
      %v3219 = vsel %vm3112, %v3209, %v3218
      %v3221 = vshrl.u32 %v2780, 16
      %v3223 = vrot.slane %v3221, 2
      %v3224 = vshll.u32 %v2780, 16
      %v3226 = vrot.slane %v3224, 3
      %v3227 = vor.u32 %v3223, %v3226
      %v3228 = vsel %vm3112, %v3218, %v3227
      %v3230 = vshrl.u32 %v2781, 16
      %v3232 = vrot.slane %v3230, 2
      %v3233 = vshll.u32 %v2781, 16
      %v3235 = vrot.slane %v3233, 3
      %v3236 = vor.u32 %v3232, %v3235
      %v3237 = vsel %vm3112, %v3227, %v3236
      %v3239 = vshrl.u32 %v2782, 16
      %v3241 = vrot.slane %v3239, 2
      %v3242 = vshll.u32 %v2782, 16
      %v3244 = vrot.slane %v3242, 3
      %v3245 = vor.u32 %v3241, %v3244
      %v3246 = vsel %vm3112, %v3236, %v3245
      %v3248 = vshrl.u32 %v2783, 16
      %v3250 = vrot.slane %v3248, 2
      %v3251 = vshll.u32 %v2783, 16
      %v3253 = vrot.slane %v3251, 3
      %v3254 = vor.u32 %v3250, %v3253
      %v3255 = vsel %vm3112, %v3245, %v3254
      %v3257 = vshrl.u32 %v2784, 16
      %v3259 = vrot.slane %v3257, 2
      %v3260 = vshll.u32 %v2784, 16
      %v3262 = vrot.slane %v3260, 3
      %v3263 = vor.u32 %v3259, %v3262
      %v3264 = vsel %vm3112, %v3254, %v3263
      %v3266 = vshrl.u32 %v2785, 16
      %v3268 = vrot.slane %v3266, 2
      %v3269 = vshll.u32 %v2785, 16
      %v3271 = vrot.slane %v3269, 3
      %v3272 = vor.u32 %v3268, %v3271
      %v3273 = vsel %vm3112, %v3263, %v3272
      %v3275 = vshrl.u32 %v3111, 16
      %v3277 = vrot.slane %v3275, 2
      %v3278 = vshll.u32 %v3111, 16
      %v3280 = vrot.slane %v3278, 3
      %v3281 = vor.u32 %v3277, %v3280
      %v3282 = vsel %vm3112, %v3272, %v3281
      %v3287 = vunpack.c.l.b16 %v3105
      %v3288 = vunpack.c.l.b16 %v3106
      %v3289 = vunpack.c.l.b16 %v3107
      %v3290 = vunpack.c.l.b16 %v3108
      %v3291 = vpack.c.b16 %v3288, %v3287
      %v3292 = vpack.c.b16 %v3290, %v3289
      %v3296 = vsel %vm515, %v3129, 0
      %v3299 = vsel %vm515, %v3138, 0
      %v3302 = vsel %vm515, %v3147, 0
      %v3305 = vsel %vm515, %v3156, 0
      %v3308 = vsel %vm515, %v3165, 0
      %v3311 = vsel %vm515, %v3174, 0
      %v3314 = vsel %vm515, %v3183, 0
      %v3317 = vsel %vm515, %v3192, 0
      %v3320 = vsel %vm515, %v3201, 0
      %v3323 = vsel %vm515, %v3210, 0
      %v3326 = vsel %vm515, %v3219, 0
      %v3329 = vsel %vm515, %v3228, 0
      %v3332 = vsel %vm515, %v3237, 0
      %v3335 = vsel %vm515, %v3246, 0
      %v3338 = vsel %vm515, %v3255, 0
      %v3341 = vsel %vm515, %v3264, 0
      %v3344 = vsel %vm515, %v3273, 0
      %v3347 = vsel %vm515, %v3282, 0
      %3349 = vmatprep.subr.bf16.mxu0 0
      %3350 = vmatpush1.bf16.msra.mxu0 0
      %3351 = vmatprep.subr.bf16.mxu0 0
      %3352 = vmatpush1.bf16.msra.mxu0 0
      %3353 = vmatprep.subr.bf16.mxu0 0
      %3354 = vmatpush1.bf16.msra.mxu0 0
      %3355 = vmatprep.subr.bf16.mxu0 0
      %3356 = vmatpush1.bf16.msra.mxu0 0
      %3357 = vmatprep.subr.bf16.mxu0 0
      %3358 = vmatpush1.bf16.msra.mxu0 0
      %3359 = vmatprep.subr.bf16.mxu0 0
      %3360 = vmatpush1.bf16.msra.mxu0 0
      %3361 = vmatprep.subr.bf16.mxu0 0
      %3362 = vmatpush1.bf16.msra.mxu0 %v3292
      %3363 = vmatprep.subr.bf16.mxu0 0
      %3364 = vmatpush1.bf16.msra.mxu0 %v3291
      %3365 = vmatprep.subr.bf16.mxu0 0
      %3366 = vmatpush2.bf16.msra.mxu0 0
      %3367 = vmatprep.subr.bf16.mxu0 0
      %3368 = vmatpush2.bf16.msra.mxu0 0
      %3369 = vmatprep.subr.bf16.mxu0 0
      %3370 = vmatpush2.bf16.msra.mxu0 0
      %3371 = vmatprep.subr.bf16.mxu0 0
      %3372 = vmatpush2.bf16.msra.mxu0 0
      %3373 = vmatprep.subr.bf16.mxu0 0
      %3374 = vmatpush2.bf16.msra.mxu0 0
      %3375 = vmatprep.subr.bf16.mxu0 0
      %3376 = vmatpush2.bf16.msra.mxu0 0
      %3377 = vmatprep.subr.bf16.mxu0 0
      %3378 = vmatpush2.bf16.msra.mxu0 0
      %3379 = vmatprep.subr.bf16.mxu0 0
      %3380 = vmatpush2.bf16.msra.mxu0 0
      %3381 = vmatprep.mubr.bf16.mxu0 0
      %3382 = vmatmul.mubr.bf16.gmra.mxu0 %v3296
      %v3383 = vpop.f32.mrf.mxu0
      %v3384 = vadd.f32 0.0, %v3383
      %v3385 = vpop.f32.mrf.mxu0
      %v3386 = vpop.f32.mrf.mxu0
      %v3387 = vadd.f32 0.0, %v3386
      %v3388 = vpop.f32.mrf.mxu0
      %3389 = vmatprep.mubr.bf16.mxu0 0
      %3390 = vmatmul.mubr.bf16.gmra.mxu0 %v3299
      %v3391 = vpop.f32.mrf.mxu0
      %v3392 = vadd.f32 0.0, %v3391
      %v3393 = vpop.f32.mrf.mxu0
      %v3394 = vpop.f32.mrf.mxu0
      %v3395 = vadd.f32 0.0, %v3394
      %v3396 = vpop.f32.mrf.mxu0
      %3397 = vmatprep.mubr.bf16.mxu0 0
      %3398 = vmatmul.mubr.bf16.gmra.mxu0 %v3302
      %v3399 = vpop.f32.mrf.mxu0
      %v3400 = vadd.f32 0.0, %v3399
      %v3401 = vpop.f32.mrf.mxu0
      %v3402 = vpop.f32.mrf.mxu0
      %v3403 = vadd.f32 0.0, %v3402
      %v3404 = vpop.f32.mrf.mxu0
      %3405 = vmatprep.mubr.bf16.mxu0 0
      %3406 = vmatmul.mubr.bf16.gmra.mxu0 %v3305
      %v3407 = vpop.f32.mrf.mxu0
      %v3408 = vadd.f32 0.0, %v3407
      %v3409 = vpop.f32.mrf.mxu0
      %v3410 = vpop.f32.mrf.mxu0
      %v3411 = vadd.f32 0.0, %v3410
      %v3412 = vpop.f32.mrf.mxu0
      %3413 = vmatprep.mubr.bf16.mxu0 0
      %3414 = vmatmul.mubr.bf16.gmra.mxu0 %v3308
      %v3415 = vpop.f32.mrf.mxu0
      %v3416 = vadd.f32 0.0, %v3415
      %v3417 = vpop.f32.mrf.mxu0
      %v3418 = vpop.f32.mrf.mxu0
      %v3419 = vadd.f32 0.0, %v3418
      %v3420 = vpop.f32.mrf.mxu0
      %3421 = vmatprep.mubr.bf16.mxu0 0
      %3422 = vmatmul.mubr.bf16.gmra.mxu0 %v3311
      %v3423 = vpop.f32.mrf.mxu0
      %v3424 = vadd.f32 0.0, %v3423
      %v3425 = vpop.f32.mrf.mxu0
      %v3426 = vpop.f32.mrf.mxu0
      %v3427 = vadd.f32 0.0, %v3426
      %v3428 = vpop.f32.mrf.mxu0
      %3429 = vmatprep.mubr.bf16.mxu0 0
      %3430 = vmatmul.mubr.bf16.gmra.mxu0 %v3314
      %v3431 = vpop.f32.mrf.mxu0
      %v3432 = vadd.f32 0.0, %v3431
      %v3433 = vpop.f32.mrf.mxu0
      %v3434 = vpop.f32.mrf.mxu0
      %v3435 = vadd.f32 0.0, %v3434
      %v3436 = vpop.f32.mrf.mxu0
      %3437 = vmatprep.mubr.bf16.mxu0 0
      %3438 = vmatmul.mubr.bf16.gmra.mxu0 %v3317
      %v3439 = vpop.f32.mrf.mxu0
      %v3440 = vadd.f32 0.0, %v3439
      %v3441 = vpop.f32.mrf.mxu0
      %v3442 = vpop.f32.mrf.mxu0
      %v3443 = vadd.f32 0.0, %v3442
      %v3444 = vpop.f32.mrf.mxu0
      %3445 = vmatprep.mubr.bf16.mxu0 0
      %3446 = vmatmul.mubr.bf16.gmra.mxu0 %v3320
      %v3447 = vpop.f32.mrf.mxu0
      %v3448 = vadd.f32 0.0, %v3447
      %v3449 = vpop.f32.mrf.mxu0
      %v3450 = vpop.f32.mrf.mxu0
      %v3451 = vadd.f32 0.0, %v3450
      %v3452 = vpop.f32.mrf.mxu0
      %3453 = vmatprep.mubr.bf16.mxu0 0
      %3454 = vmatmul.mubr.bf16.gmra.mxu0 %v3323
      %v3455 = vpop.f32.mrf.mxu0
      %v3456 = vadd.f32 0.0, %v3455
      %v3457 = vpop.f32.mrf.mxu0
      %v3458 = vpop.f32.mrf.mxu0
      %v3459 = vadd.f32 0.0, %v3458
      %v3460 = vpop.f32.mrf.mxu0
      %3461 = vmatprep.mubr.bf16.mxu0 0
      %3462 = vmatmul.mubr.bf16.gmra.mxu0 %v3326
      %v3463 = vpop.f32.mrf.mxu0
      %v3464 = vadd.f32 0.0, %v3463
      %v3465 = vpop.f32.mrf.mxu0
      %v3466 = vpop.f32.mrf.mxu0
      %v3467 = vadd.f32 0.0, %v3466
      %v3468 = vpop.f32.mrf.mxu0
      %3469 = vmatprep.mubr.bf16.mxu0 0
      %3470 = vmatmul.mubr.bf16.gmra.mxu0 %v3329
      %v3471 = vpop.f32.mrf.mxu0
      %v3472 = vadd.f32 0.0, %v3471
      %v3473 = vpop.f32.mrf.mxu0
      %v3474 = vpop.f32.mrf.mxu0
      %v3475 = vadd.f32 0.0, %v3474
      %v3476 = vpop.f32.mrf.mxu0
      %3477 = vmatprep.mubr.bf16.mxu0 0
      %3478 = vmatmul.mubr.bf16.gmra.mxu0 %v3332
      %v3479 = vpop.f32.mrf.mxu0
      %v3480 = vadd.f32 0.0, %v3479
      %v3481 = vpop.f32.mrf.mxu0
      %v3482 = vpop.f32.mrf.mxu0
      %v3483 = vadd.f32 0.0, %v3482
      %v3484 = vpop.f32.mrf.mxu0
      %3485 = vmatprep.mubr.bf16.mxu0 0
      %3486 = vmatmul.mubr.bf16.gmra.mxu0 %v3335
      %v3487 = vpop.f32.mrf.mxu0
      %v3488 = vadd.f32 0.0, %v3487
      %v3489 = vpop.f32.mrf.mxu0
      %v3490 = vpop.f32.mrf.mxu0
      %v3491 = vadd.f32 0.0, %v3490
      %v3492 = vpop.f32.mrf.mxu0
      %3493 = vmatprep.mubr.bf16.mxu0 0
      %3494 = vmatmul.mubr.bf16.gmra.mxu0 %v3338
      %v3495 = vpop.f32.mrf.mxu0
      %v3496 = vadd.f32 0.0, %v3495
      %v3497 = vpop.f32.mrf.mxu0
      %v3498 = vpop.f32.mrf.mxu0
      %v3499 = vadd.f32 0.0, %v3498
      %v3500 = vpop.f32.mrf.mxu0
      %3501 = vmatprep.mubr.bf16.mxu0 0
      %3502 = vmatmul.mubr.bf16.gmra.mxu0 %v3341
      %v3503 = vpop.f32.mrf.mxu0
      %v3504 = vadd.f32 0.0, %v3503
      %v3505 = vpop.f32.mrf.mxu0
      %v3506 = vpop.f32.mrf.mxu0
      %v3507 = vadd.f32 0.0, %v3506
      %v3508 = vpop.f32.mrf.mxu0
      %3509 = vmatprep.mubr.bf16.mxu0 0
      %3510 = vmatmul.mubr.bf16.gmra.mxu0 %v3344
      %v3511 = vpop.f32.mrf.mxu0
      %v3512 = vadd.f32 0.0, %v3511
      %v3513 = vpop.f32.mrf.mxu0
      %v3514 = vpop.f32.mrf.mxu0
      %v3515 = vadd.f32 0.0, %v3514
      %v3516 = vpop.f32.mrf.mxu0
      %3517 = vmatprep.mubr.bf16.mxu0 0
      %3518 = vmatmul.mubr.bf16.gmra.mxu0 %v3347
      %v3519 = vpop.f32.mrf.mxu0
      %v3520 = vadd.f32 0.0, %v3519
      %v3521 = vpop.f32.mrf.mxu0
      %v3522 = vpop.f32.mrf.mxu0
      %v3523 = vadd.f32 0.0, %v3522
      %v3524 = vpop.f32.mrf.mxu0
      %3525 = vdwg.mxu0
      %v3526 = vadd.f32 %v3067, %v3384
      %v3527 = vadd.f32 %v3068, %v3387
      %v3528 = vadd.f32 %v3069, %v3392
      %v3529 = vadd.f32 %v3070, %v3395
      %v3530 = vadd.f32 %v3071, %v3400
      %v3531 = vadd.f32 %v3072, %v3403
      %v3532 = vadd.f32 %v3073, %v3408
      %v3533 = vadd.f32 %v3074, %v3411
      %v3534 = vadd.f32 %v3075, %v3416
      %v3535 = vadd.f32 %v3076, %v3419
      %v3536 = vadd.f32 %v3077, %v3424
      %v3537 = vadd.f32 %v3078, %v3427
      %v3538 = vadd.f32 %v3079, %v3432
      %v3539 = vadd.f32 %v3080, %v3435
      %v3540 = vadd.f32 %v3081, %v3440
      %v3541 = vadd.f32 %v3082, %v3443
      %v3542 = vadd.f32 %v3083, %v3448
      %v3543 = vadd.f32 %v3084, %v3451
      %v3544 = vadd.f32 %v3085, %v3456
      %v3545 = vadd.f32 %v3086, %v3459
      %v3546 = vadd.f32 %v3087, %v3464
      %v3547 = vadd.f32 %v3088, %v3467
      %v3548 = vadd.f32 %v3089, %v3472
      %v3549 = vadd.f32 %v3090, %v3475
      %v3550 = vadd.f32 %v3091, %v3480
      %v3551 = vadd.f32 %v3092, %v3483
      %v3552 = vadd.f32 %v3093, %v3488
      %v3553 = vadd.f32 %v3094, %v3491
      %v3554 = vadd.f32 %v3095, %v3496
      %v3555 = vadd.f32 %v3096, %v3499
      %v3556 = vadd.f32 %v3097, %v3504
      %v3557 = vadd.f32 %v3098, %v3507
      %v3558 = vadd.f32 %v3099, %v3512
      %v3559 = vadd.f32 %v3100, %v3515
      %v3560 = vadd.f32 %v3101, %v3520
      %v3561 = vadd.f32 %v3102, %v3523
      %v3562 = vld [vmem:[%s206 + $0x10] sm:$0x8]
      %s3563 = scalar_lea.vmem %s210, 128
      %v3564 = vld [vmem:[%s3563] sm:$0xf]
      %v3565 = vld [vmem:[%s3563 + $0x4] sm:$0xf]
      %v3566 = vld [vmem:[%s3563 + $0x8] sm:$0xf]
      %v3567 = vld [vmem:[%s3563 + $0xc] sm:$0xf]
      %v3569 = vunpack.c.l.b16 %v3562
      %v3570 = vpack.c.b16 %v2732, %v3569
      %vm3571 = vcmask 1044480
      %v3572 = vrot.slane %v3570, 3
      %v3573 = vrot.slane %v2769, 3
      %v3574 = vsel %vm3571, %v3572, %v3573
      %v3575 = vrot.slane %v2770, 3
      %v3576 = vsel %vm3571, %v3573, %v3575
      %v3577 = vrot.slane %v2771, 3
      %v3578 = vsel %vm3571, %v3575, %v3577
      %v3579 = vrot.slane %v2772, 3
      %v3580 = vsel %vm3571, %v3577, %v3579
      %v3581 = vrot.slane %v2773, 3
      %v3582 = vsel %vm3571, %v3579, %v3581
      %v3583 = vrot.slane %v2774, 3
      %v3584 = vsel %vm3571, %v3581, %v3583
      %v3585 = vrot.slane %v2775, 3
      %v3586 = vsel %vm3571, %v3583, %v3585
      %v3587 = vrot.slane %v2776, 3
      %v3588 = vsel %vm3571, %v3585, %v3587
      %v3589 = vrot.slane %v2777, 3
      %v3590 = vsel %vm3571, %v3587, %v3589
      %v3591 = vrot.slane %v2778, 3
      %v3592 = vsel %vm3571, %v3589, %v3591
      %v3593 = vrot.slane %v2779, 3
      %v3594 = vsel %vm3571, %v3591, %v3593
      %v3595 = vrot.slane %v2780, 3
      %v3596 = vsel %vm3571, %v3593, %v3595
      %v3597 = vrot.slane %v2781, 3
      %v3598 = vsel %vm3571, %v3595, %v3597
      %v3599 = vrot.slane %v2782, 3
      %v3600 = vsel %vm3571, %v3597, %v3599
      %v3601 = vrot.slane %v2783, 3
      %v3602 = vsel %vm3571, %v3599, %v3601
      %v3603 = vrot.slane %v2784, 3
      %v3604 = vsel %vm3571, %v3601, %v3603
      %v3605 = vrot.slane %v2785, 3
      %v3606 = vsel %vm3571, %v3603, %v3605
      %v3607 = vrot.slane %v3111, 3
      %v3608 = vsel %vm3571, %v3605, %v3607
      %v3613 = vunpack.c.l.b16 %v3564
      %v3614 = vunpack.c.l.b16 %v3565
      %v3615 = vunpack.c.l.b16 %v3566
      %v3616 = vunpack.c.l.b16 %v3567
      %v3617 = vpack.c.b16 %v3614, %v3613
      %v3618 = vpack.c.b16 %v3616, %v3615
      %v3622 = vsel %vm515, %v3574, 0
      %v3625 = vsel %vm515, %v3576, 0
      %v3628 = vsel %vm515, %v3578, 0
      %v3631 = vsel %vm515, %v3580, 0
      %v3634 = vsel %vm515, %v3582, 0
      %v3637 = vsel %vm515, %v3584, 0
      %v3640 = vsel %vm515, %v3586, 0
      %v3643 = vsel %vm515, %v3588, 0
      %v3646 = vsel %vm515, %v3590, 0
      %v3649 = vsel %vm515, %v3592, 0
      %v3652 = vsel %vm515, %v3594, 0
      %v3655 = vsel %vm515, %v3596, 0
      %v3658 = vsel %vm515, %v3598, 0
      %v3661 = vsel %vm515, %v3600, 0
      %v3664 = vsel %vm515, %v3602, 0
      %v3667 = vsel %vm515, %v3604, 0
      %v3670 = vsel %vm515, %v3606, 0
      %v3673 = vsel %vm515, %v3608, 0
      %3675 = vmatprep.subr.bf16.mxu0 0
      %3676 = vmatpush1.bf16.msra.mxu0 0
      %3677 = vmatprep.subr.bf16.mxu0 0
      %3678 = vmatpush1.bf16.msra.mxu0 0
      %3679 = vmatprep.subr.bf16.mxu0 0
      %3680 = vmatpush1.bf16.msra.mxu0 0
      %3681 = vmatprep.subr.bf16.mxu0 0
      %3682 = vmatpush1.bf16.msra.mxu0 0
      %3683 = vmatprep.subr.bf16.mxu0 0
      %3684 = vmatpush1.bf16.msra.mxu0 0
      %3685 = vmatprep.subr.bf16.mxu0 0
      %3686 = vmatpush1.bf16.msra.mxu0 0
      %3687 = vmatprep.subr.bf16.mxu0 0
      %3688 = vmatpush1.bf16.msra.mxu0 %v3618
      %3689 = vmatprep.subr.bf16.mxu0 0
      %3690 = vmatpush1.bf16.msra.mxu0 %v3617
      %3691 = vmatprep.subr.bf16.mxu0 0
      %3692 = vmatpush2.bf16.msra.mxu0 0
      %3693 = vmatprep.subr.bf16.mxu0 0
      %3694 = vmatpush2.bf16.msra.mxu0 0
      %3695 = vmatprep.subr.bf16.mxu0 0
      %3696 = vmatpush2.bf16.msra.mxu0 0
      %3697 = vmatprep.subr.bf16.mxu0 0
      %3698 = vmatpush2.bf16.msra.mxu0 0
      %3699 = vmatprep.subr.bf16.mxu0 0
      %3700 = vmatpush2.bf16.msra.mxu0 0
      %3701 = vmatprep.subr.bf16.mxu0 0
      %3702 = vmatpush2.bf16.msra.mxu0 0
      %3703 = vmatprep.subr.bf16.mxu0 0
      %3704 = vmatpush2.bf16.msra.mxu0 0
      %3705 = vmatprep.subr.bf16.mxu0 0
      %3706 = vmatpush2.bf16.msra.mxu0 0
      %3707 = vmatprep.mubr.bf16.mxu0 0
      %3708 = vmatmul.mubr.bf16.gmra.mxu0 %v3622
      %v3709 = vpop.f32.mrf.mxu0
      %v3710 = vadd.f32 0.0, %v3709
      %v3711 = vpop.f32.mrf.mxu0
      %v3712 = vpop.f32.mrf.mxu0
      %v3713 = vadd.f32 0.0, %v3712
      %v3714 = vpop.f32.mrf.mxu0
      %3715 = vmatprep.mubr.bf16.mxu0 0
      %3716 = vmatmul.mubr.bf16.gmra.mxu0 %v3625
      %v3717 = vpop.f32.mrf.mxu0
      %v3718 = vadd.f32 0.0, %v3717
      %v3719 = vpop.f32.mrf.mxu0
      %v3720 = vpop.f32.mrf.mxu0
      %v3721 = vadd.f32 0.0, %v3720
      %v3722 = vpop.f32.mrf.mxu0
      %3723 = vmatprep.mubr.bf16.mxu0 0
      %3724 = vmatmul.mubr.bf16.gmra.mxu0 %v3628
      %v3725 = vpop.f32.mrf.mxu0
      %v3726 = vadd.f32 0.0, %v3725
      %v3727 = vpop.f32.mrf.mxu0
      %v3728 = vpop.f32.mrf.mxu0
      %v3729 = vadd.f32 0.0, %v3728
      %v3730 = vpop.f32.mrf.mxu0
      %3731 = vmatprep.mubr.bf16.mxu0 0
      %3732 = vmatmul.mubr.bf16.gmra.mxu0 %v3631
      %v3733 = vpop.f32.mrf.mxu0
      %v3734 = vadd.f32 0.0, %v3733
      %v3735 = vpop.f32.mrf.mxu0
      %v3736 = vpop.f32.mrf.mxu0
      %v3737 = vadd.f32 0.0, %v3736
      %v3738 = vpop.f32.mrf.mxu0
      %3739 = vmatprep.mubr.bf16.mxu0 0
      %3740 = vmatmul.mubr.bf16.gmra.mxu0 %v3634
      %v3741 = vpop.f32.mrf.mxu0
      %v3742 = vadd.f32 0.0, %v3741
      %v3743 = vpop.f32.mrf.mxu0
      %v3744 = vpop.f32.mrf.mxu0
      %v3745 = vadd.f32 0.0, %v3744
      %v3746 = vpop.f32.mrf.mxu0
      %3747 = vmatprep.mubr.bf16.mxu0 0
      %3748 = vmatmul.mubr.bf16.gmra.mxu0 %v3637
      %v3749 = vpop.f32.mrf.mxu0
      %v3750 = vadd.f32 0.0, %v3749
      %v3751 = vpop.f32.mrf.mxu0
      %v3752 = vpop.f32.mrf.mxu0
      %v3753 = vadd.f32 0.0, %v3752
      %v3754 = vpop.f32.mrf.mxu0
      %3755 = vmatprep.mubr.bf16.mxu0 0
      %3756 = vmatmul.mubr.bf16.gmra.mxu0 %v3640
      %v3757 = vpop.f32.mrf.mxu0
      %v3758 = vadd.f32 0.0, %v3757
      %v3759 = vpop.f32.mrf.mxu0
      %v3760 = vpop.f32.mrf.mxu0
      %v3761 = vadd.f32 0.0, %v3760
      %v3762 = vpop.f32.mrf.mxu0
      %3763 = vmatprep.mubr.bf16.mxu0 0
      %3764 = vmatmul.mubr.bf16.gmra.mxu0 %v3643
      %v3765 = vpop.f32.mrf.mxu0
      %v3766 = vadd.f32 0.0, %v3765
      %v3767 = vpop.f32.mrf.mxu0
      %v3768 = vpop.f32.mrf.mxu0
      %v3769 = vadd.f32 0.0, %v3768
      %v3770 = vpop.f32.mrf.mxu0
      %3771 = vmatprep.mubr.bf16.mxu0 0
      %3772 = vmatmul.mubr.bf16.gmra.mxu0 %v3646
      %v3773 = vpop.f32.mrf.mxu0
      %v3774 = vadd.f32 0.0, %v3773
      %v3775 = vpop.f32.mrf.mxu0
      %v3776 = vpop.f32.mrf.mxu0
      %v3777 = vadd.f32 0.0, %v3776
      %v3778 = vpop.f32.mrf.mxu0
      %3779 = vmatprep.mubr.bf16.mxu0 0
      %3780 = vmatmul.mubr.bf16.gmra.mxu0 %v3649
      %v3781 = vpop.f32.mrf.mxu0
      %v3782 = vadd.f32 0.0, %v3781
      %v3783 = vpop.f32.mrf.mxu0
      %v3784 = vpop.f32.mrf.mxu0
      %v3785 = vadd.f32 0.0, %v3784
      %v3786 = vpop.f32.mrf.mxu0
      %3787 = vmatprep.mubr.bf16.mxu0 0
      %3788 = vmatmul.mubr.bf16.gmra.mxu0 %v3652
      %v3789 = vpop.f32.mrf.mxu0
      %v3790 = vadd.f32 0.0, %v3789
      %v3791 = vpop.f32.mrf.mxu0
      %v3792 = vpop.f32.mrf.mxu0
      %v3793 = vadd.f32 0.0, %v3792
      %v3794 = vpop.f32.mrf.mxu0
      %3795 = vmatprep.mubr.bf16.mxu0 0
      %3796 = vmatmul.mubr.bf16.gmra.mxu0 %v3655
      %v3797 = vpop.f32.mrf.mxu0
      %v3798 = vadd.f32 0.0, %v3797
      %v3799 = vpop.f32.mrf.mxu0
      %v3800 = vpop.f32.mrf.mxu0
      %v3801 = vadd.f32 0.0, %v3800
      %v3802 = vpop.f32.mrf.mxu0
      %3803 = vmatprep.mubr.bf16.mxu0 0
      %3804 = vmatmul.mubr.bf16.gmra.mxu0 %v3658
      %v3805 = vpop.f32.mrf.mxu0
      %v3806 = vadd.f32 0.0, %v3805
      %v3807 = vpop.f32.mrf.mxu0
      %v3808 = vpop.f32.mrf.mxu0
      %v3809 = vadd.f32 0.0, %v3808
      %v3810 = vpop.f32.mrf.mxu0
      %3811 = vmatprep.mubr.bf16.mxu0 0
      %3812 = vmatmul.mubr.bf16.gmra.mxu0 %v3661
      %v3813 = vpop.f32.mrf.mxu0
      %v3814 = vadd.f32 0.0, %v3813
      %v3815 = vpop.f32.mrf.mxu0
      %v3816 = vpop.f32.mrf.mxu0
      %v3817 = vadd.f32 0.0, %v3816
      %v3818 = vpop.f32.mrf.mxu0
      %3819 = vmatprep.mubr.bf16.mxu0 0
      %3820 = vmatmul.mubr.bf16.gmra.mxu0 %v3664
      %v3821 = vpop.f32.mrf.mxu0
      %v3822 = vadd.f32 0.0, %v3821
      %v3823 = vpop.f32.mrf.mxu0
      %v3824 = vpop.f32.mrf.mxu0
      %v3825 = vadd.f32 0.0, %v3824
      %v3826 = vpop.f32.mrf.mxu0
      %3827 = vmatprep.mubr.bf16.mxu0 0
      %3828 = vmatmul.mubr.bf16.gmra.mxu0 %v3667
      %v3829 = vpop.f32.mrf.mxu0
      %v3830 = vadd.f32 0.0, %v3829
      %v3831 = vpop.f32.mrf.mxu0
      %v3832 = vpop.f32.mrf.mxu0
      %v3833 = vadd.f32 0.0, %v3832
      %v3834 = vpop.f32.mrf.mxu0
      %3835 = vmatprep.mubr.bf16.mxu0 0
      %3836 = vmatmul.mubr.bf16.gmra.mxu0 %v3670
      %v3837 = vpop.f32.mrf.mxu0
      %v3838 = vadd.f32 0.0, %v3837
      %v3839 = vpop.f32.mrf.mxu0
      %v3840 = vpop.f32.mrf.mxu0
      %v3841 = vadd.f32 0.0, %v3840
      %v3842 = vpop.f32.mrf.mxu0
      %3843 = vmatprep.mubr.bf16.mxu0 0
      %3844 = vmatmul.mubr.bf16.gmra.mxu0 %v3673
      %v3845 = vpop.f32.mrf.mxu0
      %v3846 = vadd.f32 0.0, %v3845
      %v3847 = vpop.f32.mrf.mxu0
      %v3848 = vpop.f32.mrf.mxu0
      %v3849 = vadd.f32 0.0, %v3848
      %v3850 = vpop.f32.mrf.mxu0
      %3851 = vdwg.mxu0
      %v3852 = vadd.f32 %v3526, %v3710
      %v3853 = vadd.f32 %v3527, %v3713
      %v3854 = vadd.f32 %v3528, %v3718
      %v3855 = vadd.f32 %v3529, %v3721
      %v3856 = vadd.f32 %v3530, %v3726
      %v3857 = vadd.f32 %v3531, %v3729
      %v3858 = vadd.f32 %v3532, %v3734
      %v3859 = vadd.f32 %v3533, %v3737
      %v3860 = vadd.f32 %v3534, %v3742
      %v3861 = vadd.f32 %v3535, %v3745
      %v3862 = vadd.f32 %v3536, %v3750
      %v3863 = vadd.f32 %v3537, %v3753
      %v3864 = vadd.f32 %v3538, %v3758
      %v3865 = vadd.f32 %v3539, %v3761
      %v3866 = vadd.f32 %v3540, %v3766
      %v3867 = vadd.f32 %v3541, %v3769
      %v3868 = vadd.f32 %v3542, %v3774
      %v3869 = vadd.f32 %v3543, %v3777
      %v3870 = vadd.f32 %v3544, %v3782
      %v3871 = vadd.f32 %v3545, %v3785
      %v3872 = vadd.f32 %v3546, %v3790
      %v3873 = vadd.f32 %v3547, %v3793
      %v3874 = vadd.f32 %v3548, %v3798
      %v3875 = vadd.f32 %v3549, %v3801
      %v3876 = vadd.f32 %v3550, %v3806
      %v3877 = vadd.f32 %v3551, %v3809
      %v3878 = vadd.f32 %v3552, %v3814
      %v3879 = vadd.f32 %v3553, %v3817
      %v3880 = vadd.f32 %v3554, %v3822
      %v3881 = vadd.f32 %v3555, %v3825
      %v3882 = vadd.f32 %v3556, %v3830
      %v3883 = vadd.f32 %v3557, %v3833
      %v3884 = vadd.f32 %v3558, %v3838
      %v3885 = vadd.f32 %v3559, %v3841
      %v3886 = vadd.f32 %v3560, %v3846
      %v3887 = vadd.f32 %v3561, %v3849
      %v3888 = vld [vmem:[%s213] sm:$0x1]
      %v3890 = vlaneseq
      %v3891 = vshrl.u32 %v3890, 7
      %v3892 = vsub.s32 0, %v3891
      %v3893 = vrot.slane %v3888, %v3892
      %v3895 = vadd.f32 %v3852, %v3893
      %v3896 = vadd.f32 %v3853, %v3893
      %v3897 = vadd.f32 %v3854, %v3893
      %v3898 = vadd.f32 %v3855, %v3893
      %v3899 = vadd.f32 %v3856, %v3893
      %v3900 = vadd.f32 %v3857, %v3893
      %v3901 = vadd.f32 %v3858, %v3893
      %v3902 = vadd.f32 %v3859, %v3893
      %v3903 = vadd.f32 %v3860, %v3893
      %v3904 = vadd.f32 %v3861, %v3893
      %v3905 = vadd.f32 %v3862, %v3893
      %v3906 = vadd.f32 %v3863, %v3893
      %v3907 = vadd.f32 %v3864, %v3893
      %v3908 = vadd.f32 %v3865, %v3893
      %v3909 = vadd.f32 %v3866, %v3893
      %v3910 = vadd.f32 %v3867, %v3893
      %v3911 = vadd.f32 %v3868, %v3893
      %v3912 = vadd.f32 %v3869, %v3893
      %v3913 = vadd.f32 %v3870, %v3893
      %v3914 = vadd.f32 %v3871, %v3893
      %v3915 = vadd.f32 %v3872, %v3893
      %v3916 = vadd.f32 %v3873, %v3893
      %v3917 = vadd.f32 %v3874, %v3893
      %v3918 = vadd.f32 %v3875, %v3893
      %v3919 = vadd.f32 %v3876, %v3893
      %v3920 = vadd.f32 %v3877, %v3893
      %v3921 = vadd.f32 %v3878, %v3893
      %v3922 = vadd.f32 %v3879, %v3893
      %v3923 = vadd.f32 %v3880, %v3893
      %v3924 = vadd.f32 %v3881, %v3893
      %v3925 = vadd.f32 %v3882, %v3893
      %v3926 = vadd.f32 %v3883, %v3893
      %v3927 = vadd.f32 %v3884, %v3893
      %v3928 = vadd.f32 %v3885, %v3893
      %v3929 = vadd.f32 %v3886, %v3893
      %v3930 = vadd.f32 %v3887, %v3893
      %v3931 = vpack.c.bf16 %v3896, %v3895
      %v3932 = vpack.c.bf16 %v3898, %v3897
      %v3933 = vpack.c.bf16 %v3900, %v3899
      %v3934 = vpack.c.bf16 %v3902, %v3901
      %v3935 = vpack.c.bf16 %v3904, %v3903
      %v3936 = vpack.c.bf16 %v3906, %v3905
      %v3937 = vpack.c.bf16 %v3908, %v3907
      %v3938 = vpack.c.bf16 %v3910, %v3909
      %v3939 = vpack.c.bf16 %v3912, %v3911
      %v3940 = vpack.c.bf16 %v3914, %v3913
      %v3941 = vpack.c.bf16 %v3916, %v3915
      %v3942 = vpack.c.bf16 %v3918, %v3917
      %v3943 = vpack.c.bf16 %v3920, %v3919
      %v3944 = vpack.c.bf16 %v3922, %v3921
      %v3945 = vpack.c.bf16 %v3924, %v3923
      %v3946 = vpack.c.bf16 %v3926, %v3925
      %v3947 = vpack.c.bf16 %v3928, %v3927
      %v3948 = vpack.c.bf16 %v3930, %v3929
      %v3967 = vunpack.c.l.b16 %v3931
      %v3968 = vunpack.c.h.b16 %v3931
      %v3969 = vunpack.c.l.b16 %v3932
      %v3970 = vunpack.c.h.b16 %v3932
      %v3971 = vunpack.c.l.b16 %v3933
      %v3972 = vunpack.c.h.b16 %v3933
      %v3973 = vunpack.c.l.b16 %v3934
      %v3974 = vunpack.c.h.b16 %v3934
      %v3975 = vunpack.c.l.b16 %v3935
      %v3976 = vunpack.c.h.b16 %v3935
      %v3977 = vunpack.c.l.b16 %v3936
      %v3978 = vunpack.c.h.b16 %v3936
      %v3979 = vunpack.c.l.b16 %v3937
      %v3980 = vunpack.c.h.b16 %v3937
      %v3981 = vunpack.c.l.b16 %v3938
      %v3982 = vunpack.c.h.b16 %v3938
      %v3983 = vunpack.c.l.b16 %v3939
      %v3984 = vunpack.c.h.b16 %v3939
      %v3985 = vunpack.c.l.b16 %v3940
      %v3986 = vunpack.c.h.b16 %v3940
      %v3987 = vunpack.c.l.b16 %v3941
      %v3988 = vunpack.c.h.b16 %v3941
      %v3989 = vunpack.c.l.b16 %v3942
      %v3990 = vunpack.c.h.b16 %v3942
      %v3991 = vunpack.c.l.b16 %v3943
      %v3992 = vunpack.c.h.b16 %v3943
      %v3993 = vunpack.c.l.b16 %v3944
      %v3994 = vunpack.c.h.b16 %v3944
      %v3995 = vunpack.c.l.b16 %v3945
      %v3996 = vunpack.c.h.b16 %v3945
      %v3997 = vunpack.c.l.b16 %v3946
      %v3998 = vunpack.c.h.b16 %v3946
      %v3999 = vunpack.c.l.b16 %v3947
      %v4000 = vunpack.c.h.b16 %v3947
      %v4001 = vunpack.c.l.b16 %v3948
      %v4002 = vunpack.c.h.b16 %v3948
      %v4003 = vpack.c.b16 %v3967, %v3967
      %v4004 = vpack.c.b16 %v3968, %v3968
      %v4005 = vpack.c.b16 %v3969, %v3969
      %v4006 = vpack.c.b16 %v3970, %v3970
      %v4007 = vpack.c.b16 %v3971, %v3971
      %v4008 = vpack.c.b16 %v3972, %v3972
      %v4009 = vpack.c.b16 %v3973, %v3973
      %v4010 = vpack.c.b16 %v3974, %v3974
      %v4011 = vpack.c.b16 %v3975, %v3975
      %v4012 = vpack.c.b16 %v3976, %v3976
      %v4013 = vpack.c.b16 %v3977, %v3977
      %v4014 = vpack.c.b16 %v3978, %v3978
      %v4015 = vpack.c.b16 %v3979, %v3979
      %v4016 = vpack.c.b16 %v3980, %v3980
      %v4017 = vpack.c.b16 %v3981, %v3981
      %v4018 = vpack.c.b16 %v3982, %v3982
      %v4019 = vpack.c.b16 %v3983, %v3983
      %v4020 = vpack.c.b16 %v3984, %v3984
      %v4021 = vpack.c.b16 %v3985, %v3985
      %v4022 = vpack.c.b16 %v3986, %v3986
      %v4023 = vpack.c.b16 %v3987, %v3987
      %v4024 = vpack.c.b16 %v3988, %v3988
      %v4025 = vpack.c.b16 %v3989, %v3989
      %v4026 = vpack.c.b16 %v3990, %v3990
      %v4027 = vpack.c.b16 %v3991, %v3991
      %v4028 = vpack.c.b16 %v3992, %v3992
      %v4029 = vpack.c.b16 %v3993, %v3993
      %v4030 = vpack.c.b16 %v3994, %v3994
      %v4031 = vpack.c.b16 %v3995, %v3995
      %v4032 = vpack.c.b16 %v3996, %v3996
      %v4033 = vpack.c.b16 %v3997, %v3997
      %v4034 = vpack.c.b16 %v3998, %v3998
      %v4035 = vpack.c.b16 %v3999, %v3999
      %v4036 = vpack.c.b16 %v4000, %v4000
      %v4037 = vpack.c.b16 %v4001, %v4001
      %v4038 = vpack.c.b16 %v4002, %v4002
      %4075 = vst [vmem:[%s221] sm:$0xf] %v4003
      %4076 = vst [vmem:[%s221 + $0x4] sm:$0xf] %v4004
      %4077 = vst [vmem:[%s221 + $0x8] sm:$0xf] %v4005
      %4078 = vst [vmem:[%s221 + $0xc] sm:$0xf] %v4006
      %4079 = vst [vmem:[%s221 + $0x10] sm:$0xf] %v4007
      %4080 = vst [vmem:[%s221 + $0x14] sm:$0xf] %v4008
      %4081 = vst [vmem:[%s221 + $0x18] sm:$0xf] %v4009
      %4082 = vst [vmem:[%s221 + $0x1c] sm:$0xf] %v4010
      %4083 = vst [vmem:[%s221 + $0x20] sm:$0xf] %v4011
      %4084 = vst [vmem:[%s221 + $0x24] sm:$0xf] %v4012
      %4085 = vst [vmem:[%s221 + $0x28] sm:$0xf] %v4013
      %4086 = vst [vmem:[%s221 + $0x2c] sm:$0xf] %v4014
      %4087 = vst [vmem:[%s221 + $0x30] sm:$0xf] %v4015
      %4088 = vst [vmem:[%s221 + $0x34] sm:$0xf] %v4016
      %4089 = vst [vmem:[%s221 + $0x38] sm:$0xf] %v4017
      %4090 = vst [vmem:[%s221 + $0x3c] sm:$0xf] %v4018
      %4091 = vst [vmem:[%s221 + $0x40] sm:$0xf] %v4019
      %4092 = vst [vmem:[%s221 + $0x44] sm:$0xf] %v4020
      %4093 = vst [vmem:[%s221 + $0x48] sm:$0xf] %v4021
      %4094 = vst [vmem:[%s221 + $0x4c] sm:$0xf] %v4022
      %4095 = vst [vmem:[%s221 + $0x50] sm:$0xf] %v4023
      %4096 = vst [vmem:[%s221 + $0x54] sm:$0xf] %v4024
      %4097 = vst [vmem:[%s221 + $0x58] sm:$0xf] %v4025
      %4098 = vst [vmem:[%s221 + $0x5c] sm:$0xf] %v4026
      %4099 = vst [vmem:[%s221 + $0x60] sm:$0xf] %v4027
      %4100 = vst [vmem:[%s221 + $0x64] sm:$0xf] %v4028
      %4101 = vst [vmem:[%s221 + $0x68] sm:$0xf] %v4029
      %4102 = vst [vmem:[%s221 + $0x6c] sm:$0xf] %v4030
      %4103 = vst [vmem:[%s221 + $0x70] sm:$0xf] %v4031
      %4104 = vst [vmem:[%s221 + $0x74] sm:$0xf] %v4032
      %4105 = vst [vmem:[%s221 + $0x78] sm:$0xf] %v4033
      %4106 = vst [vmem:[%s221 + $0x7c] sm:$0xf] %v4034
      %4107 = vst [vmem:[%s221 + $0x80] sm:$0xf] %v4035
      %4108 = vst [vmem:[%s221 + $0x84] sm:$0xf] %v4036
      %4109 = vst [vmem:[%s221 + $0x88] sm:$0xf] %v4037
      %4110 = vst [vmem:[%s221 + $0x8c] sm:$0x7] %v4038
      %p4111 = scmp.lt.s32.totalorder %s18, 1
      %s4112 = scalar_select %p4111, %s18, 1
      %p4113 = scmp.lt.s32.totalorder %s19, 0
      %s4114 = scalar_select %p4113, %s19, 0
      %s4115 = smul.addr %s4112, 36
      %s4116 = sadd.s32 %s4114, %s4115
      %s4117 = smul.addr %s4116, 4
      %s4118 = scalar_lea.vmem %s3, %s4117
      // Predicated region
      $region33: #{residual_block_forward.4} parent=31 // pred_check
        %p4119 = pneg %p124
      $region34: #{residual_block_forward.4} parent=31 // pred_check_branch
        %4121 = sbr.rel (%p4119) target = $region36
      $region35: #{residual_block_forward.4} parent=31 // pred_region
        _
      $region36: #{residual_block_forward.4} parent=31 // pred_fallthru
        _
    $region32: #{residual_block_forward.4} parent=5 // pred_fallthru
      _
    %p4122 = scmp.le.s32.totalorder 2, %s9
    // Predicated region
    $region37: #{residual_block_forward.4} parent=5 // pred_check
      %p4123 = pneg %p4122
    $region38: #{residual_block_forward.4} parent=5 // pred_check_branch
      %4125 = sbr.rel (%p4123) target = $region40
    $region39: #{residual_block_forward.4} parent=5 // pred_region
      %s4126 = ssub.s32 %s9, 2
      // Predicated region
      $region41: #{residual_block_forward.4} parent=39 // pred_check
        %p4127 = pneg %p130
      $region42: #{residual_block_forward.4} parent=39 // pred_check_branch
        %4129 = sbr.rel (%p4127) target = $region44
      $region43: #{residual_block_forward.4} parent=39 // pred_region
        %p4130 = scmp.lt.s32.totalorder %s20, 1
        %s4131 = scalar_select %p4130, %s20, 1
        %p4132 = scmp.lt.s32.totalorder %s21, 0
        %s4133 = scalar_select %p4132, %s21, 0
        %s4134 = smul.addr %s4131, 36
        %s4135 = sadd.s32 %s4133, %s4134
        %s4136 = smul.addr %s4135, 4
        %s4137 = scalar_lea.vmem %s3, %s4136
      $region44: #{residual_block_forward.4} parent=39 // pred_fallthru
        _
    $region40: #{residual_block_forward.4} parent=5 // pred_fallthru
      _
  $region6: #{residual_block_forward.4} parent=0 // loop_footer
    %s13 = sadd.s32 1, %s9
  $region7: #{residual_block_forward.4} parent=0 // loop_footer_branch
    %8 = sbr.rel target = $region3
  $region8: #{residual_block_forward.4} parent=0 // loop_exit
    _

</llo_original>
